<compile_context>
chip_gen: v6e
topology: v6e:2x2x1
jax: 0.10.0
libtpu: 0.0.40
codegen_flags: <defaults>
</compile_context>

<pallas_src>
import jax
import jax.numpy as jnp
from jax.experimental import pallas as pl
from jax.experimental.pallas import tpu as pltpu


def _round_up(x, m):
    return ((x + m - 1) // m) * m


def _rcnn_head_kernel(cls_ref, x_ref, w1_ref, b1_ref, w2_ref, b2_ref,
                      wh_ref, bh_ref, out_ref):
    del cls_ref  # branch selection already happened in the BlockSpec index_maps
    x = x_ref[...]                                                   # (TB, K) f32
    # Weights live in HBM/VMEM as bf16 (halved DMA); upcast in vregs and keep
    # the accumulate + bias + ReLU epilogue in f32.
    h1 = jnp.dot(x, w1_ref[...].astype(jnp.float32),
                 preferred_element_type=jnp.float32) + b1_ref[...]
    h1 = jnp.maximum(h1, 0.0)                                        # (TB, 512)
    h2 = jnp.dot(h1, w2_ref[...].astype(jnp.float32),
                 preferred_element_type=jnp.float32) + b2_ref[...]
    h2 = jnp.maximum(h2, 0.0)                                        # (TB, 256)
    # Fused logit|delta head, lane-dense (zero-padded to a multiple of 128).
    out_ref[...] = (jnp.dot(h2, wh_ref[...].astype(jnp.float32),
                            preferred_element_type=jnp.float32)
                    + bh_ref[...]).astype(out_ref.dtype)


def prepare_rcnn_head_params(params, *, weight_dtype=jnp.bfloat16):
    """One-time (init) relayout of the stacked PyTorch-layout parameters.

    params (PyTorch Linear layout, stacked over datasets):
      w1 (ND, 512, K), b1 (ND, 512), w2 (ND, 256, 512), b2 (ND, 256),
      wl (ND, NC, 256), bl (ND, NC), wd (ND, NC*6, 256), bd (ND, NC*6).

    Returns kernel-layout params: weights transposed to (in, out) and cast to
    `weight_dtype`, biases kept f32 with a broadcastable leading row, and the
    logit|delta heads fused + zero-padded to a lane-dense (multiple-of-128)
    output width.  Call this once at init, NOT inside the forward path.
    """
    nc = params["wl"].shape[1]
    nc6 = params["wd"].shape[1]
    n_out = nc + nc6
    n_out_pad = max(128, _round_up(n_out, 128))

    w1t = jnp.swapaxes(params["w1"], -1, -2).astype(weight_dtype)    # (ND, K, 512)
    w2t = jnp.swapaxes(params["w2"], -1, -2).astype(weight_dtype)    # (ND, 512, 256)

    wh = jnp.concatenate([jnp.swapaxes(params["wl"], -1, -2),
                          jnp.swapaxes(params["wd"], -1, -2)],
                         axis=-1)                                    # (ND, 256, NC+NC6)
    wh = jnp.pad(wh, ((0, 0), (0, 0), (0, n_out_pad - n_out))).astype(weight_dtype)
    bh = jnp.concatenate([params["bl"], params["bd"]], axis=-1)
    bh = jnp.pad(bh, ((0, 0), (0, n_out_pad - n_out)))

    return {
        "w1": w1t,
        "b1": params["b1"][:, None, :].astype(jnp.float32),          # (ND, 1, 512)
        "w2": w2t,
        "b2": params["b2"][:, None, :].astype(jnp.float32),          # (ND, 1, 256)
        "wh": wh,                                                    # (ND, 256, NOP)
        "bh": bh[:, None, :].astype(jnp.float32),                    # (ND, 1, NOP)
        "num_class": nc,
        "num_delta": nc6,
    }


def rcnn_head_forward(crops, prepared, cls_ind, *, max_tile_b=256):
    """crops: (B, C, D, H, W) float32; prepared: prepare_rcnn_head_params(...)."""
    B = crops.shape[0]
    K = 1
    for s in crops.shape[1:]:
        K *= s
    x = crops.reshape(B, K)        # free contiguous reshape (no HBM transpose)

    w1, b1 = prepared["w1"], prepared["b1"]
    w2, b2 = prepared["w2"], prepared["b2"]
    wh, bh = prepared["wh"], prepared["bh"]
    NC, NC6 = prepared["num_class"], prepared["num_delta"]
    H1 = w1.shape[-1]
    H2 = w2.shape[-1]
    NOP = wh.shape[-1]             # lane-dense fused-head width (multiple of 128)
    assert w1.shape[-2] == K, (w1.shape, K)

    # Row tiling: biggest tile <= max_tile_b that avoids large over-padding
    # (B=16 -> one 16-row step with no pad; B=1000 -> four 256-row tiles).
    n_tiles = -(-B // max_tile_b)
    TB = _round_up(-(-B // n_tiles), 8)
    Bp = n_tiles * TB
    if Bp != B:
        x = jnp.pad(x, ((0, Bp - B), (0, 0)))   # padded rows sliced off below

    # Megacore-shard only when each TensorCore gets enough row tiles to pay
    # for duplicating the (dominant) resident weight DMA.
    dim_sem = ("parallel",) if n_tiles >= 8 else ("arbitrary",)

    cls_arr = jnp.asarray([cls_ind], dtype=jnp.int32)

    def run(weight_pipeline_mode):
        # Weights/biases: the scalar-prefetched cls_ind selects the dataset
        # branch (data-dependent index_map); only that branch is DMA'd, and a
        # constant block index across the grid keeps it VMEM-resident.
        def wspec(shape):
            if weight_pipeline_mode is None:
                return pl.BlockSpec(shape, lambda i, cls: (cls[0], 0, 0))
            return pl.BlockSpec(shape, lambda i, cls: (cls[0], 0, 0),
                                pipeline_mode=weight_pipeline_mode)

        grid_spec = pltpu.PrefetchScalarGridSpec(
            num_scalar_prefetch=1,
            grid=(n_tiles,),
            in_specs=[
                pl.BlockSpec((TB, K), lambda i, cls: (i, 0)),
                wspec((None, K, H1)),
                wspec((None, 1, H1)),
                wspec((None, H1, H2)),
                wspec((None, 1, H2)),
                wspec((None, H2, NOP)),
                wspec((None, 1, NOP)),
            ],
            out_specs=pl.BlockSpec((TB, NOP), lambda i, cls: (i, 0)),
        )
        return pl.pallas_call(
            _rcnn_head_kernel,
            out_shape=jax.ShapeDtypeStruct((Bp, NOP), jnp.float32),
            grid_spec=grid_spec,
            compiler_params=pltpu.CompilerParams(dimension_semantics=dim_sem),
        )(cls_arr, x, w1, b1, w2, b2, wh, bh)

    try:
        # Resident weights need no double buffer; single-buffer them.
        out = run(pl.Buffered(1))
    except Exception:  # compatibility fallback if pipeline_mode is not plumbed
        out = run(None)

    logits = out[:B, :NC]
    deltas = out[:B, NC:NC + NC6]
    return logits, deltas


def _reference(crops, params, cls_ind):
    hp = jax.lax.Precision.HIGHEST
    x = crops.reshape(crops.shape[0], -1)
    h1 = jax.nn.relu(jnp.dot(x, params["w1"][cls_ind].T, precision=hp)
                     + params["b1"][cls_ind])
    h2 = jax.nn.relu(jnp.dot(h1, params["w2"][cls_ind].T, precision=hp)
                     + params["b2"][cls_ind])
    logits = jnp.dot(h2, params["wl"][cls_ind].T, precision=hp) + params["bl"][cls_ind]
    deltas = jnp.dot(h2, params["wd"][cls_ind].T, precision=hp) + params["bd"][cls_ind]
    return logits, deltas


if __name__ == "__main__":
    key = jax.random.PRNGKey(0)
    ND = 2                       # num_datasets
    NC = 3                       # num_class (same across datasets so branches stack)
    B = 16                       # number of ROI crops
    C_IN, CD, CH, CW = 32, 2, 4, 4
    K = C_IN * CD * CH * CW      # 1024
    H1, H2 = 512, 256

    keys = jax.random.split(key, 9)

    def _bf16_round(a):
        # Keep values exactly bf16-representable so the bf16 weight storage is
        # lossless and MXU precision choices cannot push us outside tolerance.
        return a.astype(jnp.bfloat16).astype(jnp.float32)

    crops = _bf16_round(
        jax.random.normal(keys[0], (B, C_IN, CD, CH, CW), dtype=jnp.float32))

    def init_w(k, shape, fan_in):
        return _bf16_round(jax.random.normal(k, shape, dtype=jnp.float32)
                           / jnp.sqrt(jnp.float32(fan_in)))

    params = {
        "w1": init_w(keys[1], (ND, H1, K), K),
        "b1": 0.01 * jax.random.normal(keys[2], (ND, H1), dtype=jnp.float32),
        "w2": init_w(keys[3], (ND, H2, H1), H1),
        "b2": 0.01 * jax.random.normal(keys[4], (ND, H2), dtype=jnp.float32),
        "wl": init_w(keys[5], (ND, NC, H2), H2),
        "bl": 0.01 * jax.random.normal(keys[6], (ND, NC), dtype=jnp.float32),
        "wd": init_w(keys[7], (ND, NC * 6, H2), H2),
        "bd": 0.01 * jax.random.normal(keys[8], (ND, NC * 6), dtype=jnp.float32),
    }

    # One-time, init-side parameter relayout (kept OUT of the forward path).
    prepared = prepare_rcnn_head_params(params)

    cls_ind = 1
    logits, deltas = rcnn_head_forward(crops, prepared, cls_ind)
    logits, deltas = jax.block_until_ready((logits, deltas))

    ref_logits, ref_deltas = _reference(crops, params, cls_ind)
    assert logits.shape == (B, NC) and deltas.shape == (B, NC * 6)
    assert jnp.allclose(logits, ref_logits, atol=2e-3, rtol=2e-3), (
        float(jnp.max(jnp.abs(logits - ref_logits))))
    assert jnp.allclose(deltas, ref_deltas, atol=2e-3, rtol=2e-3), (
        float(jnp.max(jnp.abs(deltas - ref_deltas))))

    print("KERNEL_OK")
</pallas_src>

<mosaic_0001>
module attributes {stable_mosaic.version = 11 : i64} {
  func.func @_rcnn_head_kernel(%arg0: i32, %arg1: memref<1xi32, #tpu.memory_space<smem>>, %arg2: memref<16x1024xf32, #tpu.memory_space<vmem>>, %arg3: memref<1x1024x512xbf16, #tpu.memory_space<vmem>>, %arg4: memref<1x1x512xf32, #tpu.memory_space<vmem>>, %arg5: memref<1x512x256xbf16, #tpu.memory_space<vmem>>, %arg6: memref<1x1x256xf32, #tpu.memory_space<vmem>>, %arg7: memref<1x256x128xbf16, #tpu.memory_space<vmem>>, %arg8: memref<1x1x128xf32, #tpu.memory_space<vmem>>, %arg9: memref<16x128xf32, #tpu.memory_space<vmem>>) attributes {dimension_semantics = [#tpu.dimension_semantics<arbitrary>], iteration_bounds = array<i64: 1>, scalar_prefetch = 1 : i64, scratch_operands = 0 : i64, tpu.core_type = #tpu.core_type<tc>, window_params = [{transform_indices = @transform_0, window_bounds = array<i64: 16, 1024>}, {pipeline_mode = #tpu.pipeline_mode<synchronous>, transform_indices = @transform_1, window_bounds = array<i64: 1, 1024, 512>}, {pipeline_mode = #tpu.pipeline_mode<synchronous>, transform_indices = @transform_2, window_bounds = array<i64: 1, 1, 512>}, {pipeline_mode = #tpu.pipeline_mode<synchronous>, transform_indices = @transform_3, window_bounds = array<i64: 1, 512, 256>}, {pipeline_mode = #tpu.pipeline_mode<synchronous>, transform_indices = @transform_4, window_bounds = array<i64: 1, 1, 256>}, {pipeline_mode = #tpu.pipeline_mode<synchronous>, transform_indices = @transform_5, window_bounds = array<i64: 1, 256, 128>}, {pipeline_mode = #tpu.pipeline_mode<synchronous>, transform_indices = @transform_6, window_bounds = array<i64: 1, 1, 128>}, {transform_indices = @transform_7, window_bounds = array<i64: 16, 128>}]} {
    %c0 = arith.constant 0 : index
    %c0_0 = arith.constant 0 : index
    %0 = vector.load %arg2[%c0, %c0_0] : memref<16x1024xf32, #tpu.memory_space<vmem>>, vector<16x1024xf32>
    %c0_1 = arith.constant 0 : index
    %c0_2 = arith.constant 0 : index
    %c0_3 = arith.constant 0 : index
    %1 = vector.load %arg3[%c0_1, %c0_2, %c0_3] : memref<1x1024x512xbf16, #tpu.memory_space<vmem>>, vector<1x1024x512xbf16>
    %2 = vector.shape_cast %1 : vector<1x1024x512xbf16> to vector<1024x512xbf16>
    %3 = arith.extf %2 : vector<1024x512xbf16> to vector<1024x512xf32>
    %cst = arith.constant dense<0.000000e+00> : vector<16x512xf32>
    %4 = tpu.matmul %0, %3, %cst {dimension_numbers = #tpu.dot_dimension_numbers<[1], [0], [0], [1], [0, 0, 1, 1], [], []>} : vector<16x1024xf32>, vector<1024x512xf32>, vector<16x512xf32> -> vector<16x512xf32>
    %c0_4 = arith.constant 0 : index
    %c0_5 = arith.constant 0 : index
    %c0_6 = arith.constant 0 : index
    %5 = vector.load %arg4[%c0_4, %c0_5, %c0_6] : memref<1x1x512xf32, #tpu.memory_space<vmem>>, vector<1x1x512xf32>
    %6 = vector.shape_cast %5 : vector<1x1x512xf32> to vector<1x512xf32>
    %7 = vector.broadcast %6 : vector<1x512xf32> to vector<16x512xf32>
    %8 = arith.addf %4, %7 : vector<16x512xf32>
    %cst_7 = arith.constant 0.000000e+00 : f32
    %9 = vector.broadcast %cst_7 : f32 to vector<16x512xf32>
    %10 = arith.maximumf %8, %9 : vector<16x512xf32>
    %c0_8 = arith.constant 0 : index
    %c0_9 = arith.constant 0 : index
    %c0_10 = arith.constant 0 : index
    %11 = vector.load %arg5[%c0_8, %c0_9, %c0_10] : memref<1x512x256xbf16, #tpu.memory_space<vmem>>, vector<1x512x256xbf16>
    %12 = vector.shape_cast %11 : vector<1x512x256xbf16> to vector<512x256xbf16>
    %13 = arith.extf %12 : vector<512x256xbf16> to vector<512x256xf32>
    %cst_11 = arith.constant dense<0.000000e+00> : vector<16x256xf32>
    %14 = tpu.matmul %10, %13, %cst_11 {dimension_numbers = #tpu.dot_dimension_numbers<[1], [0], [0], [1], [0, 0, 1, 1], [], []>} : vector<16x512xf32>, vector<512x256xf32>, vector<16x256xf32> -> vector<16x256xf32>
    %c0_12 = arith.constant 0 : index
    %c0_13 = arith.constant 0 : index
    %c0_14 = arith.constant 0 : index
    %15 = vector.load %arg6[%c0_12, %c0_13, %c0_14] : memref<1x1x256xf32, #tpu.memory_space<vmem>>, vector<1x1x256xf32>
    %16 = vector.shape_cast %15 : vector<1x1x256xf32> to vector<1x256xf32>
    %17 = vector.broadcast %16 : vector<1x256xf32> to vector<16x256xf32>
    %18 = arith.addf %14, %17 : vector<16x256xf32>
    %cst_15 = arith.constant 0.000000e+00 : f32
    %19 = vector.broadcast %cst_15 : f32 to vector<16x256xf32>
    %20 = arith.maximumf %18, %19 : vector<16x256xf32>
    %c0_16 = arith.constant 0 : index
    %c0_17 = arith.constant 0 : index
    %c0_18 = arith.constant 0 : index
    %21 = vector.load %arg7[%c0_16, %c0_17, %c0_18] : memref<1x256x128xbf16, #tpu.memory_space<vmem>>, vector<1x256x128xbf16>
    %22 = vector.shape_cast %21 : vector<1x256x128xbf16> to vector<256x128xbf16>
    %23 = arith.extf %22 : vector<256x128xbf16> to vector<256x128xf32>
    %cst_19 = arith.constant dense<0.000000e+00> : vector<16x128xf32>
    %24 = tpu.matmul %20, %23, %cst_19 {dimension_numbers = #tpu.dot_dimension_numbers<[1], [0], [0], [1], [0, 0, 1, 1], [], []>} : vector<16x256xf32>, vector<256x128xf32>, vector<16x128xf32> -> vector<16x128xf32>
    %c0_20 = arith.constant 0 : index
    %c0_21 = arith.constant 0 : index
    %c0_22 = arith.constant 0 : index
    %25 = vector.load %arg8[%c0_20, %c0_21, %c0_22] : memref<1x1x128xf32, #tpu.memory_space<vmem>>, vector<1x1x128xf32>
    %26 = vector.shape_cast %25 : vector<1x1x128xf32> to vector<1x128xf32>
    %27 = vector.broadcast %26 : vector<1x128xf32> to vector<16x128xf32>
    %28 = arith.addf %24, %27 : vector<16x128xf32>
    %c0_23 = arith.constant 0 : index
    %c0_24 = arith.constant 0 : index
    %29 = vector.load %arg9[%c0_23, %c0_24] : memref<16x128xf32, #tpu.memory_space<vmem>>, vector<16x128xf32>
    tpu.vector_store %arg9[%c0_23, %c0_24], %28 {strides = array<i32>} : memref<16x128xf32, #tpu.memory_space<vmem>>, vector<16x128xf32>,
    return
  }
  func.func @transform_0(%arg0: i32, %arg1: memref<1xi32, #tpu.memory_space<smem>>) -> (i32, i32) {
    %c0_i32 = arith.constant 0 : i32
    %c0_i32_0 = arith.constant 0 : i32
    return %arg0, %c0_i32 : i32, i32
  }
  func.func @transform_1(%arg0: i32, %arg1: memref<1xi32, #tpu.memory_space<smem>>) -> (i32, i32, i32) {
    %c0 = arith.constant 0 : index
    %0 = memref.load %arg1[%c0] : memref<1xi32, #tpu.memory_space<smem>>
    %c0_i32 = arith.constant 0 : i32
    %c0_i32_0 = arith.constant 0 : i32
    %c0_i32_1 = arith.constant 0 : i32
    return %0, %c0_i32, %c0_i32_0 : i32, i32, i32
  }
  func.func @transform_2(%arg0: i32, %arg1: memref<1xi32, #tpu.memory_space<smem>>) -> (i32, i32, i32) {
    %c0 = arith.constant 0 : index
    %0 = memref.load %arg1[%c0] : memref<1xi32, #tpu.memory_space<smem>>
    %c0_i32 = arith.constant 0 : i32
    %c0_i32_0 = arith.constant 0 : i32
    %c0_i32_1 = arith.constant 0 : i32
    return %0, %c0_i32, %c0_i32_0 : i32, i32, i32
  }
  func.func @transform_3(%arg0: i32, %arg1: memref<1xi32, #tpu.memory_space<smem>>) -> (i32, i32, i32) {
    %c0 = arith.constant 0 : index
    %0 = memref.load %arg1[%c0] : memref<1xi32, #tpu.memory_space<smem>>
    %c0_i32 = arith.constant 0 : i32
    %c0_i32_0 = arith.constant 0 : i32
    %c0_i32_1 = arith.constant 0 : i32
    return %0, %c0_i32, %c0_i32_0 : i32, i32, i32
  }
  func.func @transform_4(%arg0: i32, %arg1: memref<1xi32, #tpu.memory_space<smem>>) -> (i32, i32, i32) {
    %c0 = arith.constant 0 : index
    %0 = memref.load %arg1[%c0] : memref<1xi32, #tpu.memory_space<smem>>
    %c0_i32 = arith.constant 0 : i32
    %c0_i32_0 = arith.constant 0 : i32
    %c0_i32_1 = arith.constant 0 : i32
    return %0, %c0_i32, %c0_i32_0 : i32, i32, i32
  }
  func.func @transform_5(%arg0: i32, %arg1: memref<1xi32, #tpu.memory_space<smem>>) -> (i32, i32, i32) {
    %c0 = arith.constant 0 : index
    %0 = memref.load %arg1[%c0] : memref<1xi32, #tpu.memory_space<smem>>
    %c0_i32 = arith.constant 0 : i32
    %c0_i32_0 = arith.constant 0 : i32
    %c0_i32_1 = arith.constant 0 : i32
    return %0, %c0_i32, %c0_i32_0 : i32, i32, i32
  }
  func.func @transform_6(%arg0: i32, %arg1: memref<1xi32, #tpu.memory_space<smem>>) -> (i32, i32, i32) {
    %c0 = arith.constant 0 : index
    %0 = memref.load %arg1[%c0] : memref<1xi32, #tpu.memory_space<smem>>
    %c0_i32 = arith.constant 0 : i32
    %c0_i32_0 = arith.constant 0 : i32
    %c0_i32_1 = arith.constant 0 : i32
    return %0, %c0_i32, %c0_i32_0 : i32, i32, i32
  }
  func.func @transform_7(%arg0: i32, %arg1: memref<1xi32, #tpu.memory_space<smem>>) -> (i32, i32) {
    %c0_i32 = arith.constant 0 : i32
    %c0_i32_0 = arith.constant 0 : i32
    return %arg0, %c0_i32 : i32, i32
  }
}

module attributes {stable_mosaic.version = 11 : i64} {
  func.func @_rcnn_head_kernel(%arg0: i32, %arg1: memref<1xi32, #tpu.memory_space<smem>>, %arg2: memref<16x1024xf32, #tpu.memory_space<vmem>>, %arg3: memref<1x1024x512xbf16, #tpu.memory_space<vmem>>, %arg4: memref<1x1x512xf32, #tpu.memory_space<vmem>>, %arg5: memref<1x512x256xbf16, #tpu.memory_space<vmem>>, %arg6: memref<1x1x256xf32, #tpu.memory_space<vmem>>, %arg7: memref<1x256x128xbf16, #tpu.memory_space<vmem>>, %arg8: memref<1x1x128xf32, #tpu.memory_space<vmem>>, %arg9: memref<16x128xf32, #tpu.memory_space<vmem>>) attributes {dimension_semantics = [#tpu.dimension_semantics<arbitrary>], iteration_bounds = array<i64: 1>, scalar_prefetch = 1 : i64, scratch_operands = 0 : i64, tpu.core_type = #tpu.core_type<tc>, window_params = [{transform_indices = @transform_0, window_bounds = array<i64: 16, 1024>}, {transform_indices = @transform_1, window_bounds = array<i64: 1, 1024, 512>}, {transform_indices = @transform_2, window_bounds = array<i64: 1, 1, 512>}, {transform_indices = @transform_3, window_bounds = array<i64: 1, 512, 256>}, {transform_indices = @transform_4, window_bounds = array<i64: 1, 1, 256>}, {transform_indices = @transform_5, window_bounds = array<i64: 1, 256, 128>}, {transform_indices = @transform_6, window_bounds = array<i64: 1, 1, 128>}, {transform_indices = @transform_7, window_bounds = array<i64: 16, 128>}]} {
    %c0 = arith.constant 0 : index
    %c0_0 = arith.constant 0 : index
    %0 = vector.load %arg2[%c0, %c0_0] : memref<16x1024xf32, #tpu.memory_space<vmem>>, vector<16x1024xf32>
    %c0_1 = arith.constant 0 : index
    %c0_2 = arith.constant 0 : index
    %c0_3 = arith.constant 0 : index
    %1 = vector.load %arg3[%c0_1, %c0_2, %c0_3] : memref<1x1024x512xbf16, #tpu.memory_space<vmem>>, vector<1x1024x512xbf16>
    %2 = vector.shape_cast %1 : vector<1x1024x512xbf16> to vector<1024x512xbf16>
    %3 = arith.extf %2 : vector<1024x512xbf16> to vector<1024x512xf32>
    %cst = arith.constant dense<0.000000e+00> : vector<16x512xf32>
    %4 = tpu.matmul %0, %3, %cst {dimension_numbers = #tpu.dot_dimension_numbers<[1], [0], [0], [1], [0, 0, 1, 1], [], []>} : vector<16x1024xf32>, vector<1024x512xf32>, vector<16x512xf32> -> vector<16x512xf32>
    %c0_4 = arith.constant 0 : index
    %c0_5 = arith.constant 0 : index
    %c0_6 = arith.constant 0 : index
    %5 = vector.load %arg4[%c0_4, %c0_5, %c0_6] : memref<1x1x512xf32, #tpu.memory_space<vmem>>, vector<1x1x512xf32>
    %6 = vector.shape_cast %5 : vector<1x1x512xf32> to vector<1x512xf32>
    %7 = vector.broadcast %6 : vector<1x512xf32> to vector<16x512xf32>
    %8 = arith.addf %4, %7 : vector<16x512xf32>
    %cst_7 = arith.constant 0.000000e+00 : f32
    %9 = vector.broadcast %cst_7 : f32 to vector<16x512xf32>
    %10 = arith.maximumf %8, %9 : vector<16x512xf32>
    %c0_8 = arith.constant 0 : index
    %c0_9 = arith.constant 0 : index
    %c0_10 = arith.constant 0 : index
    %11 = vector.load %arg5[%c0_8, %c0_9, %c0_10] : memref<1x512x256xbf16, #tpu.memory_space<vmem>>, vector<1x512x256xbf16>
    %12 = vector.shape_cast %11 : vector<1x512x256xbf16> to vector<512x256xbf16>
    %13 = arith.extf %12 : vector<512x256xbf16> to vector<512x256xf32>
    %cst_11 = arith.constant dense<0.000000e+00> : vector<16x256xf32>
    %14 = tpu.matmul %10, %13, %cst_11 {dimension_numbers = #tpu.dot_dimension_numbers<[1], [0], [0], [1], [0, 0, 1, 1], [], []>} : vector<16x512xf32>, vector<512x256xf32>, vector<16x256xf32> -> vector<16x256xf32>
    %c0_12 = arith.constant 0 : index
    %c0_13 = arith.constant 0 : index
    %c0_14 = arith.constant 0 : index
    %15 = vector.load %arg6[%c0_12, %c0_13, %c0_14] : memref<1x1x256xf32, #tpu.memory_space<vmem>>, vector<1x1x256xf32>
    %16 = vector.shape_cast %15 : vector<1x1x256xf32> to vector<1x256xf32>
    %17 = vector.broadcast %16 : vector<1x256xf32> to vector<16x256xf32>
    %18 = arith.addf %14, %17 : vector<16x256xf32>
    %cst_15 = arith.constant 0.000000e+00 : f32
    %19 = vector.broadcast %cst_15 : f32 to vector<16x256xf32>
    %20 = arith.maximumf %18, %19 : vector<16x256xf32>
    %c0_16 = arith.constant 0 : index
    %c0_17 = arith.constant 0 : index
    %c0_18 = arith.constant 0 : index
    %21 = vector.load %arg7[%c0_16, %c0_17, %c0_18] : memref<1x256x128xbf16, #tpu.memory_space<vmem>>, vector<1x256x128xbf16>
    %22 = vector.shape_cast %21 : vector<1x256x128xbf16> to vector<256x128xbf16>
    %23 = arith.extf %22 : vector<256x128xbf16> to vector<256x128xf32>
    %cst_19 = arith.constant dense<0.000000e+00> : vector<16x128xf32>
    %24 = tpu.matmul %20, %23, %cst_19 {dimension_numbers = #tpu.dot_dimension_numbers<[1], [0], [0], [1], [0, 0, 1, 1], [], []>} : vector<16x256xf32>, vector<256x128xf32>, vector<16x128xf32> -> vector<16x128xf32>
    %c0_20 = arith.constant 0 : index
    %c0_21 = arith.constant 0 : index
    %c0_22 = arith.constant 0 : index
    %25 = vector.load %arg8[%c0_20, %c0_21, %c0_22] : memref<1x1x128xf32, #tpu.memory_space<vmem>>, vector<1x1x128xf32>
    %26 = vector.shape_cast %25 : vector<1x1x128xf32> to vector<1x128xf32>
    %27 = vector.broadcast %26 : vector<1x128xf32> to vector<16x128xf32>
    %28 = arith.addf %24, %27 : vector<16x128xf32>
    %c0_23 = arith.constant 0 : index
    %c0_24 = arith.constant 0 : index
    %29 = vector.load %arg9[%c0_23, %c0_24] : memref<16x128xf32, #tpu.memory_space<vmem>>, vector<16x128xf32>
    tpu.vector_store %arg9[%c0_23, %c0_24], %28 {strides = array<i32>} : memref<16x128xf32, #tpu.memory_space<vmem>>, vector<16x128xf32>,
    return
  }
  func.func @transform_0(%arg0: i32, %arg1: memref<1xi32, #tpu.memory_space<smem>>) -> (i32, i32) {
    %c0_i32 = arith.constant 0 : i32
    %c0_i32_0 = arith.constant 0 : i32
    return %arg0, %c0_i32 : i32, i32
  }
  func.func @transform_1(%arg0: i32, %arg1: memref<1xi32, #tpu.memory_space<smem>>) -> (i32, i32, i32) {
    %c0 = arith.constant 0 : index
    %0 = memref.load %arg1[%c0] : memref<1xi32, #tpu.memory_space<smem>>
    %c0_i32 = arith.constant 0 : i32
    %c0_i32_0 = arith.constant 0 : i32
    %c0_i32_1 = arith.constant 0 : i32
    return %0, %c0_i32, %c0_i32_0 : i32, i32, i32
  }
  func.func @transform_2(%arg0: i32, %arg1: memref<1xi32, #tpu.memory_space<smem>>) -> (i32, i32, i32) {
    %c0 = arith.constant 0 : index
    %0 = memref.load %arg1[%c0] : memref<1xi32, #tpu.memory_space<smem>>
    %c0_i32 = arith.constant 0 : i32
    %c0_i32_0 = arith.constant 0 : i32
    %c0_i32_1 = arith.constant 0 : i32
    return %0, %c0_i32, %c0_i32_0 : i32, i32, i32
  }
  func.func @transform_3(%arg0: i32, %arg1: memref<1xi32, #tpu.memory_space<smem>>) -> (i32, i32, i32) {
    %c0 = arith.constant 0 : index
    %0 = memref.load %arg1[%c0] : memref<1xi32, #tpu.memory_space<smem>>
    %c0_i32 = arith.constant 0 : i32
    %c0_i32_0 = arith.constant 0 : i32
    %c0_i32_1 = arith.constant 0 : i32
    return %0, %c0_i32, %c0_i32_0 : i32, i32, i32
  }
  func.func @transform_4(%arg0: i32, %arg1: memref<1xi32, #tpu.memory_space<smem>>) -> (i32, i32, i32) {
    %c0 = arith.constant 0 : index
    %0 = memref.load %arg1[%c0] : memref<1xi32, #tpu.memory_space<smem>>
    %c0_i32 = arith.constant 0 : i32
    %c0_i32_0 = arith.constant 0 : i32
    %c0_i32_1 = arith.constant 0 : i32
    return %0, %c0_i32, %c0_i32_0 : i32, i32, i32
  }
  func.func @transform_5(%arg0: i32, %arg1: memref<1xi32, #tpu.memory_space<smem>>) -> (i32, i32, i32) {
    %c0 = arith.constant 0 : index
    %0 = memref.load %arg1[%c0] : memref<1xi32, #tpu.memory_space<smem>>
    %c0_i32 = arith.constant 0 : i32
    %c0_i32_0 = arith.constant 0 : i32
    %c0_i32_1 = arith.constant 0 : i32
    return %0, %c0_i32, %c0_i32_0 : i32, i32, i32
  }
  func.func @transform_6(%arg0: i32, %arg1: memref<1xi32, #tpu.memory_space<smem>>) -> (i32, i32, i32) {
    %c0 = arith.constant 0 : index
    %0 = memref.load %arg1[%c0] : memref<1xi32, #tpu.memory_space<smem>>
    %c0_i32 = arith.constant 0 : i32
    %c0_i32_0 = arith.constant 0 : i32
    %c0_i32_1 = arith.constant 0 : i32
    return %0, %c0_i32, %c0_i32_0 : i32, i32, i32
  }
  func.func @transform_7(%arg0: i32, %arg1: memref<1xi32, #tpu.memory_space<smem>>) -> (i32, i32) {
    %c0_i32 = arith.constant 0 : i32
    %c0_i32_0 = arith.constant 0 : i32
    return %arg0, %c0_i32 : i32, i32
  }
}

</mosaic_0001>

<llo_original>
// kernel: tpu_custom_call.1
$region0: #{tpu_custom_call.1}
  #allocation0 [shape = 'u32[]', space=smem, size = 0x4, offset = 0x4, fixed_abs, tag = 'smem constant byte address 0x4 - core index']
  #allocation1 [shape = 'u32[144,128]{1,0:T(1,128)}', space=vmem, size = 0x12000, scoped, tag = 'internal scratch']
  #allocation2 [shape = 's32[1]{0}', space=sflag, size = 0x4, scoped, tag = 'scoped memory for tpu_custom_call.1']
  #allocation3 [shape = 's32[1]{0:T(128)S(6)}', space=smem, size = 0x200, scoped, tag = 'prefetched SMEM operand 0']
  %s0 = inlined_call_operand.<no memory space> [shape: s32[1], index: 0, kind: input, shape index: {}]
  %s1 = inlined_call_operand.hbm [shape: f32[16,1024], index: 1, kind: input, shape index: {}]
  %s2 = inlined_call_operand.hbm [shape: bf16[2,1024,512], index: 2, kind: input, shape index: {}]
  %s3 = inlined_call_operand.hbm [shape: f32[2,1,512], index: 3, kind: input, shape index: {}]
  %s4 = inlined_call_operand.hbm [shape: bf16[2,512,256], index: 4, kind: input, shape index: {}]
  %s5 = inlined_call_operand.hbm [shape: f32[2,1,256], index: 5, kind: input, shape index: {}]
  %s6 = inlined_call_operand.hbm [shape: bf16[2,256,128], index: 6, kind: input, shape index: {}]
  %s7 = inlined_call_operand.hbm [shape: f32[2,1,128], index: 7, kind: input, shape index: {}]
  %s8 = inlined_call_operand.hbm [shape: f32[16,128], index: 8, kind: output, shape index: {}]
  %s9 = sld [smem:[#allocation0]]
  $region66: #{tpu_custom_call.1} parent=0
    _
  %s11 = ssub.s32 1, %s9
  %s12 = scalar_select 0, %s11, %s9
  %13 = sst [smem:[#allocation3]] %s0
  $region1: #{tpu_custom_call.1} parent=0
    #allocation4 [shape = 'u8[65536]{0}', space=vmem, size = 0x10000, scoped, tag = 'input window, operand 1, single buffered']
    #allocation5 [shape = 's32[1]{0}', space=sflag, size = 0x4, scoped, tag = 'scoped memory for tpu_custom_call.1']
    #allocation6 [shape = 's32[1]{0}', space=sflag, size = 0x4, scoped, tag = 'scoped memory for tpu_custom_call.1']
    #allocation7 [shape = 'u8[1048576]{0}', space=vmem, size = 0x100000, scoped, tag = 'input window, operand 2, single buffered']
    #allocation8 [shape = 's32[1]{0}', space=sflag, size = 0x4, scoped, tag = 'scoped memory for tpu_custom_call.1']
    #allocation9 [shape = 'u8[2048]{0}', space=vmem, size = 0x800, scoped, tag = 'input window, operand 3, single buffered']
    #allocation10 [shape = 'u8[262144]{0}', space=vmem, size = 0x40000, scoped, tag = 'input window, operand 4, single buffered']
    #allocation11 [shape = 's32[1]{0}', space=sflag, size = 0x4, scoped, tag = 'scoped memory for tpu_custom_call.1']
    #allocation12 [shape = 'u8[1024]{0}', space=vmem, size = 0x400, scoped, tag = 'input window, operand 5, single buffered']
    #allocation13 [shape = 'u8[65536]{0}', space=vmem, size = 0x10000, scoped, tag = 'input window, operand 6, single buffered']
    #allocation14 [shape = 's32[1]{0}', space=sflag, size = 0x4, scoped, tag = 'scoped memory for tpu_custom_call.1']
    #allocation15 [shape = 'u8[512]{0}', space=vmem, size = 0x400, scoped, tag = 'input window, operand 7, single buffered']
    #allocation16 [shape = 'u8[8192]{0}', space=vmem, size = 0x2000, scoped, tag = 'output window, operand 0, single buffered']
    %14 = vsyncpa [#allocation5], 0
    %15 = vsyncpa [#allocation8], 0
    %16 = vsyncpa [#allocation11], 0
    %17 = vsyncpa [#allocation14], 0
    %18 = vsyncpa [#allocation6], 0
    // Predicated region
    $region2: #{tpu_custom_call.1} parent=1 // pred_check
      _
    $region3: #{tpu_custom_call.1} parent=1 // pred_check_branch
      %20 = sbr.rel (0) target = $region5
    $region4: #{tpu_custom_call.1} parent=1 // pred_region
      %s22 = ssub.s32 2048, 2048
      %23 = vsyncadd [#allocation5], %s22
      %s24 = sshll.u32 [#allocation4], 4
      %s25 = int_to_ptr.vmem [resolvable:$true] %s24
      %30 = dma.hbm_to_vmem [thread:$0]  %s1, 2048, %s25, [#allocation5], 1024, 1024, 64
    $region5: #{tpu_custom_call.1} parent=1 // pred_fallthru
      _
    // Predicated region
    $region6: #{tpu_custom_call.1} parent=1 // pred_check
      _
    $region7: #{tpu_custom_call.1} parent=1 // pred_check_branch
      %32 = sbr.rel (0) target = $region9
    $region8: #{tpu_custom_call.1} parent=1 // pred_region
      %s33 = sld [smem:[#allocation3]]
      %s35 = ssub.s32 32768, 32768
      %36 = vsyncadd [#allocation8], %s35
      %s37 = smul.addr %s33, 512
      %s38 = smul.addr %s37, 64
      %s39 = scalar_lea.hbm %s2, %s38
      %s40 = sshll.u32 [#allocation7], 4
      %s41 = int_to_ptr.vmem [resolvable:$true] %s40
      %46 = dma.hbm_to_vmem [thread:$0]  %s39, 32768, %s41, [#allocation8], 256, 256, 16
    $region9: #{tpu_custom_call.1} parent=1 // pred_fallthru
      _
    // Predicated region
    $region10: #{tpu_custom_call.1} parent=1 // pred_check
      _
    $region11: #{tpu_custom_call.1} parent=1 // pred_check_branch
      %48 = sbr.rel (0) target = $region13
    $region12: #{tpu_custom_call.1} parent=1 // pred_region
      %s49 = sld [smem:[#allocation3]]
      %s51 = ssub.s32 64, 64
      %52 = vsyncadd [#allocation8], %s51
      %s53 = smul.addr %s49, 4
      %s54 = smul.addr %s53, 16
      %s55 = scalar_lea.hbm %s3, %s54
      %s57 = sshll.u32 [#allocation9], 4
      %s58 = int_to_ptr.vmem [resolvable:$true] %s57
      %60 = dma.hbm_to_vmem [thread:$0]  %s55, 64, %s58, [#allocation8]
    $region13: #{tpu_custom_call.1} parent=1 // pred_fallthru
      _
    // Predicated region
    $region14: #{tpu_custom_call.1} parent=1 // pred_check
      _
    $region15: #{tpu_custom_call.1} parent=1 // pred_check_branch
      %62 = sbr.rel (0) target = $region17
    $region16: #{tpu_custom_call.1} parent=1 // pred_region
      %s63 = sld [smem:[#allocation3]]
      %s65 = ssub.s32 8192, 8192
      %66 = vsyncadd [#allocation11], %s65
      %s67 = smul.addr %s63, 128
      %s68 = smul.addr %s67, 64
      %s69 = scalar_lea.hbm %s4, %s68
      %s70 = sshll.u32 [#allocation10], 4
      %s71 = int_to_ptr.vmem [resolvable:$true] %s70
      %76 = dma.hbm_to_vmem [thread:$0]  %s69, 8192, %s71, [#allocation11], 128, 128, 8
    $region17: #{tpu_custom_call.1} parent=1 // pred_fallthru
      _
    // Predicated region
    $region18: #{tpu_custom_call.1} parent=1 // pred_check
      _
    $region19: #{tpu_custom_call.1} parent=1 // pred_check_branch
      %78 = sbr.rel (0) target = $region21
    $region20: #{tpu_custom_call.1} parent=1 // pred_region
      %s79 = sld [smem:[#allocation3]]
      %s81 = ssub.s32 32, 32
      %82 = vsyncadd [#allocation11], %s81
      %s83 = smul.addr %s79, 2
      %s84 = smul.addr %s83, 16
      %s85 = scalar_lea.hbm %s5, %s84
      %s87 = sshll.u32 [#allocation12], 4
      %s88 = int_to_ptr.vmem [resolvable:$true] %s87
      %90 = dma.hbm_to_vmem [thread:$0]  %s85, 32, %s88, [#allocation11]
    $region21: #{tpu_custom_call.1} parent=1 // pred_fallthru
      _
    // Predicated region
    $region22: #{tpu_custom_call.1} parent=1 // pred_check
      _
    $region23: #{tpu_custom_call.1} parent=1 // pred_check_branch
      %92 = sbr.rel (0) target = $region25
    $region24: #{tpu_custom_call.1} parent=1 // pred_region
      %s93 = sld [smem:[#allocation3]]
      %s95 = ssub.s32 2048, 2048
      %96 = vsyncadd [#allocation14], %s95
      %s97 = smul.addr %s93, 32
      %s98 = smul.addr %s97, 64
      %s99 = scalar_lea.hbm %s6, %s98
      %s100 = sshll.u32 [#allocation13], 4
      %s101 = int_to_ptr.vmem [resolvable:$true] %s100
      %106 = dma.hbm_to_vmem [thread:$0]  %s99, 2048, %s101, [#allocation14], 64, 64, 4
    $region25: #{tpu_custom_call.1} parent=1 // pred_fallthru
      _
    // Predicated region
    $region26: #{tpu_custom_call.1} parent=1 // pred_check
      _
    $region27: #{tpu_custom_call.1} parent=1 // pred_check_branch
      %108 = sbr.rel (0) target = $region29
    $region28: #{tpu_custom_call.1} parent=1 // pred_region
      %s109 = sld [smem:[#allocation3]]
      %s111 = ssub.s32 16, 16
      %112 = vsyncadd [#allocation14], %s111
      %s113 = smul.addr %s109, 16
      %s114 = scalar_lea.hbm %s7, %s113
      %s116 = sshll.u32 [#allocation15], 4
      %s117 = int_to_ptr.vmem [resolvable:$true] %s116
      %119 = dma.hbm_to_vmem [thread:$0]  %s114, 16, %s117, [#allocation14]
    $region29: #{tpu_custom_call.1} parent=1 // pred_fallthru
      _
    // Predicated region
    $region30: #{tpu_custom_call.1} parent=1 // pred_check
      _
    $region31: #{tpu_custom_call.1} parent=1 // pred_check_branch
      %121 = sbr.rel (0) target = $region33
    $region32: #{tpu_custom_call.1} parent=1 // pred_region
      %122 = dma.done [#allocation5], 2048
    $region33: #{tpu_custom_call.1} parent=1 // pred_fallthru
      _
    // Predicated region
    $region34: #{tpu_custom_call.1} parent=1 // pred_check
      _
    $region35: #{tpu_custom_call.1} parent=1 // pred_check_branch
      %124 = sbr.rel (0) target = $region37
    $region36: #{tpu_custom_call.1} parent=1 // pred_region
      %125 = dma.done [#allocation8], 32768
    $region37: #{tpu_custom_call.1} parent=1 // pred_fallthru
      _
    // Predicated region
    $region38: #{tpu_custom_call.1} parent=1 // pred_check
      _
    $region39: #{tpu_custom_call.1} parent=1 // pred_check_branch
      %127 = sbr.rel (0) target = $region41
    $region40: #{tpu_custom_call.1} parent=1 // pred_region
      %128 = dma.done [#allocation8], 64
    $region41: #{tpu_custom_call.1} parent=1 // pred_fallthru
      _
    // Predicated region
    $region42: #{tpu_custom_call.1} parent=1 // pred_check
      _
    $region43: #{tpu_custom_call.1} parent=1 // pred_check_branch
      %130 = sbr.rel (0) target = $region45
    $region44: #{tpu_custom_call.1} parent=1 // pred_region
      %131 = dma.done [#allocation11], 8192
    $region45: #{tpu_custom_call.1} parent=1 // pred_fallthru
      _
    // Predicated region
    $region46: #{tpu_custom_call.1} parent=1 // pred_check
      _
    $region47: #{tpu_custom_call.1} parent=1 // pred_check_branch
      %133 = sbr.rel (0) target = $region49
    $region48: #{tpu_custom_call.1} parent=1 // pred_region
      %134 = dma.done [#allocation11], 32
    $region49: #{tpu_custom_call.1} parent=1 // pred_fallthru
      _
    // Predicated region
    $region50: #{tpu_custom_call.1} parent=1 // pred_check
      _
    $region51: #{tpu_custom_call.1} parent=1 // pred_check_branch
      %136 = sbr.rel (0) target = $region53
    $region52: #{tpu_custom_call.1} parent=1 // pred_region
      %137 = dma.done [#allocation14], 2048
    $region53: #{tpu_custom_call.1} parent=1 // pred_fallthru
      _
    // Predicated region
    $region54: #{tpu_custom_call.1} parent=1 // pred_check
      _
    $region55: #{tpu_custom_call.1} parent=1 // pred_check_branch
      %139 = sbr.rel (0) target = $region57
    $region56: #{tpu_custom_call.1} parent=1 // pred_region
      %140 = dma.done [#allocation14], 16
    $region57: #{tpu_custom_call.1} parent=1 // pred_fallthru
      _
    %s141 = sld [smem:[#allocation3]]
    %s142 = sld [smem:[#allocation3]]
    %s143 = sld [smem:[#allocation3]]
    %s144 = sld [smem:[#allocation3]]
    %s145 = sld [smem:[#allocation3]]
    %s146 = sld [smem:[#allocation3]]
    %v147 = vld [vmem:[#allocation4] sm:$0xff]
    %v148 = vld [vmem:[#allocation4 + $0x8] sm:$0xff]
    %v149 = vld [vmem:[#allocation4 + $0x10] sm:$0xff]
    %v150 = vld [vmem:[#allocation4 + $0x18] sm:$0xff]
    %v151 = vld [vmem:[#allocation4 + $0x20] sm:$0xff]
    %v152 = vld [vmem:[#allocation4 + $0x28] sm:$0xff]
    %v153 = vld [vmem:[#allocation4 + $0x30] sm:$0xff]
    %v154 = vld [vmem:[#allocation4 + $0x38] sm:$0xff]
    %v155 = vld [vmem:[#allocation4 + $0x40] sm:$0xff]
    %v156 = vld [vmem:[#allocation4 + $0x48] sm:$0xff]
    %v157 = vld [vmem:[#allocation4 + $0x50] sm:$0xff]
    %v158 = vld [vmem:[#allocation4 + $0x58] sm:$0xff]
    %v159 = vld [vmem:[#allocation4 + $0x60] sm:$0xff]
    %v160 = vld [vmem:[#allocation4 + $0x68] sm:$0xff]
    %v161 = vld [vmem:[#allocation4 + $0x70] sm:$0xff]
    %v162 = vld [vmem:[#allocation4 + $0x78] sm:$0xff]
    %v163 = vld [vmem:[#allocation7] sm:$0xff]
    %v164 = vld [vmem:[#allocation7 + $0x8] sm:$0xff]
    %v165 = vld [vmem:[#allocation7 + $0x10] sm:$0xff]
    %v166 = vld [vmem:[#allocation7 + $0x18] sm:$0xff]
    %v167 = vld [vmem:[#allocation7 + $0x20] sm:$0xff]
    %v168 = vld [vmem:[#allocation7 + $0x28] sm:$0xff]
    %v169 = vld [vmem:[#allocation7 + $0x30] sm:$0xff]
    %v170 = vld [vmem:[#allocation7 + $0x38] sm:$0xff]
    %v171 = vld [vmem:[#allocation7 + $0x40] sm:$0xff]
    %v172 = vld [vmem:[#allocation7 + $0x48] sm:$0xff]
    %v173 = vld [vmem:[#allocation7 + $0x50] sm:$0xff]
    %v174 = vld [vmem:[#allocation7 + $0x58] sm:$0xff]
    %v175 = vld [vmem:[#allocation7 + $0x60] sm:$0xff]
    %v176 = vld [vmem:[#allocation7 + $0x68] sm:$0xff]
    %v177 = vld [vmem:[#allocation7 + $0x70] sm:$0xff]
    %v178 = vld [vmem:[#allocation7 + $0x78] sm:$0xff]
    %v179 = vld [vmem:[#allocation7 + $0x80] sm:$0xff]
    %v180 = vld [vmem:[#allocation7 + $0x88] sm:$0xff]
    %v181 = vld [vmem:[#allocation7 + $0x90] sm:$0xff]
    %v182 = vld [vmem:[#allocation7 + $0x98] sm:$0xff]
    %v183 = vld [vmem:[#allocation7 + $0xa0] sm:$0xff]
    %v184 = vld [vmem:[#allocation7 + $0xa8] sm:$0xff]
    %v185 = vld [vmem:[#allocation7 + $0xb0] sm:$0xff]
    %v186 = vld [vmem:[#allocation7 + $0xb8] sm:$0xff]
    %v187 = vld [vmem:[#allocation7 + $0xc0] sm:$0xff]
    %v188 = vld [vmem:[#allocation7 + $0xc8] sm:$0xff]
    %v189 = vld [vmem:[#allocation7 + $0xd0] sm:$0xff]
    %v190 = vld [vmem:[#allocation7 + $0xd8] sm:$0xff]
    %v191 = vld [vmem:[#allocation7 + $0xe0] sm:$0xff]
    %v192 = vld [vmem:[#allocation7 + $0xe8] sm:$0xff]
    %v193 = vld [vmem:[#allocation7 + $0xf0] sm:$0xff]
    %v194 = vld [vmem:[#allocation7 + $0xf8] sm:$0xff]
    %v195 = vld [vmem:[#allocation7 + $0x100] sm:$0xff]
    %v196 = vld [vmem:[#allocation7 + $0x108] sm:$0xff]
    %v197 = vld [vmem:[#allocation7 + $0x110] sm:$0xff]
    %v198 = vld [vmem:[#allocation7 + $0x118] sm:$0xff]
    %v199 = vld [vmem:[#allocation7 + $0x120] sm:$0xff]
    %v200 = vld [vmem:[#allocation7 + $0x128] sm:$0xff]
    %v201 = vld [vmem:[#allocation7 + $0x130] sm:$0xff]
    %v202 = vld [vmem:[#allocation7 + $0x138] sm:$0xff]
    %v203 = vld [vmem:[#allocation7 + $0x140] sm:$0xff]
    %v204 = vld [vmem:[#allocation7 + $0x148] sm:$0xff]
    %v205 = vld [vmem:[#allocation7 + $0x150] sm:$0xff]
    %v206 = vld [vmem:[#allocation7 + $0x158] sm:$0xff]
    %v207 = vld [vmem:[#allocation7 + $0x160] sm:$0xff]
    %v208 = vld [vmem:[#allocation7 + $0x168] sm:$0xff]
    %v209 = vld [vmem:[#allocation7 + $0x170] sm:$0xff]
    %v210 = vld [vmem:[#allocation7 + $0x178] sm:$0xff]
    %v211 = vld [vmem:[#allocation7 + $0x180] sm:$0xff]
    %v212 = vld [vmem:[#allocation7 + $0x188] sm:$0xff]
    %v213 = vld [vmem:[#allocation7 + $0x190] sm:$0xff]
    %v214 = vld [vmem:[#allocation7 + $0x198] sm:$0xff]
    %v215 = vld [vmem:[#allocation7 + $0x1a0] sm:$0xff]
    %v216 = vld [vmem:[#allocation7 + $0x1a8] sm:$0xff]
    %v217 = vld [vmem:[#allocation7 + $0x1b0] sm:$0xff]
    %v218 = vld [vmem:[#allocation7 + $0x1b8] sm:$0xff]
    %v219 = vld [vmem:[#allocation7 + $0x1c0] sm:$0xff]
    %v220 = vld [vmem:[#allocation7 + $0x1c8] sm:$0xff]
    %v221 = vld [vmem:[#allocation7 + $0x1d0] sm:$0xff]
    %v222 = vld [vmem:[#allocation7 + $0x1d8] sm:$0xff]
    %v223 = vld [vmem:[#allocation7 + $0x1e0] sm:$0xff]
    %v224 = vld [vmem:[#allocation7 + $0x1e8] sm:$0xff]
    %v225 = vld [vmem:[#allocation7 + $0x1f0] sm:$0xff]
    %v226 = vld [vmem:[#allocation7 + $0x1f8] sm:$0xff]
    %v227 = vld [vmem:[#allocation7 + $0x200] sm:$0xff]
    %v228 = vld [vmem:[#allocation7 + $0x208] sm:$0xff]
    %v229 = vld [vmem:[#allocation7 + $0x210] sm:$0xff]
    %v230 = vld [vmem:[#allocation7 + $0x218] sm:$0xff]
    %v231 = vld [vmem:[#allocation7 + $0x220] sm:$0xff]
    %v232 = vld [vmem:[#allocation7 + $0x228] sm:$0xff]
    %v233 = vld [vmem:[#allocation7 + $0x230] sm:$0xff]
    %v234 = vld [vmem:[#allocation7 + $0x238] sm:$0xff]
    %v235 = vld [vmem:[#allocation7 + $0x240] sm:$0xff]
    %v236 = vld [vmem:[#allocation7 + $0x248] sm:$0xff]
    %v237 = vld [vmem:[#allocation7 + $0x250] sm:$0xff]
    %v238 = vld [vmem:[#allocation7 + $0x258] sm:$0xff]
    %v239 = vld [vmem:[#allocation7 + $0x260] sm:$0xff]
    %v240 = vld [vmem:[#allocation7 + $0x268] sm:$0xff]
    %v241 = vld [vmem:[#allocation7 + $0x270] sm:$0xff]
    %v242 = vld [vmem:[#allocation7 + $0x278] sm:$0xff]
    %v243 = vld [vmem:[#allocation7 + $0x280] sm:$0xff]
    %v244 = vld [vmem:[#allocation7 + $0x288] sm:$0xff]
    %v245 = vld [vmem:[#allocation7 + $0x290] sm:$0xff]
    %v246 = vld [vmem:[#allocation7 + $0x298] sm:$0xff]
    %v247 = vld [vmem:[#allocation7 + $0x2a0] sm:$0xff]
    %v248 = vld [vmem:[#allocation7 + $0x2a8] sm:$0xff]
    %v249 = vld [vmem:[#allocation7 + $0x2b0] sm:$0xff]
    %v250 = vld [vmem:[#allocation7 + $0x2b8] sm:$0xff]
    %v251 = vld [vmem:[#allocation7 + $0x2c0] sm:$0xff]
    %v252 = vld [vmem:[#allocation7 + $0x2c8] sm:$0xff]
    %v253 = vld [vmem:[#allocation7 + $0x2d0] sm:$0xff]
    %v254 = vld [vmem:[#allocation7 + $0x2d8] sm:$0xff]
    %v255 = vld [vmem:[#allocation7 + $0x2e0] sm:$0xff]
    %v256 = vld [vmem:[#allocation7 + $0x2e8] sm:$0xff]
    %v257 = vld [vmem:[#allocation7 + $0x2f0] sm:$0xff]
    %v258 = vld [vmem:[#allocation7 + $0x2f8] sm:$0xff]
    %v259 = vld [vmem:[#allocation7 + $0x300] sm:$0xff]
    %v260 = vld [vmem:[#allocation7 + $0x308] sm:$0xff]
    %v261 = vld [vmem:[#allocation7 + $0x310] sm:$0xff]
    %v262 = vld [vmem:[#allocation7 + $0x318] sm:$0xff]
    %v263 = vld [vmem:[#allocation7 + $0x320] sm:$0xff]
    %v264 = vld [vmem:[#allocation7 + $0x328] sm:$0xff]
    %v265 = vld [vmem:[#allocation7 + $0x330] sm:$0xff]
    %v266 = vld [vmem:[#allocation7 + $0x338] sm:$0xff]
    %v267 = vld [vmem:[#allocation7 + $0x340] sm:$0xff]
    %v268 = vld [vmem:[#allocation7 + $0x348] sm:$0xff]
    %v269 = vld [vmem:[#allocation7 + $0x350] sm:$0xff]
    %v270 = vld [vmem:[#allocation7 + $0x358] sm:$0xff]
    %v271 = vld [vmem:[#allocation7 + $0x360] sm:$0xff]
    %v272 = vld [vmem:[#allocation7 + $0x368] sm:$0xff]
    %v273 = vld [vmem:[#allocation7 + $0x370] sm:$0xff]
    %v274 = vld [vmem:[#allocation7 + $0x378] sm:$0xff]
    %v275 = vld [vmem:[#allocation7 + $0x380] sm:$0xff]
    %v276 = vld [vmem:[#allocation7 + $0x388] sm:$0xff]
    %v277 = vld [vmem:[#allocation7 + $0x390] sm:$0xff]
    %v278 = vld [vmem:[#allocation7 + $0x398] sm:$0xff]
    %v279 = vld [vmem:[#allocation7 + $0x3a0] sm:$0xff]
    %v280 = vld [vmem:[#allocation7 + $0x3a8] sm:$0xff]
    %v281 = vld [vmem:[#allocation7 + $0x3b0] sm:$0xff]
    %v282 = vld [vmem:[#allocation7 + $0x3b8] sm:$0xff]
    %v283 = vld [vmem:[#allocation7 + $0x3c0] sm:$0xff]
    %v284 = vld [vmem:[#allocation7 + $0x3c8] sm:$0xff]
    %v285 = vld [vmem:[#allocation7 + $0x3d0] sm:$0xff]
    %v286 = vld [vmem:[#allocation7 + $0x3d8] sm:$0xff]
    %v287 = vld [vmem:[#allocation7 + $0x3e0] sm:$0xff]
    %v288 = vld [vmem:[#allocation7 + $0x3e8] sm:$0xff]
    %v289 = vld [vmem:[#allocation7 + $0x3f0] sm:$0xff]
    %v290 = vld [vmem:[#allocation7 + $0x3f8] sm:$0xff]
    %v291 = vld [vmem:[#allocation7 + $0x400] sm:$0xff]
    %v292 = vld [vmem:[#allocation7 + $0x408] sm:$0xff]
    %v293 = vld [vmem:[#allocation7 + $0x410] sm:$0xff]
    %v294 = vld [vmem:[#allocation7 + $0x418] sm:$0xff]
    %v295 = vld [vmem:[#allocation7 + $0x420] sm:$0xff]
    %v296 = vld [vmem:[#allocation7 + $0x428] sm:$0xff]
    %v297 = vld [vmem:[#allocation7 + $0x430] sm:$0xff]
    %v298 = vld [vmem:[#allocation7 + $0x438] sm:$0xff]
    %v299 = vld [vmem:[#allocation7 + $0x440] sm:$0xff]
    %v300 = vld [vmem:[#allocation7 + $0x448] sm:$0xff]
    %v301 = vld [vmem:[#allocation7 + $0x450] sm:$0xff]
    %v302 = vld [vmem:[#allocation7 + $0x458] sm:$0xff]
    %v303 = vld [vmem:[#allocation7 + $0x460] sm:$0xff]
    %v304 = vld [vmem:[#allocation7 + $0x468] sm:$0xff]
    %v305 = vld [vmem:[#allocation7 + $0x470] sm:$0xff]
    %v306 = vld [vmem:[#allocation7 + $0x478] sm:$0xff]
    %v307 = vld [vmem:[#allocation7 + $0x480] sm:$0xff]
    %v308 = vld [vmem:[#allocation7 + $0x488] sm:$0xff]
    %v309 = vld [vmem:[#allocation7 + $0x490] sm:$0xff]
    %v310 = vld [vmem:[#allocation7 + $0x498] sm:$0xff]
    %v311 = vld [vmem:[#allocation7 + $0x4a0] sm:$0xff]
    %v312 = vld [vmem:[#allocation7 + $0x4a8] sm:$0xff]
    %v313 = vld [vmem:[#allocation7 + $0x4b0] sm:$0xff]
    %v314 = vld [vmem:[#allocation7 + $0x4b8] sm:$0xff]
    %v315 = vld [vmem:[#allocation7 + $0x4c0] sm:$0xff]
    %v316 = vld [vmem:[#allocation7 + $0x4c8] sm:$0xff]
    %v317 = vld [vmem:[#allocation7 + $0x4d0] sm:$0xff]
    %v318 = vld [vmem:[#allocation7 + $0x4d8] sm:$0xff]
    %v319 = vld [vmem:[#allocation7 + $0x4e0] sm:$0xff]
    %v320 = vld [vmem:[#allocation7 + $0x4e8] sm:$0xff]
    %v321 = vld [vmem:[#allocation7 + $0x4f0] sm:$0xff]
    %v322 = vld [vmem:[#allocation7 + $0x4f8] sm:$0xff]
    %v323 = vld [vmem:[#allocation7 + $0x500] sm:$0xff]
    %v324 = vld [vmem:[#allocation7 + $0x508] sm:$0xff]
    %v325 = vld [vmem:[#allocation7 + $0x510] sm:$0xff]
    %v326 = vld [vmem:[#allocation7 + $0x518] sm:$0xff]
    %v327 = vld [vmem:[#allocation7 + $0x520] sm:$0xff]
    %v328 = vld [vmem:[#allocation7 + $0x528] sm:$0xff]
    %v329 = vld [vmem:[#allocation7 + $0x530] sm:$0xff]
    %v330 = vld [vmem:[#allocation7 + $0x538] sm:$0xff]
    %v331 = vld [vmem:[#allocation7 + $0x540] sm:$0xff]
    %v332 = vld [vmem:[#allocation7 + $0x548] sm:$0xff]
    %v333 = vld [vmem:[#allocation7 + $0x550] sm:$0xff]
    %v334 = vld [vmem:[#allocation7 + $0x558] sm:$0xff]
    %v335 = vld [vmem:[#allocation7 + $0x560] sm:$0xff]
    %v336 = vld [vmem:[#allocation7 + $0x568] sm:$0xff]
    %v337 = vld [vmem:[#allocation7 + $0x570] sm:$0xff]
    %v338 = vld [vmem:[#allocation7 + $0x578] sm:$0xff]
    %v339 = vld [vmem:[#allocation7 + $0x580] sm:$0xff]
    %v340 = vld [vmem:[#allocation7 + $0x588] sm:$0xff]
    %v341 = vld [vmem:[#allocation7 + $0x590] sm:$0xff]
    %v342 = vld [vmem:[#allocation7 + $0x598] sm:$0xff]
    %v343 = vld [vmem:[#allocation7 + $0x5a0] sm:$0xff]
    %v344 = vld [vmem:[#allocation7 + $0x5a8] sm:$0xff]
    %v345 = vld [vmem:[#allocation7 + $0x5b0] sm:$0xff]
    %v346 = vld [vmem:[#allocation7 + $0x5b8] sm:$0xff]
    %v347 = vld [vmem:[#allocation7 + $0x5c0] sm:$0xff]
    %v348 = vld [vmem:[#allocation7 + $0x5c8] sm:$0xff]
    %v349 = vld [vmem:[#allocation7 + $0x5d0] sm:$0xff]
    %v350 = vld [vmem:[#allocation7 + $0x5d8] sm:$0xff]
    %v351 = vld [vmem:[#allocation7 + $0x5e0] sm:$0xff]
    %v352 = vld [vmem:[#allocation7 + $0x5e8] sm:$0xff]
    %v353 = vld [vmem:[#allocation7 + $0x5f0] sm:$0xff]
    %v354 = vld [vmem:[#allocation7 + $0x5f8] sm:$0xff]
    %v355 = vld [vmem:[#allocation7 + $0x600] sm:$0xff]
    %v356 = vld [vmem:[#allocation7 + $0x608] sm:$0xff]
    %v357 = vld [vmem:[#allocation7 + $0x610] sm:$0xff]
    %v358 = vld [vmem:[#allocation7 + $0x618] sm:$0xff]
    %v359 = vld [vmem:[#allocation7 + $0x620] sm:$0xff]
    %v360 = vld [vmem:[#allocation7 + $0x628] sm:$0xff]
    %v361 = vld [vmem:[#allocation7 + $0x630] sm:$0xff]
    %v362 = vld [vmem:[#allocation7 + $0x638] sm:$0xff]
    %v363 = vld [vmem:[#allocation7 + $0x640] sm:$0xff]
    %v364 = vld [vmem:[#allocation7 + $0x648] sm:$0xff]
    %v365 = vld [vmem:[#allocation7 + $0x650] sm:$0xff]
    %v366 = vld [vmem:[#allocation7 + $0x658] sm:$0xff]
    %v367 = vld [vmem:[#allocation7 + $0x660] sm:$0xff]
    %v368 = vld [vmem:[#allocation7 + $0x668] sm:$0xff]
    %v369 = vld [vmem:[#allocation7 + $0x670] sm:$0xff]
    %v370 = vld [vmem:[#allocation7 + $0x678] sm:$0xff]
    %v371 = vld [vmem:[#allocation7 + $0x680] sm:$0xff]
    %v372 = vld [vmem:[#allocation7 + $0x688] sm:$0xff]
    %v373 = vld [vmem:[#allocation7 + $0x690] sm:$0xff]
    %v374 = vld [vmem:[#allocation7 + $0x698] sm:$0xff]
    %v375 = vld [vmem:[#allocation7 + $0x6a0] sm:$0xff]
    %v376 = vld [vmem:[#allocation7 + $0x6a8] sm:$0xff]
    %v377 = vld [vmem:[#allocation7 + $0x6b0] sm:$0xff]
    %v378 = vld [vmem:[#allocation7 + $0x6b8] sm:$0xff]
    %v379 = vld [vmem:[#allocation7 + $0x6c0] sm:$0xff]
    %v380 = vld [vmem:[#allocation7 + $0x6c8] sm:$0xff]
    %v381 = vld [vmem:[#allocation7 + $0x6d0] sm:$0xff]
    %v382 = vld [vmem:[#allocation7 + $0x6d8] sm:$0xff]
    %v383 = vld [vmem:[#allocation7 + $0x6e0] sm:$0xff]
    %v384 = vld [vmem:[#allocation7 + $0x6e8] sm:$0xff]
    %v385 = vld [vmem:[#allocation7 + $0x6f0] sm:$0xff]
    %v386 = vld [vmem:[#allocation7 + $0x6f8] sm:$0xff]
    %v387 = vld [vmem:[#allocation7 + $0x700] sm:$0xff]
    %v388 = vld [vmem:[#allocation7 + $0x708] sm:$0xff]
    %v389 = vld [vmem:[#allocation7 + $0x710] sm:$0xff]
    %v390 = vld [vmem:[#allocation7 + $0x718] sm:$0xff]
    %v391 = vld [vmem:[#allocation7 + $0x720] sm:$0xff]
    %v392 = vld [vmem:[#allocation7 + $0x728] sm:$0xff]
    %v393 = vld [vmem:[#allocation7 + $0x730] sm:$0xff]
    %v394 = vld [vmem:[#allocation7 + $0x738] sm:$0xff]
    %v395 = vld [vmem:[#allocation7 + $0x740] sm:$0xff]
    %v396 = vld [vmem:[#allocation7 + $0x748] sm:$0xff]
    %v397 = vld [vmem:[#allocation7 + $0x750] sm:$0xff]
    %v398 = vld [vmem:[#allocation7 + $0x758] sm:$0xff]
    %v399 = vld [vmem:[#allocation7 + $0x760] sm:$0xff]
    %v400 = vld [vmem:[#allocation7 + $0x768] sm:$0xff]
    %v401 = vld [vmem:[#allocation7 + $0x770] sm:$0xff]
    %v402 = vld [vmem:[#allocation7 + $0x778] sm:$0xff]
    %v403 = vld [vmem:[#allocation7 + $0x780] sm:$0xff]
    %v404 = vld [vmem:[#allocation7 + $0x788] sm:$0xff]
    %v405 = vld [vmem:[#allocation7 + $0x790] sm:$0xff]
    %v406 = vld [vmem:[#allocation7 + $0x798] sm:$0xff]
    %v407 = vld [vmem:[#allocation7 + $0x7a0] sm:$0xff]
    %v408 = vld [vmem:[#allocation7 + $0x7a8] sm:$0xff]
    %v409 = vld [vmem:[#allocation7 + $0x7b0] sm:$0xff]
    %v410 = vld [vmem:[#allocation7 + $0x7b8] sm:$0xff]
    %v411 = vld [vmem:[#allocation7 + $0x7c0] sm:$0xff]
    %v412 = vld [vmem:[#allocation7 + $0x7c8] sm:$0xff]
    %v413 = vld [vmem:[#allocation7 + $0x7d0] sm:$0xff]
    %v414 = vld [vmem:[#allocation7 + $0x7d8] sm:$0xff]
    %v415 = vld [vmem:[#allocation7 + $0x7e0] sm:$0xff]
    %v416 = vld [vmem:[#allocation7 + $0x7e8] sm:$0xff]
    %v417 = vld [vmem:[#allocation7 + $0x7f0] sm:$0xff]
    %v418 = vld [vmem:[#allocation7 + $0x7f8] sm:$0xff]
    %v419 = vunpack.c.l.bf16 %v163
    %v420 = vunpack.c.h.bf16 %v163
    %v421 = vunpack.c.l.bf16 %v164
    %v422 = vunpack.c.h.bf16 %v164
    %v423 = vunpack.c.l.bf16 %v165
    %v424 = vunpack.c.h.bf16 %v165
    %v425 = vunpack.c.l.bf16 %v166
    %v426 = vunpack.c.h.bf16 %v166
    %v427 = vunpack.c.l.bf16 %v167
    %v428 = vunpack.c.h.bf16 %v167
    %v429 = vunpack.c.l.bf16 %v168
    %v430 = vunpack.c.h.bf16 %v168
    %v431 = vunpack.c.l.bf16 %v169
    %v432 = vunpack.c.h.bf16 %v169
    %v433 = vunpack.c.l.bf16 %v170
    %v434 = vunpack.c.h.bf16 %v170
    %v435 = vunpack.c.l.bf16 %v171
    %v436 = vunpack.c.h.bf16 %v171
    %v437 = vunpack.c.l.bf16 %v172
    %v438 = vunpack.c.h.bf16 %v172
    %v439 = vunpack.c.l.bf16 %v173
    %v440 = vunpack.c.h.bf16 %v173
    %v441 = vunpack.c.l.bf16 %v174
    %v442 = vunpack.c.h.bf16 %v174
    %v443 = vunpack.c.l.bf16 %v175
    %v444 = vunpack.c.h.bf16 %v175
    %v445 = vunpack.c.l.bf16 %v176
    %v446 = vunpack.c.h.bf16 %v176
    %v447 = vunpack.c.l.bf16 %v177
    %v448 = vunpack.c.h.bf16 %v177
    %v449 = vunpack.c.l.bf16 %v178
    %v450 = vunpack.c.h.bf16 %v178
    %v451 = vunpack.c.l.bf16 %v179
    %v452 = vunpack.c.h.bf16 %v179
    %v453 = vunpack.c.l.bf16 %v180
    %v454 = vunpack.c.h.bf16 %v180
    %v455 = vunpack.c.l.bf16 %v181
    %v456 = vunpack.c.h.bf16 %v181
    %v457 = vunpack.c.l.bf16 %v182
    %v458 = vunpack.c.h.bf16 %v182
    %v459 = vunpack.c.l.bf16 %v183
    %v460 = vunpack.c.h.bf16 %v183
    %v461 = vunpack.c.l.bf16 %v184
    %v462 = vunpack.c.h.bf16 %v184
    %v463 = vunpack.c.l.bf16 %v185
    %v464 = vunpack.c.h.bf16 %v185
    %v465 = vunpack.c.l.bf16 %v186
    %v466 = vunpack.c.h.bf16 %v186
    %v467 = vunpack.c.l.bf16 %v187
    %v468 = vunpack.c.h.bf16 %v187
    %v469 = vunpack.c.l.bf16 %v188
    %v470 = vunpack.c.h.bf16 %v188
    %v471 = vunpack.c.l.bf16 %v189
    %v472 = vunpack.c.h.bf16 %v189
    %v473 = vunpack.c.l.bf16 %v190
    %v474 = vunpack.c.h.bf16 %v190
    %v475 = vunpack.c.l.bf16 %v191
    %v476 = vunpack.c.h.bf16 %v191
    %v477 = vunpack.c.l.bf16 %v192
    %v478 = vunpack.c.h.bf16 %v192
    %v479 = vunpack.c.l.bf16 %v193
    %v480 = vunpack.c.h.bf16 %v193
    %v481 = vunpack.c.l.bf16 %v194
    %v482 = vunpack.c.h.bf16 %v194
    %v483 = vunpack.c.l.bf16 %v195
    %v484 = vunpack.c.h.bf16 %v195
    %v485 = vunpack.c.l.bf16 %v196
    %v486 = vunpack.c.h.bf16 %v196
    %v487 = vunpack.c.l.bf16 %v197
    %v488 = vunpack.c.h.bf16 %v197
    %v489 = vunpack.c.l.bf16 %v198
    %v490 = vunpack.c.h.bf16 %v198
    %v491 = vunpack.c.l.bf16 %v199
    %v492 = vunpack.c.h.bf16 %v199
    %v493 = vunpack.c.l.bf16 %v200
    %v494 = vunpack.c.h.bf16 %v200
    %v495 = vunpack.c.l.bf16 %v201
    %v496 = vunpack.c.h.bf16 %v201
    %v497 = vunpack.c.l.bf16 %v202
    %v498 = vunpack.c.h.bf16 %v202
    %v499 = vunpack.c.l.bf16 %v203
    %v500 = vunpack.c.h.bf16 %v203
    %v501 = vunpack.c.l.bf16 %v204
    %v502 = vunpack.c.h.bf16 %v204
    %v503 = vunpack.c.l.bf16 %v205
    %v504 = vunpack.c.h.bf16 %v205
    %v505 = vunpack.c.l.bf16 %v206
    %v506 = vunpack.c.h.bf16 %v206
    %v507 = vunpack.c.l.bf16 %v207
    %v508 = vunpack.c.h.bf16 %v207
    %v509 = vunpack.c.l.bf16 %v208
    %v510 = vunpack.c.h.bf16 %v208
    %v511 = vunpack.c.l.bf16 %v209
    %v512 = vunpack.c.h.bf16 %v209
    %v513 = vunpack.c.l.bf16 %v210
    %v514 = vunpack.c.h.bf16 %v210
    %v515 = vunpack.c.l.bf16 %v211
    %v516 = vunpack.c.h.bf16 %v211
    %v517 = vunpack.c.l.bf16 %v212
    %v518 = vunpack.c.h.bf16 %v212
    %v519 = vunpack.c.l.bf16 %v213
    %v520 = vunpack.c.h.bf16 %v213
    %v521 = vunpack.c.l.bf16 %v214
    %v522 = vunpack.c.h.bf16 %v214
    %v523 = vunpack.c.l.bf16 %v215
    %v524 = vunpack.c.h.bf16 %v215
    %v525 = vunpack.c.l.bf16 %v216
    %v526 = vunpack.c.h.bf16 %v216
    %v527 = vunpack.c.l.bf16 %v217
    %v528 = vunpack.c.h.bf16 %v217
    %v529 = vunpack.c.l.bf16 %v218
    %v530 = vunpack.c.h.bf16 %v218
    %v531 = vunpack.c.l.bf16 %v219
    %v532 = vunpack.c.h.bf16 %v219
    %v533 = vunpack.c.l.bf16 %v220
    %v534 = vunpack.c.h.bf16 %v220
    %v535 = vunpack.c.l.bf16 %v221
    %v536 = vunpack.c.h.bf16 %v221
    %v537 = vunpack.c.l.bf16 %v222
    %v538 = vunpack.c.h.bf16 %v222
    %v539 = vunpack.c.l.bf16 %v223
    %v540 = vunpack.c.h.bf16 %v223
    %v541 = vunpack.c.l.bf16 %v224
    %v542 = vunpack.c.h.bf16 %v224
    %v543 = vunpack.c.l.bf16 %v225
    %v544 = vunpack.c.h.bf16 %v225
    %v545 = vunpack.c.l.bf16 %v226
    %v546 = vunpack.c.h.bf16 %v226
    %v547 = vunpack.c.l.bf16 %v227
    %v548 = vunpack.c.h.bf16 %v227
    %v549 = vunpack.c.l.bf16 %v228
    %v550 = vunpack.c.h.bf16 %v228
    %v551 = vunpack.c.l.bf16 %v229
    %v552 = vunpack.c.h.bf16 %v229
    %v553 = vunpack.c.l.bf16 %v230
    %v554 = vunpack.c.h.bf16 %v230
    %v555 = vunpack.c.l.bf16 %v231
    %v556 = vunpack.c.h.bf16 %v231
    %v557 = vunpack.c.l.bf16 %v232
    %v558 = vunpack.c.h.bf16 %v232
    %v559 = vunpack.c.l.bf16 %v233
    %v560 = vunpack.c.h.bf16 %v233
    %v561 = vunpack.c.l.bf16 %v234
    %v562 = vunpack.c.h.bf16 %v234
    %v563 = vunpack.c.l.bf16 %v235
    %v564 = vunpack.c.h.bf16 %v235
    %v565 = vunpack.c.l.bf16 %v236
    %v566 = vunpack.c.h.bf16 %v236
    %v567 = vunpack.c.l.bf16 %v237
    %v568 = vunpack.c.h.bf16 %v237
    %v569 = vunpack.c.l.bf16 %v238
    %v570 = vunpack.c.h.bf16 %v238
    %v571 = vunpack.c.l.bf16 %v239
    %v572 = vunpack.c.h.bf16 %v239
    %v573 = vunpack.c.l.bf16 %v240
    %v574 = vunpack.c.h.bf16 %v240
    %v575 = vunpack.c.l.bf16 %v241
    %v576 = vunpack.c.h.bf16 %v241
    %v577 = vunpack.c.l.bf16 %v242
    %v578 = vunpack.c.h.bf16 %v242
    %v579 = vunpack.c.l.bf16 %v243
    %v580 = vunpack.c.h.bf16 %v243
    %v581 = vunpack.c.l.bf16 %v244
    %v582 = vunpack.c.h.bf16 %v244
    %v583 = vunpack.c.l.bf16 %v245
    %v584 = vunpack.c.h.bf16 %v245
    %v585 = vunpack.c.l.bf16 %v246
    %v586 = vunpack.c.h.bf16 %v246
    %v587 = vunpack.c.l.bf16 %v247
    %v588 = vunpack.c.h.bf16 %v247
    %v589 = vunpack.c.l.bf16 %v248
    %v590 = vunpack.c.h.bf16 %v248
    %v591 = vunpack.c.l.bf16 %v249
    %v592 = vunpack.c.h.bf16 %v249
    %v593 = vunpack.c.l.bf16 %v250
    %v594 = vunpack.c.h.bf16 %v250
    %v595 = vunpack.c.l.bf16 %v251
    %v596 = vunpack.c.h.bf16 %v251
    %v597 = vunpack.c.l.bf16 %v252
    %v598 = vunpack.c.h.bf16 %v252
    %v599 = vunpack.c.l.bf16 %v253
    %v600 = vunpack.c.h.bf16 %v253
    %v601 = vunpack.c.l.bf16 %v254
    %v602 = vunpack.c.h.bf16 %v254
    %v603 = vunpack.c.l.bf16 %v255
    %v604 = vunpack.c.h.bf16 %v255
    %v605 = vunpack.c.l.bf16 %v256
    %v606 = vunpack.c.h.bf16 %v256
    %v607 = vunpack.c.l.bf16 %v257
    %v608 = vunpack.c.h.bf16 %v257
    %v609 = vunpack.c.l.bf16 %v258
    %v610 = vunpack.c.h.bf16 %v258
    %v611 = vunpack.c.l.bf16 %v259
    %v612 = vunpack.c.h.bf16 %v259
    %v613 = vunpack.c.l.bf16 %v260
    %v614 = vunpack.c.h.bf16 %v260
    %v615 = vunpack.c.l.bf16 %v261
    %v616 = vunpack.c.h.bf16 %v261
    %v617 = vunpack.c.l.bf16 %v262
    %v618 = vunpack.c.h.bf16 %v262
    %v619 = vunpack.c.l.bf16 %v263
    %v620 = vunpack.c.h.bf16 %v263
    %v621 = vunpack.c.l.bf16 %v264
    %v622 = vunpack.c.h.bf16 %v264
    %v623 = vunpack.c.l.bf16 %v265
    %v624 = vunpack.c.h.bf16 %v265
    %v625 = vunpack.c.l.bf16 %v266
    %v626 = vunpack.c.h.bf16 %v266
    %v627 = vunpack.c.l.bf16 %v267
    %v628 = vunpack.c.h.bf16 %v267
    %v629 = vunpack.c.l.bf16 %v268
    %v630 = vunpack.c.h.bf16 %v268
    %v631 = vunpack.c.l.bf16 %v269
    %v632 = vunpack.c.h.bf16 %v269
    %v633 = vunpack.c.l.bf16 %v270
    %v634 = vunpack.c.h.bf16 %v270
    %v635 = vunpack.c.l.bf16 %v271
    %v636 = vunpack.c.h.bf16 %v271
    %v637 = vunpack.c.l.bf16 %v272
    %v638 = vunpack.c.h.bf16 %v272
    %v639 = vunpack.c.l.bf16 %v273
    %v640 = vunpack.c.h.bf16 %v273
    %v641 = vunpack.c.l.bf16 %v274
    %v642 = vunpack.c.h.bf16 %v274
    %v643 = vunpack.c.l.bf16 %v275
    %v644 = vunpack.c.h.bf16 %v275
    %v645 = vunpack.c.l.bf16 %v276
    %v646 = vunpack.c.h.bf16 %v276
    %v647 = vunpack.c.l.bf16 %v277
    %v648 = vunpack.c.h.bf16 %v277
    %v649 = vunpack.c.l.bf16 %v278
    %v650 = vunpack.c.h.bf16 %v278
    %v651 = vunpack.c.l.bf16 %v279
    %v652 = vunpack.c.h.bf16 %v279
    %v653 = vunpack.c.l.bf16 %v280
    %v654 = vunpack.c.h.bf16 %v280
    %v655 = vunpack.c.l.bf16 %v281
    %v656 = vunpack.c.h.bf16 %v281
    %v657 = vunpack.c.l.bf16 %v282
    %v658 = vunpack.c.h.bf16 %v282
    %v659 = vunpack.c.l.bf16 %v283
    %v660 = vunpack.c.h.bf16 %v283
    %v661 = vunpack.c.l.bf16 %v284
    %v662 = vunpack.c.h.bf16 %v284
    %v663 = vunpack.c.l.bf16 %v285
    %v664 = vunpack.c.h.bf16 %v285
    %v665 = vunpack.c.l.bf16 %v286
    %v666 = vunpack.c.h.bf16 %v286
    %v667 = vunpack.c.l.bf16 %v287
    %v668 = vunpack.c.h.bf16 %v287
    %v669 = vunpack.c.l.bf16 %v288
    %v670 = vunpack.c.h.bf16 %v288
    %v671 = vunpack.c.l.bf16 %v289
    %v672 = vunpack.c.h.bf16 %v289
    %v673 = vunpack.c.l.bf16 %v290
    %v674 = vunpack.c.h.bf16 %v290
    %v675 = vunpack.c.l.bf16 %v291
    %v676 = vunpack.c.h.bf16 %v291
    %v677 = vunpack.c.l.bf16 %v292
    %v678 = vunpack.c.h.bf16 %v292
    %v679 = vunpack.c.l.bf16 %v293
    %v680 = vunpack.c.h.bf16 %v293
    %v681 = vunpack.c.l.bf16 %v294
    %v682 = vunpack.c.h.bf16 %v294
    %v683 = vunpack.c.l.bf16 %v295
    %v684 = vunpack.c.h.bf16 %v295
    %v685 = vunpack.c.l.bf16 %v296
    %v686 = vunpack.c.h.bf16 %v296
    %v687 = vunpack.c.l.bf16 %v297
    %v688 = vunpack.c.h.bf16 %v297
    %v689 = vunpack.c.l.bf16 %v298
    %v690 = vunpack.c.h.bf16 %v298
    %v691 = vunpack.c.l.bf16 %v299
    %v692 = vunpack.c.h.bf16 %v299
    %v693 = vunpack.c.l.bf16 %v300
    %v694 = vunpack.c.h.bf16 %v300
    %v695 = vunpack.c.l.bf16 %v301
    %v696 = vunpack.c.h.bf16 %v301
    %v697 = vunpack.c.l.bf16 %v302
    %v698 = vunpack.c.h.bf16 %v302
    %v699 = vunpack.c.l.bf16 %v303
    %v700 = vunpack.c.h.bf16 %v303
    %v701 = vunpack.c.l.bf16 %v304
    %v702 = vunpack.c.h.bf16 %v304
    %v703 = vunpack.c.l.bf16 %v305
    %v704 = vunpack.c.h.bf16 %v305
    %v705 = vunpack.c.l.bf16 %v306
    %v706 = vunpack.c.h.bf16 %v306
    %v707 = vunpack.c.l.bf16 %v307
    %v708 = vunpack.c.h.bf16 %v307
    %v709 = vunpack.c.l.bf16 %v308
    %v710 = vunpack.c.h.bf16 %v308
    %v711 = vunpack.c.l.bf16 %v309
    %v712 = vunpack.c.h.bf16 %v309
    %v713 = vunpack.c.l.bf16 %v310
    %v714 = vunpack.c.h.bf16 %v310
    %v715 = vunpack.c.l.bf16 %v311
    %v716 = vunpack.c.h.bf16 %v311
    %v717 = vunpack.c.l.bf16 %v312
    %v718 = vunpack.c.h.bf16 %v312
    %v719 = vunpack.c.l.bf16 %v313
    %v720 = vunpack.c.h.bf16 %v313
    %v721 = vunpack.c.l.bf16 %v314
    %v722 = vunpack.c.h.bf16 %v314
    %v723 = vunpack.c.l.bf16 %v315
    %v724 = vunpack.c.h.bf16 %v315
    %v725 = vunpack.c.l.bf16 %v316
    %v726 = vunpack.c.h.bf16 %v316
    %v727 = vunpack.c.l.bf16 %v317
    %v728 = vunpack.c.h.bf16 %v317
    %v729 = vunpack.c.l.bf16 %v318
    %v730 = vunpack.c.h.bf16 %v318
    %v731 = vunpack.c.l.bf16 %v319
    %v732 = vunpack.c.h.bf16 %v319
    %v733 = vunpack.c.l.bf16 %v320
    %v734 = vunpack.c.h.bf16 %v320
    %v735 = vunpack.c.l.bf16 %v321
    %v736 = vunpack.c.h.bf16 %v321
    %v737 = vunpack.c.l.bf16 %v322
    %v738 = vunpack.c.h.bf16 %v322
    %v739 = vunpack.c.l.bf16 %v323
    %v740 = vunpack.c.h.bf16 %v323
    %v741 = vunpack.c.l.bf16 %v324
    %v742 = vunpack.c.h.bf16 %v324
    %v743 = vunpack.c.l.bf16 %v325
    %v744 = vunpack.c.h.bf16 %v325
    %v745 = vunpack.c.l.bf16 %v326
    %v746 = vunpack.c.h.bf16 %v326
    %v747 = vunpack.c.l.bf16 %v327
    %v748 = vunpack.c.h.bf16 %v327
    %v749 = vunpack.c.l.bf16 %v328
    %v750 = vunpack.c.h.bf16 %v328
    %v751 = vunpack.c.l.bf16 %v329
    %v752 = vunpack.c.h.bf16 %v329
    %v753 = vunpack.c.l.bf16 %v330
    %v754 = vunpack.c.h.bf16 %v330
    %v755 = vunpack.c.l.bf16 %v331
    %v756 = vunpack.c.h.bf16 %v331
    %v757 = vunpack.c.l.bf16 %v332
    %v758 = vunpack.c.h.bf16 %v332
    %v759 = vunpack.c.l.bf16 %v333
    %v760 = vunpack.c.h.bf16 %v333
    %v761 = vunpack.c.l.bf16 %v334
    %v762 = vunpack.c.h.bf16 %v334
    %v763 = vunpack.c.l.bf16 %v335
    %v764 = vunpack.c.h.bf16 %v335
    %v765 = vunpack.c.l.bf16 %v336
    %v766 = vunpack.c.h.bf16 %v336
    %v767 = vunpack.c.l.bf16 %v337
    %v768 = vunpack.c.h.bf16 %v337
    %v769 = vunpack.c.l.bf16 %v338
    %v770 = vunpack.c.h.bf16 %v338
    %v771 = vunpack.c.l.bf16 %v339
    %v772 = vunpack.c.h.bf16 %v339
    %v773 = vunpack.c.l.bf16 %v340
    %v774 = vunpack.c.h.bf16 %v340
    %v775 = vunpack.c.l.bf16 %v341
    %v776 = vunpack.c.h.bf16 %v341
    %v777 = vunpack.c.l.bf16 %v342
    %v778 = vunpack.c.h.bf16 %v342
    %v779 = vunpack.c.l.bf16 %v343
    %v780 = vunpack.c.h.bf16 %v343
    %v781 = vunpack.c.l.bf16 %v344
    %v782 = vunpack.c.h.bf16 %v344
    %v783 = vunpack.c.l.bf16 %v345
    %v784 = vunpack.c.h.bf16 %v345
    %v785 = vunpack.c.l.bf16 %v346
    %v786 = vunpack.c.h.bf16 %v346
    %v787 = vunpack.c.l.bf16 %v347
    %v788 = vunpack.c.h.bf16 %v347
    %v789 = vunpack.c.l.bf16 %v348
    %v790 = vunpack.c.h.bf16 %v348
    %v791 = vunpack.c.l.bf16 %v349
    %v792 = vunpack.c.h.bf16 %v349
    %v793 = vunpack.c.l.bf16 %v350
    %v794 = vunpack.c.h.bf16 %v350
    %v795 = vunpack.c.l.bf16 %v351
    %v796 = vunpack.c.h.bf16 %v351
    %v797 = vunpack.c.l.bf16 %v352
    %v798 = vunpack.c.h.bf16 %v352
    %v799 = vunpack.c.l.bf16 %v353
    %v800 = vunpack.c.h.bf16 %v353
    %v801 = vunpack.c.l.bf16 %v354
    %v802 = vunpack.c.h.bf16 %v354
    %v803 = vunpack.c.l.bf16 %v355
    %v804 = vunpack.c.h.bf16 %v355
    %v805 = vunpack.c.l.bf16 %v356
    %v806 = vunpack.c.h.bf16 %v356
    %v807 = vunpack.c.l.bf16 %v357
    %v808 = vunpack.c.h.bf16 %v357
    %v809 = vunpack.c.l.bf16 %v358
    %v810 = vunpack.c.h.bf16 %v358
    %v811 = vunpack.c.l.bf16 %v359
    %v812 = vunpack.c.h.bf16 %v359
    %v813 = vunpack.c.l.bf16 %v360
    %v814 = vunpack.c.h.bf16 %v360
    %v815 = vunpack.c.l.bf16 %v361
    %v816 = vunpack.c.h.bf16 %v361
    %v817 = vunpack.c.l.bf16 %v362
    %v818 = vunpack.c.h.bf16 %v362
    %v819 = vunpack.c.l.bf16 %v363
    %v820 = vunpack.c.h.bf16 %v363
    %v821 = vunpack.c.l.bf16 %v364
    %v822 = vunpack.c.h.bf16 %v364
    %v823 = vunpack.c.l.bf16 %v365
    %v824 = vunpack.c.h.bf16 %v365
    %v825 = vunpack.c.l.bf16 %v366
    %v826 = vunpack.c.h.bf16 %v366
    %v827 = vunpack.c.l.bf16 %v367
    %v828 = vunpack.c.h.bf16 %v367
    %v829 = vunpack.c.l.bf16 %v368
    %v830 = vunpack.c.h.bf16 %v368
    %v831 = vunpack.c.l.bf16 %v369
    %v832 = vunpack.c.h.bf16 %v369
    %v833 = vunpack.c.l.bf16 %v370
    %v834 = vunpack.c.h.bf16 %v370
    %v835 = vunpack.c.l.bf16 %v371
    %v836 = vunpack.c.h.bf16 %v371
    %v837 = vunpack.c.l.bf16 %v372
    %v838 = vunpack.c.h.bf16 %v372
    %v839 = vunpack.c.l.bf16 %v373
    %v840 = vunpack.c.h.bf16 %v373
    %v841 = vunpack.c.l.bf16 %v374
    %v842 = vunpack.c.h.bf16 %v374
    %v843 = vunpack.c.l.bf16 %v375
    %v844 = vunpack.c.h.bf16 %v375
    %v845 = vunpack.c.l.bf16 %v376
    %v846 = vunpack.c.h.bf16 %v376
    %v847 = vunpack.c.l.bf16 %v377
    %v848 = vunpack.c.h.bf16 %v377
    %v849 = vunpack.c.l.bf16 %v378
    %v850 = vunpack.c.h.bf16 %v378
    %v851 = vunpack.c.l.bf16 %v379
    %v852 = vunpack.c.h.bf16 %v379
    %v853 = vunpack.c.l.bf16 %v380
    %v854 = vunpack.c.h.bf16 %v380
    %v855 = vunpack.c.l.bf16 %v381
    %v856 = vunpack.c.h.bf16 %v381
    %v857 = vunpack.c.l.bf16 %v382
    %v858 = vunpack.c.h.bf16 %v382
    %v859 = vunpack.c.l.bf16 %v383
    %v860 = vunpack.c.h.bf16 %v383
    %v861 = vunpack.c.l.bf16 %v384
    %v862 = vunpack.c.h.bf16 %v384
    %v863 = vunpack.c.l.bf16 %v385
    %v864 = vunpack.c.h.bf16 %v385
    %v865 = vunpack.c.l.bf16 %v386
    %v866 = vunpack.c.h.bf16 %v386
    %v867 = vunpack.c.l.bf16 %v387
    %v868 = vunpack.c.h.bf16 %v387
    %v869 = vunpack.c.l.bf16 %v388
    %v870 = vunpack.c.h.bf16 %v388
    %v871 = vunpack.c.l.bf16 %v389
    %v872 = vunpack.c.h.bf16 %v389
    %v873 = vunpack.c.l.bf16 %v390
    %v874 = vunpack.c.h.bf16 %v390
    %v875 = vunpack.c.l.bf16 %v391
    %v876 = vunpack.c.h.bf16 %v391
    %v877 = vunpack.c.l.bf16 %v392
    %v878 = vunpack.c.h.bf16 %v392
    %v879 = vunpack.c.l.bf16 %v393
    %v880 = vunpack.c.h.bf16 %v393
    %v881 = vunpack.c.l.bf16 %v394
    %v882 = vunpack.c.h.bf16 %v394
    %v883 = vunpack.c.l.bf16 %v395
    %v884 = vunpack.c.h.bf16 %v395
    %v885 = vunpack.c.l.bf16 %v396
    %v886 = vunpack.c.h.bf16 %v396
    %v887 = vunpack.c.l.bf16 %v397
    %v888 = vunpack.c.h.bf16 %v397
    %v889 = vunpack.c.l.bf16 %v398
    %v890 = vunpack.c.h.bf16 %v398
    %v891 = vunpack.c.l.bf16 %v399
    %v892 = vunpack.c.h.bf16 %v399
    %v893 = vunpack.c.l.bf16 %v400
    %v894 = vunpack.c.h.bf16 %v400
    %v895 = vunpack.c.l.bf16 %v401
    %v896 = vunpack.c.h.bf16 %v401
    %v897 = vunpack.c.l.bf16 %v402
    %v898 = vunpack.c.h.bf16 %v402
    %v899 = vunpack.c.l.bf16 %v403
    %v900 = vunpack.c.h.bf16 %v403
    %v901 = vunpack.c.l.bf16 %v404
    %v902 = vunpack.c.h.bf16 %v404
    %v903 = vunpack.c.l.bf16 %v405
    %v904 = vunpack.c.h.bf16 %v405
    %v905 = vunpack.c.l.bf16 %v406
    %v906 = vunpack.c.h.bf16 %v406
    %v907 = vunpack.c.l.bf16 %v407
    %v908 = vunpack.c.h.bf16 %v407
    %v909 = vunpack.c.l.bf16 %v408
    %v910 = vunpack.c.h.bf16 %v408
    %v911 = vunpack.c.l.bf16 %v409
    %v912 = vunpack.c.h.bf16 %v409
    %v913 = vunpack.c.l.bf16 %v410
    %v914 = vunpack.c.h.bf16 %v410
    %v915 = vunpack.c.l.bf16 %v411
    %v916 = vunpack.c.h.bf16 %v411
    %v917 = vunpack.c.l.bf16 %v412
    %v918 = vunpack.c.h.bf16 %v412
    %v919 = vunpack.c.l.bf16 %v413
    %v920 = vunpack.c.h.bf16 %v413
    %v921 = vunpack.c.l.bf16 %v414
    %v922 = vunpack.c.h.bf16 %v414
    %v923 = vunpack.c.l.bf16 %v415
    %v924 = vunpack.c.h.bf16 %v415
    %v925 = vunpack.c.l.bf16 %v416
    %v926 = vunpack.c.h.bf16 %v416
    %v927 = vunpack.c.l.bf16 %v417
    %v928 = vunpack.c.h.bf16 %v417
    %v929 = vunpack.c.l.bf16 %v418
    %v930 = vunpack.c.h.bf16 %v418
    %v931 = vld [vmem:[#allocation9] sm:$0xf]
    %v933 = vlaneseq
    %v934 = vshrl.u32 %v933, 7
    %v935 = vsub.s32 0, %v934
    %v936 = vrot.slane %v931, %v935
    %v937 = vlaneseq
    %v938 = vshrl.u32 %v937, 7
    %v939 = vsub.s32 1, %v938
    %v940 = vrot.slane %v931, %v939
    %v941 = vlaneseq
    %v942 = vshrl.u32 %v941, 7
    %v943 = vsub.s32 2, %v942
    %v944 = vrot.slane %v931, %v943
    %v945 = vlaneseq
    %v946 = vshrl.u32 %v945, 7
    %v947 = vsub.s32 3, %v946
    %v948 = vrot.slane %v931, %v947
    %953 = vmatprep.subr.mxu0 %v480
    %954 = vmatpush1.msra.mxu0 %v479
    %955 = vmatprep.subr.mxu0 %v476
    %956 = vmatpush1.msra.mxu0 %v475
    %957 = vmatprep.subr.mxu0 %v472
    %958 = vmatpush1.msra.mxu0 %v471
    %959 = vmatprep.subr.mxu0 %v468
    %960 = vmatpush1.msra.mxu0 %v467
    %961 = vmatprep.subr.mxu0 %v464
    %962 = vmatpush1.msra.mxu0 %v463
    %963 = vmatprep.subr.mxu0 %v460
    %964 = vmatpush1.msra.mxu0 %v459
    %965 = vmatprep.subr.mxu0 %v456
    %966 = vmatpush1.msra.mxu0 %v455
    %967 = vmatprep.subr.mxu0 %v452
    %968 = vmatpush1.msra.mxu0 %v451
    %969 = vmatprep.subr.mxu0 %v448
    %970 = vmatpush1.msra.mxu0 %v447
    %971 = vmatprep.subr.mxu0 %v444
    %972 = vmatpush1.msra.mxu0 %v443
    %973 = vmatprep.subr.mxu0 %v440
    %974 = vmatpush1.msra.mxu0 %v439
    %975 = vmatprep.subr.mxu0 %v436
    %976 = vmatpush1.msra.mxu0 %v435
    %977 = vmatprep.subr.mxu0 %v432
    %978 = vmatpush1.msra.mxu0 %v431
    %979 = vmatprep.subr.mxu0 %v428
    %980 = vmatpush1.msra.mxu0 %v427
    %981 = vmatprep.subr.mxu0 %v424
    %982 = vmatpush1.msra.mxu0 %v423
    %983 = vmatprep.subr.mxu0 %v420
    %984 = vmatpush1.msra.mxu0 %v419
    %985 = vmatprep.subr.mxu0 %v544
    %986 = vmatpush2.msra.mxu0 %v543
    %987 = vmatprep.subr.mxu0 %v540
    %988 = vmatpush2.msra.mxu0 %v539
    %989 = vmatprep.subr.mxu0 %v536
    %990 = vmatpush2.msra.mxu0 %v535
    %991 = vmatprep.subr.mxu0 %v532
    %992 = vmatpush2.msra.mxu0 %v531
    %993 = vmatprep.subr.mxu0 %v528
    %994 = vmatpush2.msra.mxu0 %v527
    %995 = vmatprep.subr.mxu0 %v524
    %996 = vmatpush2.msra.mxu0 %v523
    %997 = vmatprep.subr.mxu0 %v520
    %998 = vmatpush2.msra.mxu0 %v519
    %999 = vmatprep.subr.mxu0 %v516
    %1000 = vmatpush2.msra.mxu0 %v515
    %1001 = vmatprep.subr.mxu0 %v512
    %1002 = vmatpush2.msra.mxu0 %v511
    %1003 = vmatprep.subr.mxu0 %v508
    %1004 = vmatpush2.msra.mxu0 %v507
    %1005 = vmatprep.subr.mxu0 %v504
    %1006 = vmatpush2.msra.mxu0 %v503
    %1007 = vmatprep.subr.mxu0 %v500
    %1008 = vmatpush2.msra.mxu0 %v499
    %1009 = vmatprep.subr.mxu0 %v496
    %1010 = vmatpush2.msra.mxu0 %v495
    %1011 = vmatprep.subr.mxu0 %v492
    %1012 = vmatpush2.msra.mxu0 %v491
    %1013 = vmatprep.subr.mxu0 %v488
    %1014 = vmatpush2.msra.mxu0 %v487
    %1015 = vmatprep.subr.mxu0 %v484
    %1016 = vmatpush2.msra.mxu0 %v483
    %1017 = vmatprep.mubr.f32.mxu0 %v148
    %1018 = vmatmul.mubr.f32.gmra.mxu0 %v147
    %v1019 = vpop.f32.mrf.mxu0
    %v1020 = vadd.f32 %v936, %v1019
    %v1021 = vpop.f32.mrf.mxu0
    %v1022 = vadd.f32 %v940, %v1021
    %1023 = vmatprep.mubr.f32.mxu0 %v156
    %1024 = vmatmul.mubr.f32.gmra.mxu0 %v155
    %v1025 = vpop.f32.mrf.mxu0
    %v1026 = vadd.f32 %v936, %v1025
    %v1027 = vpop.f32.mrf.mxu0
    %v1028 = vadd.f32 %v940, %v1027
    %1029 = vdwg.mxu0
    %1030 = vmatprep.subr.mxu0 %v608
    %1031 = vmatpush1.msra.mxu0 %v607
    %1032 = vmatprep.subr.mxu0 %v604
    %1033 = vmatpush1.msra.mxu0 %v603
    %1034 = vmatprep.subr.mxu0 %v600
    %1035 = vmatpush1.msra.mxu0 %v599
    %1036 = vmatprep.subr.mxu0 %v596
    %1037 = vmatpush1.msra.mxu0 %v595
    %1038 = vmatprep.subr.mxu0 %v592
    %1039 = vmatpush1.msra.mxu0 %v591
    %1040 = vmatprep.subr.mxu0 %v588
    %1041 = vmatpush1.msra.mxu0 %v587
    %1042 = vmatprep.subr.mxu0 %v584
    %1043 = vmatpush1.msra.mxu0 %v583
    %1044 = vmatprep.subr.mxu0 %v580
    %1045 = vmatpush1.msra.mxu0 %v579
    %1046 = vmatprep.subr.mxu0 %v576
    %1047 = vmatpush1.msra.mxu0 %v575
    %1048 = vmatprep.subr.mxu0 %v572
    %1049 = vmatpush1.msra.mxu0 %v571
    %1050 = vmatprep.subr.mxu0 %v568
    %1051 = vmatpush1.msra.mxu0 %v567
    %1052 = vmatprep.subr.mxu0 %v564
    %1053 = vmatpush1.msra.mxu0 %v563
    %1054 = vmatprep.subr.mxu0 %v560
    %1055 = vmatpush1.msra.mxu0 %v559
    %1056 = vmatprep.subr.mxu0 %v556
    %1057 = vmatpush1.msra.mxu0 %v555
    %1058 = vmatprep.subr.mxu0 %v552
    %1059 = vmatpush1.msra.mxu0 %v551
    %1060 = vmatprep.subr.mxu0 %v548
    %1061 = vmatpush1.msra.mxu0 %v547
    %1062 = vmatprep.subr.mxu0 %v672
    %1063 = vmatpush2.msra.mxu0 %v671
    %1064 = vmatprep.subr.mxu0 %v668
    %1065 = vmatpush2.msra.mxu0 %v667
    %1066 = vmatprep.subr.mxu0 %v664
    %1067 = vmatpush2.msra.mxu0 %v663
    %1068 = vmatprep.subr.mxu0 %v660
    %1069 = vmatpush2.msra.mxu0 %v659
    %1070 = vmatprep.subr.mxu0 %v656
    %1071 = vmatpush2.msra.mxu0 %v655
    %1072 = vmatprep.subr.mxu0 %v652
    %1073 = vmatpush2.msra.mxu0 %v651
    %1074 = vmatprep.subr.mxu0 %v648
    %1075 = vmatpush2.msra.mxu0 %v647
    %1076 = vmatprep.subr.mxu0 %v644
    %1077 = vmatpush2.msra.mxu0 %v643
    %1078 = vmatprep.subr.mxu0 %v640
    %1079 = vmatpush2.msra.mxu0 %v639
    %1080 = vmatprep.subr.mxu0 %v636
    %1081 = vmatpush2.msra.mxu0 %v635
    %1082 = vmatprep.subr.mxu0 %v632
    %1083 = vmatpush2.msra.mxu0 %v631
    %1084 = vmatprep.subr.mxu0 %v628
    %1085 = vmatpush2.msra.mxu0 %v627
    %1086 = vmatprep.subr.mxu0 %v624
    %1087 = vmatpush2.msra.mxu0 %v623
    %1088 = vmatprep.subr.mxu0 %v620
    %1089 = vmatpush2.msra.mxu0 %v619
    %1090 = vmatprep.subr.mxu0 %v616
    %1091 = vmatpush2.msra.mxu0 %v615
    %1092 = vmatprep.subr.mxu0 %v612
    %1093 = vmatpush2.msra.mxu0 %v611
    %1094 = vmatprep.mubr.f32.mxu0 %v150
    %1095 = vmatmul.mubr.f32.gmra.mxu0 %v149
    %v1096 = vpop.f32.mrf.mxu0
    %v1097 = vadd.f32 %v1020, %v1096
    %v1098 = vpop.f32.mrf.mxu0
    %v1099 = vadd.f32 %v1022, %v1098
    %1100 = vmatprep.mubr.f32.mxu0 %v158
    %1101 = vmatmul.mubr.f32.gmra.mxu0 %v157
    %v1102 = vpop.f32.mrf.mxu0
    %v1103 = vadd.f32 %v1026, %v1102
    %v1104 = vpop.f32.mrf.mxu0
    %v1105 = vadd.f32 %v1028, %v1104
    %1106 = vdwg.mxu0
    %1107 = vmatprep.subr.mxu0 %v736
    %1108 = vmatpush1.msra.mxu0 %v735
    %1109 = vmatprep.subr.mxu0 %v732
    %1110 = vmatpush1.msra.mxu0 %v731
    %1111 = vmatprep.subr.mxu0 %v728
    %1112 = vmatpush1.msra.mxu0 %v727
    %1113 = vmatprep.subr.mxu0 %v724
    %1114 = vmatpush1.msra.mxu0 %v723
    %1115 = vmatprep.subr.mxu0 %v720
    %1116 = vmatpush1.msra.mxu0 %v719
    %1117 = vmatprep.subr.mxu0 %v716
    %1118 = vmatpush1.msra.mxu0 %v715
    %1119 = vmatprep.subr.mxu0 %v712
    %1120 = vmatpush1.msra.mxu0 %v711
    %1121 = vmatprep.subr.mxu0 %v708
    %1122 = vmatpush1.msra.mxu0 %v707
    %1123 = vmatprep.subr.mxu0 %v704
    %1124 = vmatpush1.msra.mxu0 %v703
    %1125 = vmatprep.subr.mxu0 %v700
    %1126 = vmatpush1.msra.mxu0 %v699
    %1127 = vmatprep.subr.mxu0 %v696
    %1128 = vmatpush1.msra.mxu0 %v695
    %1129 = vmatprep.subr.mxu0 %v692
    %1130 = vmatpush1.msra.mxu0 %v691
    %1131 = vmatprep.subr.mxu0 %v688
    %1132 = vmatpush1.msra.mxu0 %v687
    %1133 = vmatprep.subr.mxu0 %v684
    %1134 = vmatpush1.msra.mxu0 %v683
    %1135 = vmatprep.subr.mxu0 %v680
    %1136 = vmatpush1.msra.mxu0 %v679
    %1137 = vmatprep.subr.mxu0 %v676
    %1138 = vmatpush1.msra.mxu0 %v675
    %1139 = vmatprep.subr.mxu0 %v800
    %1140 = vmatpush2.msra.mxu0 %v799
    %1141 = vmatprep.subr.mxu0 %v796
    %1142 = vmatpush2.msra.mxu0 %v795
    %1143 = vmatprep.subr.mxu0 %v792
    %1144 = vmatpush2.msra.mxu0 %v791
    %1145 = vmatprep.subr.mxu0 %v788
    %1146 = vmatpush2.msra.mxu0 %v787
    %1147 = vmatprep.subr.mxu0 %v784
    %1148 = vmatpush2.msra.mxu0 %v783
    %1149 = vmatprep.subr.mxu0 %v780
    %1150 = vmatpush2.msra.mxu0 %v779
    %1151 = vmatprep.subr.mxu0 %v776
    %1152 = vmatpush2.msra.mxu0 %v775
    %1153 = vmatprep.subr.mxu0 %v772
    %1154 = vmatpush2.msra.mxu0 %v771
    %1155 = vmatprep.subr.mxu0 %v768
    %1156 = vmatpush2.msra.mxu0 %v767
    %1157 = vmatprep.subr.mxu0 %v764
    %1158 = vmatpush2.msra.mxu0 %v763
    %1159 = vmatprep.subr.mxu0 %v760
    %1160 = vmatpush2.msra.mxu0 %v759
    %1161 = vmatprep.subr.mxu0 %v756
    %1162 = vmatpush2.msra.mxu0 %v755
    %1163 = vmatprep.subr.mxu0 %v752
    %1164 = vmatpush2.msra.mxu0 %v751
    %1165 = vmatprep.subr.mxu0 %v748
    %1166 = vmatpush2.msra.mxu0 %v747
    %1167 = vmatprep.subr.mxu0 %v744
    %1168 = vmatpush2.msra.mxu0 %v743
    %1169 = vmatprep.subr.mxu0 %v740
    %1170 = vmatpush2.msra.mxu0 %v739
    %1171 = vmatprep.mubr.f32.mxu0 %v152
    %1172 = vmatmul.mubr.f32.gmra.mxu0 %v151
    %v1173 = vpop.f32.mrf.mxu0
    %v1174 = vadd.f32 %v1097, %v1173
    %v1175 = vpop.f32.mrf.mxu0
    %v1176 = vadd.f32 %v1099, %v1175
    %1177 = vmatprep.mubr.f32.mxu0 %v160
    %1178 = vmatmul.mubr.f32.gmra.mxu0 %v159
    %v1179 = vpop.f32.mrf.mxu0
    %v1180 = vadd.f32 %v1103, %v1179
    %v1181 = vpop.f32.mrf.mxu0
    %v1182 = vadd.f32 %v1105, %v1181
    %1183 = vdwg.mxu0
    %1184 = vmatprep.subr.mxu0 %v864
    %1185 = vmatpush1.msra.mxu0 %v863
    %1186 = vmatprep.subr.mxu0 %v860
    %1187 = vmatpush1.msra.mxu0 %v859
    %1188 = vmatprep.subr.mxu0 %v856
    %1189 = vmatpush1.msra.mxu0 %v855
    %1190 = vmatprep.subr.mxu0 %v852
    %1191 = vmatpush1.msra.mxu0 %v851
    %1192 = vmatprep.subr.mxu0 %v848
    %1193 = vmatpush1.msra.mxu0 %v847
    %1194 = vmatprep.subr.mxu0 %v844
    %1195 = vmatpush1.msra.mxu0 %v843
    %1196 = vmatprep.subr.mxu0 %v840
    %1197 = vmatpush1.msra.mxu0 %v839
    %1198 = vmatprep.subr.mxu0 %v836
    %1199 = vmatpush1.msra.mxu0 %v835
    %1200 = vmatprep.subr.mxu0 %v832
    %1201 = vmatpush1.msra.mxu0 %v831
    %1202 = vmatprep.subr.mxu0 %v828
    %1203 = vmatpush1.msra.mxu0 %v827
    %1204 = vmatprep.subr.mxu0 %v824
    %1205 = vmatpush1.msra.mxu0 %v823
    %1206 = vmatprep.subr.mxu0 %v820
    %1207 = vmatpush1.msra.mxu0 %v819
    %1208 = vmatprep.subr.mxu0 %v816
    %1209 = vmatpush1.msra.mxu0 %v815
    %1210 = vmatprep.subr.mxu0 %v812
    %1211 = vmatpush1.msra.mxu0 %v811
    %1212 = vmatprep.subr.mxu0 %v808
    %1213 = vmatpush1.msra.mxu0 %v807
    %1214 = vmatprep.subr.mxu0 %v804
    %1215 = vmatpush1.msra.mxu0 %v803
    %1216 = vmatprep.subr.mxu0 %v928
    %1217 = vmatpush2.msra.mxu0 %v927
    %1218 = vmatprep.subr.mxu0 %v924
    %1219 = vmatpush2.msra.mxu0 %v923
    %1220 = vmatprep.subr.mxu0 %v920
    %1221 = vmatpush2.msra.mxu0 %v919
    %1222 = vmatprep.subr.mxu0 %v916
    %1223 = vmatpush2.msra.mxu0 %v915
    %1224 = vmatprep.subr.mxu0 %v912
    %1225 = vmatpush2.msra.mxu0 %v911
    %1226 = vmatprep.subr.mxu0 %v908
    %1227 = vmatpush2.msra.mxu0 %v907
    %1228 = vmatprep.subr.mxu0 %v904
    %1229 = vmatpush2.msra.mxu0 %v903
    %1230 = vmatprep.subr.mxu0 %v900
    %1231 = vmatpush2.msra.mxu0 %v899
    %1232 = vmatprep.subr.mxu0 %v896
    %1233 = vmatpush2.msra.mxu0 %v895
    %1234 = vmatprep.subr.mxu0 %v892
    %1235 = vmatpush2.msra.mxu0 %v891
    %1236 = vmatprep.subr.mxu0 %v888
    %1237 = vmatpush2.msra.mxu0 %v887
    %1238 = vmatprep.subr.mxu0 %v884
    %1239 = vmatpush2.msra.mxu0 %v883
    %1240 = vmatprep.subr.mxu0 %v880
    %1241 = vmatpush2.msra.mxu0 %v879
    %1242 = vmatprep.subr.mxu0 %v876
    %1243 = vmatpush2.msra.mxu0 %v875
    %1244 = vmatprep.subr.mxu0 %v872
    %1245 = vmatpush2.msra.mxu0 %v871
    %1246 = vmatprep.subr.mxu0 %v868
    %1247 = vmatpush2.msra.mxu0 %v867
    %1248 = vmatprep.mubr.f32.mxu0 %v154
    %1249 = vmatmul.mubr.f32.gmra.mxu0 %v153
    %v1250 = vpop.f32.mrf.mxu0
    %v1251 = vadd.f32 %v1174, %v1250
    %v1252 = vpop.f32.mrf.mxu0
    %v1253 = vadd.f32 %v1176, %v1252
    %1254 = vmatprep.mubr.f32.mxu0 %v162
    %1255 = vmatmul.mubr.f32.gmra.mxu0 %v161
    %v1256 = vpop.f32.mrf.mxu0
    %v1257 = vadd.f32 %v1180, %v1256
    %v1258 = vpop.f32.mrf.mxu0
    %v1259 = vadd.f32 %v1182, %v1258
    %1260 = vdwg.mxu0
    %1261 = vmatprep.subr.mxu0 %v482
    %1262 = vmatpush1.msra.mxu0 %v481
    %1263 = vmatprep.subr.mxu0 %v478
    %1264 = vmatpush1.msra.mxu0 %v477
    %1265 = vmatprep.subr.mxu0 %v474
    %1266 = vmatpush1.msra.mxu0 %v473
    %1267 = vmatprep.subr.mxu0 %v470
    %1268 = vmatpush1.msra.mxu0 %v469
    %1269 = vmatprep.subr.mxu0 %v466
    %1270 = vmatpush1.msra.mxu0 %v465
    %1271 = vmatprep.subr.mxu0 %v462
    %1272 = vmatpush1.msra.mxu0 %v461
    %1273 = vmatprep.subr.mxu0 %v458
    %1274 = vmatpush1.msra.mxu0 %v457
    %1275 = vmatprep.subr.mxu0 %v454
    %1276 = vmatpush1.msra.mxu0 %v453
    %1277 = vmatprep.subr.mxu0 %v450
    %1278 = vmatpush1.msra.mxu0 %v449
    %1279 = vmatprep.subr.mxu0 %v446
    %1280 = vmatpush1.msra.mxu0 %v445
    %1281 = vmatprep.subr.mxu0 %v442
    %1282 = vmatpush1.msra.mxu0 %v441
    %1283 = vmatprep.subr.mxu0 %v438
    %1284 = vmatpush1.msra.mxu0 %v437
    %1285 = vmatprep.subr.mxu0 %v434
    %1286 = vmatpush1.msra.mxu0 %v433
    %1287 = vmatprep.subr.mxu0 %v430
    %1288 = vmatpush1.msra.mxu0 %v429
    %1289 = vmatprep.subr.mxu0 %v426
    %1290 = vmatpush1.msra.mxu0 %v425
    %1291 = vmatprep.subr.mxu0 %v422
    %1292 = vmatpush1.msra.mxu0 %v421
    %1293 = vmatprep.subr.mxu0 %v546
    %1294 = vmatpush2.msra.mxu0 %v545
    %1295 = vmatprep.subr.mxu0 %v542
    %1296 = vmatpush2.msra.mxu0 %v541
    %1297 = vmatprep.subr.mxu0 %v538
    %1298 = vmatpush2.msra.mxu0 %v537
    %1299 = vmatprep.subr.mxu0 %v534
    %1300 = vmatpush2.msra.mxu0 %v533
    %1301 = vmatprep.subr.mxu0 %v530
    %1302 = vmatpush2.msra.mxu0 %v529
    %1303 = vmatprep.subr.mxu0 %v526
    %1304 = vmatpush2.msra.mxu0 %v525
    %1305 = vmatprep.subr.mxu0 %v522
    %1306 = vmatpush2.msra.mxu0 %v521
    %1307 = vmatprep.subr.mxu0 %v518
    %1308 = vmatpush2.msra.mxu0 %v517
    %1309 = vmatprep.subr.mxu0 %v514
    %1310 = vmatpush2.msra.mxu0 %v513
    %1311 = vmatprep.subr.mxu0 %v510
    %1312 = vmatpush2.msra.mxu0 %v509
    %1313 = vmatprep.subr.mxu0 %v506
    %1314 = vmatpush2.msra.mxu0 %v505
    %1315 = vmatprep.subr.mxu0 %v502
    %1316 = vmatpush2.msra.mxu0 %v501
    %1317 = vmatprep.subr.mxu0 %v498
    %1318 = vmatpush2.msra.mxu0 %v497
    %1319 = vmatprep.subr.mxu0 %v494
    %1320 = vmatpush2.msra.mxu0 %v493
    %1321 = vmatprep.subr.mxu0 %v490
    %1322 = vmatpush2.msra.mxu0 %v489
    %1323 = vmatprep.subr.mxu0 %v486
    %1324 = vmatpush2.msra.mxu0 %v485
    %1325 = vmatprep.mubr.f32.mxu0 %v148
    %1326 = vmatmul.mubr.f32.gmra.mxu0 %v147
    %v1327 = vpop.f32.mrf.mxu0
    %v1328 = vadd.f32 %v944, %v1327
    %v1329 = vpop.f32.mrf.mxu0
    %v1330 = vadd.f32 %v948, %v1329
    %1331 = vmatprep.mubr.f32.mxu0 %v156
    %1332 = vmatmul.mubr.f32.gmra.mxu0 %v155
    %v1333 = vpop.f32.mrf.mxu0
    %v1334 = vadd.f32 %v944, %v1333
    %v1335 = vpop.f32.mrf.mxu0
    %v1336 = vadd.f32 %v948, %v1335
    %1337 = vdwg.mxu0
    %1338 = vmatprep.subr.mxu0 %v610
    %1339 = vmatpush1.msra.mxu0 %v609
    %1340 = vmatprep.subr.mxu0 %v606
    %1341 = vmatpush1.msra.mxu0 %v605
    %1342 = vmatprep.subr.mxu0 %v602
    %1343 = vmatpush1.msra.mxu0 %v601
    %1344 = vmatprep.subr.mxu0 %v598
    %1345 = vmatpush1.msra.mxu0 %v597
    %1346 = vmatprep.subr.mxu0 %v594
    %1347 = vmatpush1.msra.mxu0 %v593
    %1348 = vmatprep.subr.mxu0 %v590
    %1349 = vmatpush1.msra.mxu0 %v589
    %1350 = vmatprep.subr.mxu0 %v586
    %1351 = vmatpush1.msra.mxu0 %v585
    %1352 = vmatprep.subr.mxu0 %v582
    %1353 = vmatpush1.msra.mxu0 %v581
    %1354 = vmatprep.subr.mxu0 %v578
    %1355 = vmatpush1.msra.mxu0 %v577
    %1356 = vmatprep.subr.mxu0 %v574
    %1357 = vmatpush1.msra.mxu0 %v573
    %1358 = vmatprep.subr.mxu0 %v570
    %1359 = vmatpush1.msra.mxu0 %v569
    %1360 = vmatprep.subr.mxu0 %v566
    %1361 = vmatpush1.msra.mxu0 %v565
    %1362 = vmatprep.subr.mxu0 %v562
    %1363 = vmatpush1.msra.mxu0 %v561
    %1364 = vmatprep.subr.mxu0 %v558
    %1365 = vmatpush1.msra.mxu0 %v557
    %1366 = vmatprep.subr.mxu0 %v554
    %1367 = vmatpush1.msra.mxu0 %v553
    %1368 = vmatprep.subr.mxu0 %v550
    %1369 = vmatpush1.msra.mxu0 %v549
    %1370 = vmatprep.subr.mxu0 %v674
    %1371 = vmatpush2.msra.mxu0 %v673
    %1372 = vmatprep.subr.mxu0 %v670
    %1373 = vmatpush2.msra.mxu0 %v669
    %1374 = vmatprep.subr.mxu0 %v666
    %1375 = vmatpush2.msra.mxu0 %v665
    %1376 = vmatprep.subr.mxu0 %v662
    %1377 = vmatpush2.msra.mxu0 %v661
    %1378 = vmatprep.subr.mxu0 %v658
    %1379 = vmatpush2.msra.mxu0 %v657
    %1380 = vmatprep.subr.mxu0 %v654
    %1381 = vmatpush2.msra.mxu0 %v653
    %1382 = vmatprep.subr.mxu0 %v650
    %1383 = vmatpush2.msra.mxu0 %v649
    %1384 = vmatprep.subr.mxu0 %v646
    %1385 = vmatpush2.msra.mxu0 %v645
    %1386 = vmatprep.subr.mxu0 %v642
    %1387 = vmatpush2.msra.mxu0 %v641
    %1388 = vmatprep.subr.mxu0 %v638
    %1389 = vmatpush2.msra.mxu0 %v637
    %1390 = vmatprep.subr.mxu0 %v634
    %1391 = vmatpush2.msra.mxu0 %v633
    %1392 = vmatprep.subr.mxu0 %v630
    %1393 = vmatpush2.msra.mxu0 %v629
    %1394 = vmatprep.subr.mxu0 %v626
    %1395 = vmatpush2.msra.mxu0 %v625
    %1396 = vmatprep.subr.mxu0 %v622
    %1397 = vmatpush2.msra.mxu0 %v621
    %1398 = vmatprep.subr.mxu0 %v618
    %1399 = vmatpush2.msra.mxu0 %v617
    %1400 = vmatprep.subr.mxu0 %v614
    %1401 = vmatpush2.msra.mxu0 %v613
    %1402 = vmatprep.mubr.f32.mxu0 %v150
    %1403 = vmatmul.mubr.f32.gmra.mxu0 %v149
    %v1404 = vpop.f32.mrf.mxu0
    %v1405 = vadd.f32 %v1328, %v1404
    %v1406 = vpop.f32.mrf.mxu0
    %v1407 = vadd.f32 %v1330, %v1406
    %1408 = vmatprep.mubr.f32.mxu0 %v158
    %1409 = vmatmul.mubr.f32.gmra.mxu0 %v157
    %v1410 = vpop.f32.mrf.mxu0
    %v1411 = vadd.f32 %v1334, %v1410
    %v1412 = vpop.f32.mrf.mxu0
    %v1413 = vadd.f32 %v1336, %v1412
    %1414 = vdwg.mxu0
    %1415 = vmatprep.subr.mxu0 %v738
    %1416 = vmatpush1.msra.mxu0 %v737
    %1417 = vmatprep.subr.mxu0 %v734
    %1418 = vmatpush1.msra.mxu0 %v733
    %1419 = vmatprep.subr.mxu0 %v730
    %1420 = vmatpush1.msra.mxu0 %v729
    %1421 = vmatprep.subr.mxu0 %v726
    %1422 = vmatpush1.msra.mxu0 %v725
    %1423 = vmatprep.subr.mxu0 %v722
    %1424 = vmatpush1.msra.mxu0 %v721
    %1425 = vmatprep.subr.mxu0 %v718
    %1426 = vmatpush1.msra.mxu0 %v717
    %1427 = vmatprep.subr.mxu0 %v714
    %1428 = vmatpush1.msra.mxu0 %v713
    %1429 = vmatprep.subr.mxu0 %v710
    %1430 = vmatpush1.msra.mxu0 %v709
    %1431 = vmatprep.subr.mxu0 %v706
    %1432 = vmatpush1.msra.mxu0 %v705
    %1433 = vmatprep.subr.mxu0 %v702
    %1434 = vmatpush1.msra.mxu0 %v701
    %1435 = vmatprep.subr.mxu0 %v698
    %1436 = vmatpush1.msra.mxu0 %v697
    %1437 = vmatprep.subr.mxu0 %v694
    %1438 = vmatpush1.msra.mxu0 %v693
    %1439 = vmatprep.subr.mxu0 %v690
    %1440 = vmatpush1.msra.mxu0 %v689
    %1441 = vmatprep.subr.mxu0 %v686
    %1442 = vmatpush1.msra.mxu0 %v685
    %1443 = vmatprep.subr.mxu0 %v682
    %1444 = vmatpush1.msra.mxu0 %v681
    %1445 = vmatprep.subr.mxu0 %v678
    %1446 = vmatpush1.msra.mxu0 %v677
    %1447 = vmatprep.subr.mxu0 %v802
    %1448 = vmatpush2.msra.mxu0 %v801
    %1449 = vmatprep.subr.mxu0 %v798
    %1450 = vmatpush2.msra.mxu0 %v797
    %1451 = vmatprep.subr.mxu0 %v794
    %1452 = vmatpush2.msra.mxu0 %v793
    %1453 = vmatprep.subr.mxu0 %v790
    %1454 = vmatpush2.msra.mxu0 %v789
    %1455 = vmatprep.subr.mxu0 %v786
    %1456 = vmatpush2.msra.mxu0 %v785
    %1457 = vmatprep.subr.mxu0 %v782
    %1458 = vmatpush2.msra.mxu0 %v781
    %1459 = vmatprep.subr.mxu0 %v778
    %1460 = vmatpush2.msra.mxu0 %v777
    %1461 = vmatprep.subr.mxu0 %v774
    %1462 = vmatpush2.msra.mxu0 %v773
    %1463 = vmatprep.subr.mxu0 %v770
    %1464 = vmatpush2.msra.mxu0 %v769
    %1465 = vmatprep.subr.mxu0 %v766
    %1466 = vmatpush2.msra.mxu0 %v765
    %1467 = vmatprep.subr.mxu0 %v762
    %1468 = vmatpush2.msra.mxu0 %v761
    %1469 = vmatprep.subr.mxu0 %v758
    %1470 = vmatpush2.msra.mxu0 %v757
    %1471 = vmatprep.subr.mxu0 %v754
    %1472 = vmatpush2.msra.mxu0 %v753
    %1473 = vmatprep.subr.mxu0 %v750
    %1474 = vmatpush2.msra.mxu0 %v749
    %1475 = vmatprep.subr.mxu0 %v746
    %1476 = vmatpush2.msra.mxu0 %v745
    %1477 = vmatprep.subr.mxu0 %v742
    %1478 = vmatpush2.msra.mxu0 %v741
    %1479 = vmatprep.mubr.f32.mxu0 %v152
    %1480 = vmatmul.mubr.f32.gmra.mxu0 %v151
    %v1481 = vpop.f32.mrf.mxu0
    %v1482 = vadd.f32 %v1405, %v1481
    %v1483 = vpop.f32.mrf.mxu0
    %v1484 = vadd.f32 %v1407, %v1483
    %1485 = vmatprep.mubr.f32.mxu0 %v160
    %1486 = vmatmul.mubr.f32.gmra.mxu0 %v159
    %v1487 = vpop.f32.mrf.mxu0
    %v1488 = vadd.f32 %v1411, %v1487
    %v1489 = vpop.f32.mrf.mxu0
    %v1490 = vadd.f32 %v1413, %v1489
    %1491 = vdwg.mxu0
    %1492 = vmatprep.subr.mxu0 %v866
    %1493 = vmatpush1.msra.mxu0 %v865
    %1494 = vmatprep.subr.mxu0 %v862
    %1495 = vmatpush1.msra.mxu0 %v861
    %1496 = vmatprep.subr.mxu0 %v858
    %1497 = vmatpush1.msra.mxu0 %v857
    %1498 = vmatprep.subr.mxu0 %v854
    %1499 = vmatpush1.msra.mxu0 %v853
    %1500 = vmatprep.subr.mxu0 %v850
    %1501 = vmatpush1.msra.mxu0 %v849
    %1502 = vmatprep.subr.mxu0 %v846
    %1503 = vmatpush1.msra.mxu0 %v845
    %1504 = vmatprep.subr.mxu0 %v842
    %1505 = vmatpush1.msra.mxu0 %v841
    %1506 = vmatprep.subr.mxu0 %v838
    %1507 = vmatpush1.msra.mxu0 %v837
    %1508 = vmatprep.subr.mxu0 %v834
    %1509 = vmatpush1.msra.mxu0 %v833
    %1510 = vmatprep.subr.mxu0 %v830
    %1511 = vmatpush1.msra.mxu0 %v829
    %1512 = vmatprep.subr.mxu0 %v826
    %1513 = vmatpush1.msra.mxu0 %v825
    %1514 = vmatprep.subr.mxu0 %v822
    %1515 = vmatpush1.msra.mxu0 %v821
    %1516 = vmatprep.subr.mxu0 %v818
    %1517 = vmatpush1.msra.mxu0 %v817
    %1518 = vmatprep.subr.mxu0 %v814
    %1519 = vmatpush1.msra.mxu0 %v813
    %1520 = vmatprep.subr.mxu0 %v810
    %1521 = vmatpush1.msra.mxu0 %v809
    %1522 = vmatprep.subr.mxu0 %v806
    %1523 = vmatpush1.msra.mxu0 %v805
    %1524 = vmatprep.subr.mxu0 %v930
    %1525 = vmatpush2.msra.mxu0 %v929
    %1526 = vmatprep.subr.mxu0 %v926
    %1527 = vmatpush2.msra.mxu0 %v925
    %1528 = vmatprep.subr.mxu0 %v922
    %1529 = vmatpush2.msra.mxu0 %v921
    %1530 = vmatprep.subr.mxu0 %v918
    %1531 = vmatpush2.msra.mxu0 %v917
    %1532 = vmatprep.subr.mxu0 %v914
    %1533 = vmatpush2.msra.mxu0 %v913
    %1534 = vmatprep.subr.mxu0 %v910
    %1535 = vmatpush2.msra.mxu0 %v909
    %1536 = vmatprep.subr.mxu0 %v906
    %1537 = vmatpush2.msra.mxu0 %v905
    %1538 = vmatprep.subr.mxu0 %v902
    %1539 = vmatpush2.msra.mxu0 %v901
    %1540 = vmatprep.subr.mxu0 %v898
    %1541 = vmatpush2.msra.mxu0 %v897
    %1542 = vmatprep.subr.mxu0 %v894
    %1543 = vmatpush2.msra.mxu0 %v893
    %1544 = vmatprep.subr.mxu0 %v890
    %1545 = vmatpush2.msra.mxu0 %v889
    %1546 = vmatprep.subr.mxu0 %v886
    %1547 = vmatpush2.msra.mxu0 %v885
    %1548 = vmatprep.subr.mxu0 %v882
    %1549 = vmatpush2.msra.mxu0 %v881
    %1550 = vmatprep.subr.mxu0 %v878
    %1551 = vmatpush2.msra.mxu0 %v877
    %1552 = vmatprep.subr.mxu0 %v874
    %1553 = vmatpush2.msra.mxu0 %v873
    %1554 = vmatprep.subr.mxu0 %v870
    %1555 = vmatpush2.msra.mxu0 %v869
    %1556 = vmatprep.mubr.f32.mxu0 %v154
    %1557 = vmatmul.mubr.f32.gmra.mxu0 %v153
    %v1558 = vpop.f32.mrf.mxu0
    %v1559 = vadd.f32 %v1482, %v1558
    %v1560 = vpop.f32.mrf.mxu0
    %v1561 = vadd.f32 %v1484, %v1560
    %1562 = vmatprep.mubr.f32.mxu0 %v162
    %1563 = vmatmul.mubr.f32.gmra.mxu0 %v161
    %v1564 = vpop.f32.mrf.mxu0
    %v1565 = vadd.f32 %v1488, %v1564
    %v1566 = vpop.f32.mrf.mxu0
    %v1567 = vadd.f32 %v1490, %v1566
    %1568 = vdwg.mxu0
    %v1569 = vmax.f32 %v1251, 0.0
    %v1570 = vmax.f32 %v1253, 0.0
    %v1571 = vmax.f32 %v1559, 0.0
    %v1572 = vmax.f32 %v1561, 0.0
    %v1573 = vmax.f32 %v1257, 0.0
    %v1574 = vmax.f32 %v1259, 0.0
    %v1575 = vmax.f32 %v1565, 0.0
    %v1576 = vmax.f32 %v1567, 0.0
    %v1577 = vld [vmem:[#allocation10] sm:$0xff]
    %v1578 = vld [vmem:[#allocation10 + $0x8] sm:$0xff]
    %v1579 = vld [vmem:[#allocation10 + $0x10] sm:$0xff]
    %v1580 = vld [vmem:[#allocation10 + $0x18] sm:$0xff]
    %v1581 = vld [vmem:[#allocation10 + $0x20] sm:$0xff]
    %v1582 = vld [vmem:[#allocation10 + $0x28] sm:$0xff]
    %v1583 = vld [vmem:[#allocation10 + $0x30] sm:$0xff]
    %v1584 = vld [vmem:[#allocation10 + $0x38] sm:$0xff]
    %v1585 = vld [vmem:[#allocation10 + $0x40] sm:$0xff]
    %v1586 = vld [vmem:[#allocation10 + $0x48] sm:$0xff]
    %v1587 = vld [vmem:[#allocation10 + $0x50] sm:$0xff]
    %v1588 = vld [vmem:[#allocation10 + $0x58] sm:$0xff]
    %v1589 = vld [vmem:[#allocation10 + $0x60] sm:$0xff]
    %v1590 = vld [vmem:[#allocation10 + $0x68] sm:$0xff]
    %v1591 = vld [vmem:[#allocation10 + $0x70] sm:$0xff]
    %v1592 = vld [vmem:[#allocation10 + $0x78] sm:$0xff]
    %v1593 = vld [vmem:[#allocation10 + $0x80] sm:$0xff]
    %v1594 = vld [vmem:[#allocation10 + $0x88] sm:$0xff]
    %v1595 = vld [vmem:[#allocation10 + $0x90] sm:$0xff]
    %v1596 = vld [vmem:[#allocation10 + $0x98] sm:$0xff]
    %v1597 = vld [vmem:[#allocation10 + $0xa0] sm:$0xff]
    %v1598 = vld [vmem:[#allocation10 + $0xa8] sm:$0xff]
    %v1599 = vld [vmem:[#allocation10 + $0xb0] sm:$0xff]
    %v1600 = vld [vmem:[#allocation10 + $0xb8] sm:$0xff]
    %v1601 = vld [vmem:[#allocation10 + $0xc0] sm:$0xff]
    %v1602 = vld [vmem:[#allocation10 + $0xc8] sm:$0xff]
    %v1603 = vld [vmem:[#allocation10 + $0xd0] sm:$0xff]
    %v1604 = vld [vmem:[#allocation10 + $0xd8] sm:$0xff]
    %v1605 = vld [vmem:[#allocation10 + $0xe0] sm:$0xff]
    %v1606 = vld [vmem:[#allocation10 + $0xe8] sm:$0xff]
    %v1607 = vld [vmem:[#allocation10 + $0xf0] sm:$0xff]
    %v1608 = vld [vmem:[#allocation10 + $0xf8] sm:$0xff]
    %v1609 = vld [vmem:[#allocation10 + $0x100] sm:$0xff]
    %v1610 = vld [vmem:[#allocation10 + $0x108] sm:$0xff]
    %v1611 = vld [vmem:[#allocation10 + $0x110] sm:$0xff]
    %v1612 = vld [vmem:[#allocation10 + $0x118] sm:$0xff]
    %v1613 = vld [vmem:[#allocation10 + $0x120] sm:$0xff]
    %v1614 = vld [vmem:[#allocation10 + $0x128] sm:$0xff]
    %v1615 = vld [vmem:[#allocation10 + $0x130] sm:$0xff]
    %v1616 = vld [vmem:[#allocation10 + $0x138] sm:$0xff]
    %v1617 = vld [vmem:[#allocation10 + $0x140] sm:$0xff]
    %v1618 = vld [vmem:[#allocation10 + $0x148] sm:$0xff]
    %v1619 = vld [vmem:[#allocation10 + $0x150] sm:$0xff]
    %v1620 = vld [vmem:[#allocation10 + $0x158] sm:$0xff]
    %v1621 = vld [vmem:[#allocation10 + $0x160] sm:$0xff]
    %v1622 = vld [vmem:[#allocation10 + $0x168] sm:$0xff]
    %v1623 = vld [vmem:[#allocation10 + $0x170] sm:$0xff]
    %v1624 = vld [vmem:[#allocation10 + $0x178] sm:$0xff]
    %v1625 = vld [vmem:[#allocation10 + $0x180] sm:$0xff]
    %v1626 = vld [vmem:[#allocation10 + $0x188] sm:$0xff]
    %v1627 = vld [vmem:[#allocation10 + $0x190] sm:$0xff]
    %v1628 = vld [vmem:[#allocation10 + $0x198] sm:$0xff]
    %v1629 = vld [vmem:[#allocation10 + $0x1a0] sm:$0xff]
    %v1630 = vld [vmem:[#allocation10 + $0x1a8] sm:$0xff]
    %v1631 = vld [vmem:[#allocation10 + $0x1b0] sm:$0xff]
    %v1632 = vld [vmem:[#allocation10 + $0x1b8] sm:$0xff]
    %v1633 = vld [vmem:[#allocation10 + $0x1c0] sm:$0xff]
    %v1634 = vld [vmem:[#allocation10 + $0x1c8] sm:$0xff]
    %v1635 = vld [vmem:[#allocation10 + $0x1d0] sm:$0xff]
    %v1636 = vld [vmem:[#allocation10 + $0x1d8] sm:$0xff]
    %v1637 = vld [vmem:[#allocation10 + $0x1e0] sm:$0xff]
    %v1638 = vld [vmem:[#allocation10 + $0x1e8] sm:$0xff]
    %v1639 = vld [vmem:[#allocation10 + $0x1f0] sm:$0xff]
    %v1640 = vld [vmem:[#allocation10 + $0x1f8] sm:$0xff]
    %v1641 = vunpack.c.l.bf16 %v1577
    %v1642 = vunpack.c.h.bf16 %v1577
    %v1643 = vunpack.c.l.bf16 %v1578
    %v1644 = vunpack.c.h.bf16 %v1578
    %v1645 = vunpack.c.l.bf16 %v1579
    %v1646 = vunpack.c.h.bf16 %v1579
    %v1647 = vunpack.c.l.bf16 %v1580
    %v1648 = vunpack.c.h.bf16 %v1580
    %v1649 = vunpack.c.l.bf16 %v1581
    %v1650 = vunpack.c.h.bf16 %v1581
    %v1651 = vunpack.c.l.bf16 %v1582
    %v1652 = vunpack.c.h.bf16 %v1582
    %v1653 = vunpack.c.l.bf16 %v1583
    %v1654 = vunpack.c.h.bf16 %v1583
    %v1655 = vunpack.c.l.bf16 %v1584
    %v1656 = vunpack.c.h.bf16 %v1584
    %v1657 = vunpack.c.l.bf16 %v1585
    %v1658 = vunpack.c.h.bf16 %v1585
    %v1659 = vunpack.c.l.bf16 %v1586
    %v1660 = vunpack.c.h.bf16 %v1586
    %v1661 = vunpack.c.l.bf16 %v1587
    %v1662 = vunpack.c.h.bf16 %v1587
    %v1663 = vunpack.c.l.bf16 %v1588
    %v1664 = vunpack.c.h.bf16 %v1588
    %v1665 = vunpack.c.l.bf16 %v1589
    %v1666 = vunpack.c.h.bf16 %v1589
    %v1667 = vunpack.c.l.bf16 %v1590
    %v1668 = vunpack.c.h.bf16 %v1590
    %v1669 = vunpack.c.l.bf16 %v1591
    %v1670 = vunpack.c.h.bf16 %v1591
    %v1671 = vunpack.c.l.bf16 %v1592
    %v1672 = vunpack.c.h.bf16 %v1592
    %v1673 = vunpack.c.l.bf16 %v1593
    %v1674 = vunpack.c.h.bf16 %v1593
    %v1675 = vunpack.c.l.bf16 %v1594
    %v1676 = vunpack.c.h.bf16 %v1594
    %v1677 = vunpack.c.l.bf16 %v1595
    %v1678 = vunpack.c.h.bf16 %v1595
    %v1679 = vunpack.c.l.bf16 %v1596
    %v1680 = vunpack.c.h.bf16 %v1596
    %v1681 = vunpack.c.l.bf16 %v1597
    %v1682 = vunpack.c.h.bf16 %v1597
    %v1683 = vunpack.c.l.bf16 %v1598
    %v1684 = vunpack.c.h.bf16 %v1598
    %v1685 = vunpack.c.l.bf16 %v1599
    %v1686 = vunpack.c.h.bf16 %v1599
    %v1687 = vunpack.c.l.bf16 %v1600
    %v1688 = vunpack.c.h.bf16 %v1600
    %v1689 = vunpack.c.l.bf16 %v1601
    %v1690 = vunpack.c.h.bf16 %v1601
    %v1691 = vunpack.c.l.bf16 %v1602
    %v1692 = vunpack.c.h.bf16 %v1602
    %v1693 = vunpack.c.l.bf16 %v1603
    %v1694 = vunpack.c.h.bf16 %v1603
    %v1695 = vunpack.c.l.bf16 %v1604
    %v1696 = vunpack.c.h.bf16 %v1604
    %v1697 = vunpack.c.l.bf16 %v1605
    %v1698 = vunpack.c.h.bf16 %v1605
    %v1699 = vunpack.c.l.bf16 %v1606
    %v1700 = vunpack.c.h.bf16 %v1606
    %v1701 = vunpack.c.l.bf16 %v1607
    %v1702 = vunpack.c.h.bf16 %v1607
    %v1703 = vunpack.c.l.bf16 %v1608
    %v1704 = vunpack.c.h.bf16 %v1608
    %v1705 = vunpack.c.l.bf16 %v1609
    %v1706 = vunpack.c.h.bf16 %v1609
    %v1707 = vunpack.c.l.bf16 %v1610
    %v1708 = vunpack.c.h.bf16 %v1610
    %v1709 = vunpack.c.l.bf16 %v1611
    %v1710 = vunpack.c.h.bf16 %v1611
    %v1711 = vunpack.c.l.bf16 %v1612
    %v1712 = vunpack.c.h.bf16 %v1612
    %v1713 = vunpack.c.l.bf16 %v1613
    %v1714 = vunpack.c.h.bf16 %v1613
    %v1715 = vunpack.c.l.bf16 %v1614
    %v1716 = vunpack.c.h.bf16 %v1614
    %v1717 = vunpack.c.l.bf16 %v1615
    %v1718 = vunpack.c.h.bf16 %v1615
    %v1719 = vunpack.c.l.bf16 %v1616
    %v1720 = vunpack.c.h.bf16 %v1616
    %v1721 = vunpack.c.l.bf16 %v1617
    %v1722 = vunpack.c.h.bf16 %v1617
    %v1723 = vunpack.c.l.bf16 %v1618
    %v1724 = vunpack.c.h.bf16 %v1618
    %v1725 = vunpack.c.l.bf16 %v1619
    %v1726 = vunpack.c.h.bf16 %v1619
    %v1727 = vunpack.c.l.bf16 %v1620
    %v1728 = vunpack.c.h.bf16 %v1620
    %v1729 = vunpack.c.l.bf16 %v1621
    %v1730 = vunpack.c.h.bf16 %v1621
    %v1731 = vunpack.c.l.bf16 %v1622
    %v1732 = vunpack.c.h.bf16 %v1622
    %v1733 = vunpack.c.l.bf16 %v1623
    %v1734 = vunpack.c.h.bf16 %v1623
    %v1735 = vunpack.c.l.bf16 %v1624
    %v1736 = vunpack.c.h.bf16 %v1624
    %v1737 = vunpack.c.l.bf16 %v1625
    %v1738 = vunpack.c.h.bf16 %v1625
    %v1739 = vunpack.c.l.bf16 %v1626
    %v1740 = vunpack.c.h.bf16 %v1626
    %v1741 = vunpack.c.l.bf16 %v1627
    %v1742 = vunpack.c.h.bf16 %v1627
    %v1743 = vunpack.c.l.bf16 %v1628
    %v1744 = vunpack.c.h.bf16 %v1628
    %v1745 = vunpack.c.l.bf16 %v1629
    %v1746 = vunpack.c.h.bf16 %v1629
    %v1747 = vunpack.c.l.bf16 %v1630
    %v1748 = vunpack.c.h.bf16 %v1630
    %v1749 = vunpack.c.l.bf16 %v1631
    %v1750 = vunpack.c.h.bf16 %v1631
    %v1751 = vunpack.c.l.bf16 %v1632
    %v1752 = vunpack.c.h.bf16 %v1632
    %v1753 = vunpack.c.l.bf16 %v1633
    %v1754 = vunpack.c.h.bf16 %v1633
    %v1755 = vunpack.c.l.bf16 %v1634
    %v1756 = vunpack.c.h.bf16 %v1634
    %v1757 = vunpack.c.l.bf16 %v1635
    %v1758 = vunpack.c.h.bf16 %v1635
    %v1759 = vunpack.c.l.bf16 %v1636
    %v1760 = vunpack.c.h.bf16 %v1636
    %v1761 = vunpack.c.l.bf16 %v1637
    %v1762 = vunpack.c.h.bf16 %v1637
    %v1763 = vunpack.c.l.bf16 %v1638
    %v1764 = vunpack.c.h.bf16 %v1638
    %v1765 = vunpack.c.l.bf16 %v1639
    %v1766 = vunpack.c.h.bf16 %v1639
    %v1767 = vunpack.c.l.bf16 %v1640
    %v1768 = vunpack.c.h.bf16 %v1640
    %v1769 = vld [vmem:[#allocation12] sm:$0x3]
    %v1771 = vlaneseq
    %v1772 = vshrl.u32 %v1771, 7
    %v1773 = vsub.s32 0, %v1772
    %v1774 = vrot.slane %v1769, %v1773
    %v1775 = vlaneseq
    %v1776 = vshrl.u32 %v1775, 7
    %v1777 = vsub.s32 1, %v1776
    %v1778 = vrot.slane %v1769, %v1777
    %1781 = vmatprep.subr.mxu0 %v1672
    %1782 = vmatpush1.msra.mxu0 %v1671
    %1783 = vmatprep.subr.mxu0 %v1670
    %1784 = vmatpush1.msra.mxu0 %v1669
    %1785 = vmatprep.subr.mxu0 %v1668
    %1786 = vmatpush1.msra.mxu0 %v1667
    %1787 = vmatprep.subr.mxu0 %v1666
    %1788 = vmatpush1.msra.mxu0 %v1665
    %1789 = vmatprep.subr.mxu0 %v1664
    %1790 = vmatpush1.msra.mxu0 %v1663
    %1791 = vmatprep.subr.mxu0 %v1662
    %1792 = vmatpush1.msra.mxu0 %v1661
    %1793 = vmatprep.subr.mxu0 %v1660
    %1794 = vmatpush1.msra.mxu0 %v1659
    %1795 = vmatprep.subr.mxu0 %v1658
    %1796 = vmatpush1.msra.mxu0 %v1657
    %1797 = vmatprep.subr.mxu0 %v1656
    %1798 = vmatpush1.msra.mxu0 %v1655
    %1799 = vmatprep.subr.mxu0 %v1654
    %1800 = vmatpush1.msra.mxu0 %v1653
    %1801 = vmatprep.subr.mxu0 %v1652
    %1802 = vmatpush1.msra.mxu0 %v1651
    %1803 = vmatprep.subr.mxu0 %v1650
    %1804 = vmatpush1.msra.mxu0 %v1649
    %1805 = vmatprep.subr.mxu0 %v1648
    %1806 = vmatpush1.msra.mxu0 %v1647
    %1807 = vmatprep.subr.mxu0 %v1646
    %1808 = vmatpush1.msra.mxu0 %v1645
    %1809 = vmatprep.subr.mxu0 %v1644
    %1810 = vmatpush1.msra.mxu0 %v1643
    %1811 = vmatprep.subr.mxu0 %v1642
    %1812 = vmatpush1.msra.mxu0 %v1641
    %1813 = vmatprep.subr.mxu0 %v1704
    %1814 = vmatpush2.msra.mxu0 %v1703
    %1815 = vmatprep.subr.mxu0 %v1702
    %1816 = vmatpush2.msra.mxu0 %v1701
    %1817 = vmatprep.subr.mxu0 %v1700
    %1818 = vmatpush2.msra.mxu0 %v1699
    %1819 = vmatprep.subr.mxu0 %v1698
    %1820 = vmatpush2.msra.mxu0 %v1697
    %1821 = vmatprep.subr.mxu0 %v1696
    %1822 = vmatpush2.msra.mxu0 %v1695
    %1823 = vmatprep.subr.mxu0 %v1694
    %1824 = vmatpush2.msra.mxu0 %v1693
    %1825 = vmatprep.subr.mxu0 %v1692
    %1826 = vmatpush2.msra.mxu0 %v1691
    %1827 = vmatprep.subr.mxu0 %v1690
    %1828 = vmatpush2.msra.mxu0 %v1689
    %1829 = vmatprep.subr.mxu0 %v1688
    %1830 = vmatpush2.msra.mxu0 %v1687
    %1831 = vmatprep.subr.mxu0 %v1686
    %1832 = vmatpush2.msra.mxu0 %v1685
    %1833 = vmatprep.subr.mxu0 %v1684
    %1834 = vmatpush2.msra.mxu0 %v1683
    %1835 = vmatprep.subr.mxu0 %v1682
    %1836 = vmatpush2.msra.mxu0 %v1681
    %1837 = vmatprep.subr.mxu0 %v1680
    %1838 = vmatpush2.msra.mxu0 %v1679
    %1839 = vmatprep.subr.mxu0 %v1678
    %1840 = vmatpush2.msra.mxu0 %v1677
    %1841 = vmatprep.subr.mxu0 %v1676
    %1842 = vmatpush2.msra.mxu0 %v1675
    %1843 = vmatprep.subr.mxu0 %v1674
    %1844 = vmatpush2.msra.mxu0 %v1673
    %1845 = vmatprep.mubr.f32.mxu0 %v1570
    %1846 = vmatmul.mubr.f32.gmra.mxu0 %v1569
    %v1847 = vpop.f32.mrf.mxu0
    %v1848 = vadd.f32 %v1774, %v1847
    %v1849 = vpop.f32.mrf.mxu0
    %v1850 = vadd.f32 %v1778, %v1849
    %1851 = vmatprep.mubr.f32.mxu0 %v1574
    %1852 = vmatmul.mubr.f32.gmra.mxu0 %v1573
    %v1853 = vpop.f32.mrf.mxu0
    %v1854 = vadd.f32 %v1774, %v1853
    %v1855 = vpop.f32.mrf.mxu0
    %v1856 = vadd.f32 %v1778, %v1855
    %1857 = vdwg.mxu0
    %1858 = vmatprep.subr.mxu0 %v1736
    %1859 = vmatpush1.msra.mxu0 %v1735
    %1860 = vmatprep.subr.mxu0 %v1734
    %1861 = vmatpush1.msra.mxu0 %v1733
    %1862 = vmatprep.subr.mxu0 %v1732
    %1863 = vmatpush1.msra.mxu0 %v1731
    %1864 = vmatprep.subr.mxu0 %v1730
    %1865 = vmatpush1.msra.mxu0 %v1729
    %1866 = vmatprep.subr.mxu0 %v1728
    %1867 = vmatpush1.msra.mxu0 %v1727
    %1868 = vmatprep.subr.mxu0 %v1726
    %1869 = vmatpush1.msra.mxu0 %v1725
    %1870 = vmatprep.subr.mxu0 %v1724
    %1871 = vmatpush1.msra.mxu0 %v1723
    %1872 = vmatprep.subr.mxu0 %v1722
    %1873 = vmatpush1.msra.mxu0 %v1721
    %1874 = vmatprep.subr.mxu0 %v1720
    %1875 = vmatpush1.msra.mxu0 %v1719
    %1876 = vmatprep.subr.mxu0 %v1718
    %1877 = vmatpush1.msra.mxu0 %v1717
    %1878 = vmatprep.subr.mxu0 %v1716
    %1879 = vmatpush1.msra.mxu0 %v1715
    %1880 = vmatprep.subr.mxu0 %v1714
    %1881 = vmatpush1.msra.mxu0 %v1713
    %1882 = vmatprep.subr.mxu0 %v1712
    %1883 = vmatpush1.msra.mxu0 %v1711
    %1884 = vmatprep.subr.mxu0 %v1710
    %1885 = vmatpush1.msra.mxu0 %v1709
    %1886 = vmatprep.subr.mxu0 %v1708
    %1887 = vmatpush1.msra.mxu0 %v1707
    %1888 = vmatprep.subr.mxu0 %v1706
    %1889 = vmatpush1.msra.mxu0 %v1705
    %1890 = vmatprep.subr.mxu0 %v1768
    %1891 = vmatpush2.msra.mxu0 %v1767
    %1892 = vmatprep.subr.mxu0 %v1766
    %1893 = vmatpush2.msra.mxu0 %v1765
    %1894 = vmatprep.subr.mxu0 %v1764
    %1895 = vmatpush2.msra.mxu0 %v1763
    %1896 = vmatprep.subr.mxu0 %v1762
    %1897 = vmatpush2.msra.mxu0 %v1761
    %1898 = vmatprep.subr.mxu0 %v1760
    %1899 = vmatpush2.msra.mxu0 %v1759
    %1900 = vmatprep.subr.mxu0 %v1758
    %1901 = vmatpush2.msra.mxu0 %v1757
    %1902 = vmatprep.subr.mxu0 %v1756
    %1903 = vmatpush2.msra.mxu0 %v1755
    %1904 = vmatprep.subr.mxu0 %v1754
    %1905 = vmatpush2.msra.mxu0 %v1753
    %1906 = vmatprep.subr.mxu0 %v1752
    %1907 = vmatpush2.msra.mxu0 %v1751
    %1908 = vmatprep.subr.mxu0 %v1750
    %1909 = vmatpush2.msra.mxu0 %v1749
    %1910 = vmatprep.subr.mxu0 %v1748
    %1911 = vmatpush2.msra.mxu0 %v1747
    %1912 = vmatprep.subr.mxu0 %v1746
    %1913 = vmatpush2.msra.mxu0 %v1745
    %1914 = vmatprep.subr.mxu0 %v1744
    %1915 = vmatpush2.msra.mxu0 %v1743
    %1916 = vmatprep.subr.mxu0 %v1742
    %1917 = vmatpush2.msra.mxu0 %v1741
    %1918 = vmatprep.subr.mxu0 %v1740
    %1919 = vmatpush2.msra.mxu0 %v1739
    %1920 = vmatprep.subr.mxu0 %v1738
    %1921 = vmatpush2.msra.mxu0 %v1737
    %1922 = vmatprep.mubr.f32.mxu0 %v1572
    %1923 = vmatmul.mubr.f32.gmra.mxu0 %v1571
    %v1924 = vpop.f32.mrf.mxu0
    %v1925 = vadd.f32 %v1848, %v1924
    %v1926 = vpop.f32.mrf.mxu0
    %v1927 = vadd.f32 %v1850, %v1926
    %1928 = vmatprep.mubr.f32.mxu0 %v1576
    %1929 = vmatmul.mubr.f32.gmra.mxu0 %v1575
    %v1930 = vpop.f32.mrf.mxu0
    %v1931 = vadd.f32 %v1854, %v1930
    %v1932 = vpop.f32.mrf.mxu0
    %v1933 = vadd.f32 %v1856, %v1932
    %1934 = vdwg.mxu0
    %v1935 = vmax.f32 %v1925, 0.0
    %v1936 = vmax.f32 %v1927, 0.0
    %v1937 = vmax.f32 %v1931, 0.0
    %v1938 = vmax.f32 %v1933, 0.0
    %v1939 = vld [vmem:[#allocation13] sm:$0xf]
    %v1940 = vld [vmem:[#allocation13 + $0x4] sm:$0xf]
    %v1941 = vld [vmem:[#allocation13 + $0x8] sm:$0xf]
    %v1942 = vld [vmem:[#allocation13 + $0xc] sm:$0xf]
    %v1943 = vld [vmem:[#allocation13 + $0x10] sm:$0xf]
    %v1944 = vld [vmem:[#allocation13 + $0x14] sm:$0xf]
    %v1945 = vld [vmem:[#allocation13 + $0x18] sm:$0xf]
    %v1946 = vld [vmem:[#allocation13 + $0x1c] sm:$0xf]
    %v1947 = vld [vmem:[#allocation13 + $0x20] sm:$0xf]
    %v1948 = vld [vmem:[#allocation13 + $0x24] sm:$0xf]
    %v1949 = vld [vmem:[#allocation13 + $0x28] sm:$0xf]
    %v1950 = vld [vmem:[#allocation13 + $0x2c] sm:$0xf]
    %v1951 = vld [vmem:[#allocation13 + $0x30] sm:$0xf]
    %v1952 = vld [vmem:[#allocation13 + $0x34] sm:$0xf]
    %v1953 = vld [vmem:[#allocation13 + $0x38] sm:$0xf]
    %v1954 = vld [vmem:[#allocation13 + $0x3c] sm:$0xf]
    %v1955 = vld [vmem:[#allocation13 + $0x40] sm:$0xf]
    %v1956 = vld [vmem:[#allocation13 + $0x44] sm:$0xf]
    %v1957 = vld [vmem:[#allocation13 + $0x48] sm:$0xf]
    %v1958 = vld [vmem:[#allocation13 + $0x4c] sm:$0xf]
    %v1959 = vld [vmem:[#allocation13 + $0x50] sm:$0xf]
    %v1960 = vld [vmem:[#allocation13 + $0x54] sm:$0xf]
    %v1961 = vld [vmem:[#allocation13 + $0x58] sm:$0xf]
    %v1962 = vld [vmem:[#allocation13 + $0x5c] sm:$0xf]
    %v1963 = vld [vmem:[#allocation13 + $0x60] sm:$0xf]
    %v1964 = vld [vmem:[#allocation13 + $0x64] sm:$0xf]
    %v1965 = vld [vmem:[#allocation13 + $0x68] sm:$0xf]
    %v1966 = vld [vmem:[#allocation13 + $0x6c] sm:$0xf]
    %v1967 = vld [vmem:[#allocation13 + $0x70] sm:$0xf]
    %v1968 = vld [vmem:[#allocation13 + $0x74] sm:$0xf]
    %v1969 = vld [vmem:[#allocation13 + $0x78] sm:$0xf]
    %v1970 = vld [vmem:[#allocation13 + $0x7c] sm:$0xf]
    %v1971 = vunpack.c.l.bf16 %v1939
    %v1972 = vunpack.c.l.bf16 %v1940
    %v1973 = vunpack.c.l.bf16 %v1941
    %v1974 = vunpack.c.l.bf16 %v1942
    %v1975 = vunpack.c.l.bf16 %v1943
    %v1976 = vunpack.c.l.bf16 %v1944
    %v1977 = vunpack.c.l.bf16 %v1945
    %v1978 = vunpack.c.l.bf16 %v1946
    %v1979 = vunpack.c.l.bf16 %v1947
    %v1980 = vunpack.c.l.bf16 %v1948
    %v1981 = vunpack.c.l.bf16 %v1949
    %v1982 = vunpack.c.l.bf16 %v1950
    %v1983 = vunpack.c.l.bf16 %v1951
    %v1984 = vunpack.c.l.bf16 %v1952
    %v1985 = vunpack.c.l.bf16 %v1953
    %v1986 = vunpack.c.l.bf16 %v1954
    %v1987 = vunpack.c.l.bf16 %v1955
    %v1988 = vunpack.c.l.bf16 %v1956
    %v1989 = vunpack.c.l.bf16 %v1957
    %v1990 = vunpack.c.l.bf16 %v1958
    %v1991 = vunpack.c.l.bf16 %v1959
    %v1992 = vunpack.c.l.bf16 %v1960
    %v1993 = vunpack.c.l.bf16 %v1961
    %v1994 = vunpack.c.l.bf16 %v1962
    %v1995 = vunpack.c.l.bf16 %v1963
    %v1996 = vunpack.c.l.bf16 %v1964
    %v1997 = vunpack.c.l.bf16 %v1965
    %v1998 = vunpack.c.l.bf16 %v1966
    %v1999 = vunpack.c.l.bf16 %v1967
    %v2000 = vunpack.c.l.bf16 %v1968
    %v2001 = vunpack.c.l.bf16 %v1969
    %v2002 = vunpack.c.l.bf16 %v1970
    %v2003 = vld [vmem:[#allocation15] sm:$0x1]
    %v2005 = vlaneseq
    %v2006 = vshrl.u32 %v2005, 7
    %v2007 = vsub.s32 0, %v2006
    %v2008 = vrot.slane %v2003, %v2007
    %2010 = vmatprep.subr.mxu0 0.0
    %2011 = vmatpush1.msra.mxu0 %v1986
    %2012 = vmatprep.subr.mxu0 0.0
    %2013 = vmatpush1.msra.mxu0 %v1985
    %2014 = vmatprep.subr.mxu0 0.0
    %2015 = vmatpush1.msra.mxu0 %v1984
    %2016 = vmatprep.subr.mxu0 0.0
    %2017 = vmatpush1.msra.mxu0 %v1983
    %2018 = vmatprep.subr.mxu0 0.0
    %2019 = vmatpush1.msra.mxu0 %v1982
    %2020 = vmatprep.subr.mxu0 0.0
    %2021 = vmatpush1.msra.mxu0 %v1981
    %2022 = vmatprep.subr.mxu0 0.0
    %2023 = vmatpush1.msra.mxu0 %v1980
    %2024 = vmatprep.subr.mxu0 0.0
    %2025 = vmatpush1.msra.mxu0 %v1979
    %2026 = vmatprep.subr.mxu0 0.0
    %2027 = vmatpush1.msra.mxu0 %v1978
    %2028 = vmatprep.subr.mxu0 0.0
    %2029 = vmatpush1.msra.mxu0 %v1977
    %2030 = vmatprep.subr.mxu0 0.0
    %2031 = vmatpush1.msra.mxu0 %v1976
    %2032 = vmatprep.subr.mxu0 0.0
    %2033 = vmatpush1.msra.mxu0 %v1975
    %2034 = vmatprep.subr.mxu0 0.0
    %2035 = vmatpush1.msra.mxu0 %v1974
    %2036 = vmatprep.subr.mxu0 0.0
    %2037 = vmatpush1.msra.mxu0 %v1973
    %2038 = vmatprep.subr.mxu0 0.0
    %2039 = vmatpush1.msra.mxu0 %v1972
    %2040 = vmatprep.subr.mxu0 0.0
    %2041 = vmatpush1.msra.mxu0 %v1971
    %2042 = vmatprep.subr.mxu0 0.0
    %2043 = vmatpush2.msra.mxu0 %v2002
    %2044 = vmatprep.subr.mxu0 0.0
    %2045 = vmatpush2.msra.mxu0 %v2001
    %2046 = vmatprep.subr.mxu0 0.0
    %2047 = vmatpush2.msra.mxu0 %v2000
    %2048 = vmatprep.subr.mxu0 0.0
    %2049 = vmatpush2.msra.mxu0 %v1999
    %2050 = vmatprep.subr.mxu0 0.0
    %2051 = vmatpush2.msra.mxu0 %v1998
    %2052 = vmatprep.subr.mxu0 0.0
    %2053 = vmatpush2.msra.mxu0 %v1997
    %2054 = vmatprep.subr.mxu0 0.0
    %2055 = vmatpush2.msra.mxu0 %v1996
    %2056 = vmatprep.subr.mxu0 0.0
    %2057 = vmatpush2.msra.mxu0 %v1995
    %2058 = vmatprep.subr.mxu0 0.0
    %2059 = vmatpush2.msra.mxu0 %v1994
    %2060 = vmatprep.subr.mxu0 0.0
    %2061 = vmatpush2.msra.mxu0 %v1993
    %2062 = vmatprep.subr.mxu0 0.0
    %2063 = vmatpush2.msra.mxu0 %v1992
    %2064 = vmatprep.subr.mxu0 0.0
    %2065 = vmatpush2.msra.mxu0 %v1991
    %2066 = vmatprep.subr.mxu0 0.0
    %2067 = vmatpush2.msra.mxu0 %v1990
    %2068 = vmatprep.subr.mxu0 0.0
    %2069 = vmatpush2.msra.mxu0 %v1989
    %2070 = vmatprep.subr.mxu0 0.0
    %2071 = vmatpush2.msra.mxu0 %v1988
    %2072 = vmatprep.subr.mxu0 0.0
    %2073 = vmatpush2.msra.mxu0 %v1987
    %2074 = vmatprep.mubr.f32.mxu0 %v1936
    %2075 = vmatmul.mubr.f32.gmra.mxu0 %v1935
    %v2076 = vpop.f32.mrf.mxu0
    %v2077 = vadd.f32 %v2008, %v2076
    %v2078 = vpop.f32.mrf.mxu0
    %2079 = vmatprep.mubr.f32.mxu0 %v1938
    %2080 = vmatmul.mubr.f32.gmra.mxu0 %v1937
    %v2081 = vpop.f32.mrf.mxu0
    %v2082 = vadd.f32 %v2008, %v2081
    %v2083 = vpop.f32.mrf.mxu0
    %2084 = vdwg.mxu0
    %2085 = vst [vmem:[#allocation16] sm:$0xff] %v2077
    %2086 = vst [vmem:[#allocation16 + $0x8] sm:$0xff] %v2082
    // Predicated region
    $region58: #{tpu_custom_call.1} parent=1 // pred_check
      _
    $region59: #{tpu_custom_call.1} parent=1 // pred_check_branch
      %2088 = sbr.rel (0) target = $region61
    $region60: #{tpu_custom_call.1} parent=1 // pred_region
      %s2090 = ssub.s32 256, 256
      %2091 = vsyncadd [#allocation6], %s2090
      %s2092 = sshll.u32 [#allocation16], 4
      %s2093 = int_to_ptr.vmem [resolvable:$true] %s2092
      %2098 = dma.vmem_to_hbm [thread:$0]  %s2093, 256, %s8, [#allocation6], 128, 128, 8
    $region61: #{tpu_custom_call.1} parent=1 // pred_fallthru
      _
    // Predicated region
    $region62: #{tpu_custom_call.1} parent=1 // pred_check
      _
    $region63: #{tpu_custom_call.1} parent=1 // pred_check_branch
      %2100 = sbr.rel (0) target = $region65
    $region64: #{tpu_custom_call.1} parent=1 // pred_region
      %2101 = dma.done [#allocation6], 256
    $region65: #{tpu_custom_call.1} parent=1 // pred_fallthru
      _
    %2102 = vsyncpa [#allocation5], 1
    %2103 = vsyncpa [#allocation8], 1
    %2104 = vsyncpa [#allocation11], 1
    %2105 = vsyncpa [#allocation14], 1
    %2106 = vsyncpa [#allocation6], 1

// kernel: tpu_custom_call.1
$region0: #{tpu_custom_call.1}
  #allocation0 [shape = 'u32[]', space=smem, size = 0x4, offset = 0x4, fixed_abs, tag = 'smem constant byte address 0x4 - core index']
  #allocation1 [shape = 'u32[144,128]{1,0:T(1,128)}', space=vmem, size = 0x12000, scoped, tag = 'internal scratch']
  #allocation2 [shape = 's32[1]{0}', space=sflag, size = 0x4, scoped, tag = 'scoped memory for tpu_custom_call.1']
  #allocation3 [shape = 's32[1]{0:T(128)S(6)}', space=smem, size = 0x200, scoped, tag = 'prefetched SMEM operand 0']
  %s0 = inlined_call_operand.<no memory space> [shape: s32[1], index: 0, kind: input, shape index: {}]
  %s1 = inlined_call_operand.hbm [shape: f32[16,1024], index: 1, kind: input, shape index: {}]
  %s2 = inlined_call_operand.hbm [shape: bf16[2,1024,512], index: 2, kind: input, shape index: {}]
  %s3 = inlined_call_operand.hbm [shape: f32[2,1,512], index: 3, kind: input, shape index: {}]
  %s4 = inlined_call_operand.hbm [shape: bf16[2,512,256], index: 4, kind: input, shape index: {}]
  %s5 = inlined_call_operand.hbm [shape: f32[2,1,256], index: 5, kind: input, shape index: {}]
  %s6 = inlined_call_operand.hbm [shape: bf16[2,256,128], index: 6, kind: input, shape index: {}]
  %s7 = inlined_call_operand.hbm [shape: f32[2,1,128], index: 7, kind: input, shape index: {}]
  %s8 = inlined_call_operand.hbm [shape: f32[16,128], index: 8, kind: output, shape index: {}]
  %s9 = sld [smem:[#allocation0]]
  $region66: #{tpu_custom_call.1} parent=0
    _
  %s11 = ssub.s32 1, %s9
  %s12 = scalar_select 0, %s11, %s9
  %13 = sst [smem:[#allocation3]] %s0
  $region1: #{tpu_custom_call.1} parent=0
    #allocation4 [shape = 'u8[65536]{0}', space=vmem, size = 0x10000, scoped, tag = 'input window, operand 1, single buffered']
    #allocation5 [shape = 's32[1]{0}', space=sflag, size = 0x4, scoped, tag = 'scoped memory for tpu_custom_call.1']
    #allocation6 [shape = 's32[1]{0}', space=sflag, size = 0x4, scoped, tag = 'scoped memory for tpu_custom_call.1']
    #allocation7 [shape = 'u8[1048576]{0}', space=vmem, size = 0x100000, scoped, tag = 'input window, operand 2, single buffered']
    #allocation8 [shape = 's32[1]{0}', space=sflag, size = 0x4, scoped, tag = 'scoped memory for tpu_custom_call.1']
    #allocation9 [shape = 'u8[2048]{0}', space=vmem, size = 0x800, scoped, tag = 'input window, operand 3, single buffered']
    #allocation10 [shape = 'u8[262144]{0}', space=vmem, size = 0x40000, scoped, tag = 'input window, operand 4, single buffered']
    #allocation11 [shape = 's32[1]{0}', space=sflag, size = 0x4, scoped, tag = 'scoped memory for tpu_custom_call.1']
    #allocation12 [shape = 'u8[1024]{0}', space=vmem, size = 0x400, scoped, tag = 'input window, operand 5, single buffered']
    #allocation13 [shape = 'u8[65536]{0}', space=vmem, size = 0x10000, scoped, tag = 'input window, operand 6, single buffered']
    #allocation14 [shape = 's32[1]{0}', space=sflag, size = 0x4, scoped, tag = 'scoped memory for tpu_custom_call.1']
    #allocation15 [shape = 'u8[512]{0}', space=vmem, size = 0x400, scoped, tag = 'input window, operand 7, single buffered']
    #allocation16 [shape = 'u8[8192]{0}', space=vmem, size = 0x2000, scoped, tag = 'output window, operand 0, single buffered']
    %14 = vsyncpa [#allocation5], 0
    %15 = vsyncpa [#allocation8], 0
    %16 = vsyncpa [#allocation11], 0
    %17 = vsyncpa [#allocation14], 0
    %18 = vsyncpa [#allocation6], 0
    // Predicated region
    $region2: #{tpu_custom_call.1} parent=1 // pred_check
      _
    $region3: #{tpu_custom_call.1} parent=1 // pred_check_branch
      %20 = sbr.rel (0) target = $region5
    $region4: #{tpu_custom_call.1} parent=1 // pred_region
      %s22 = ssub.s32 2048, 2048
      %23 = vsyncadd [#allocation5], %s22
      %s24 = sshll.u32 [#allocation4], 4
      %s25 = int_to_ptr.vmem [resolvable:$true] %s24
      %30 = dma.hbm_to_vmem [thread:$0]  %s1, 2048, %s25, [#allocation5], 1024, 1024, 64
    $region5: #{tpu_custom_call.1} parent=1 // pred_fallthru
      _
    // Predicated region
    $region6: #{tpu_custom_call.1} parent=1 // pred_check
      _
    $region7: #{tpu_custom_call.1} parent=1 // pred_check_branch
      %32 = sbr.rel (0) target = $region9
    $region8: #{tpu_custom_call.1} parent=1 // pred_region
      %s33 = sld [smem:[#allocation3]]
      %s35 = ssub.s32 32768, 32768
      %36 = vsyncadd [#allocation8], %s35
      %s37 = smul.addr %s33, 512
      %s38 = smul.addr %s37, 64
      %s39 = scalar_lea.hbm %s2, %s38
      %s40 = sshll.u32 [#allocation7], 4
      %s41 = int_to_ptr.vmem [resolvable:$true] %s40
      %46 = dma.hbm_to_vmem [thread:$0]  %s39, 32768, %s41, [#allocation8], 256, 256, 16
    $region9: #{tpu_custom_call.1} parent=1 // pred_fallthru
      _
    // Predicated region
    $region10: #{tpu_custom_call.1} parent=1 // pred_check
      _
    $region11: #{tpu_custom_call.1} parent=1 // pred_check_branch
      %48 = sbr.rel (0) target = $region13
    $region12: #{tpu_custom_call.1} parent=1 // pred_region
      %s49 = sld [smem:[#allocation3]]
      %s51 = ssub.s32 64, 64
      %52 = vsyncadd [#allocation8], %s51
      %s53 = smul.addr %s49, 4
      %s54 = smul.addr %s53, 16
      %s55 = scalar_lea.hbm %s3, %s54
      %s57 = sshll.u32 [#allocation9], 4
      %s58 = int_to_ptr.vmem [resolvable:$true] %s57
      %60 = dma.hbm_to_vmem [thread:$0]  %s55, 64, %s58, [#allocation8]
    $region13: #{tpu_custom_call.1} parent=1 // pred_fallthru
      _
    // Predicated region
    $region14: #{tpu_custom_call.1} parent=1 // pred_check
      _
    $region15: #{tpu_custom_call.1} parent=1 // pred_check_branch
      %62 = sbr.rel (0) target = $region17
    $region16: #{tpu_custom_call.1} parent=1 // pred_region
      %s63 = sld [smem:[#allocation3]]
      %s65 = ssub.s32 8192, 8192
      %66 = vsyncadd [#allocation11], %s65
      %s67 = smul.addr %s63, 128
      %s68 = smul.addr %s67, 64
      %s69 = scalar_lea.hbm %s4, %s68
      %s70 = sshll.u32 [#allocation10], 4
      %s71 = int_to_ptr.vmem [resolvable:$true] %s70
      %76 = dma.hbm_to_vmem [thread:$0]  %s69, 8192, %s71, [#allocation11], 128, 128, 8
    $region17: #{tpu_custom_call.1} parent=1 // pred_fallthru
      _
    // Predicated region
    $region18: #{tpu_custom_call.1} parent=1 // pred_check
      _
    $region19: #{tpu_custom_call.1} parent=1 // pred_check_branch
      %78 = sbr.rel (0) target = $region21
    $region20: #{tpu_custom_call.1} parent=1 // pred_region
      %s79 = sld [smem:[#allocation3]]
      %s81 = ssub.s32 32, 32
      %82 = vsyncadd [#allocation11], %s81
      %s83 = smul.addr %s79, 2
      %s84 = smul.addr %s83, 16
      %s85 = scalar_lea.hbm %s5, %s84
      %s87 = sshll.u32 [#allocation12], 4
      %s88 = int_to_ptr.vmem [resolvable:$true] %s87
      %90 = dma.hbm_to_vmem [thread:$0]  %s85, 32, %s88, [#allocation11]
    $region21: #{tpu_custom_call.1} parent=1 // pred_fallthru
      _
    // Predicated region
    $region22: #{tpu_custom_call.1} parent=1 // pred_check
      _
    $region23: #{tpu_custom_call.1} parent=1 // pred_check_branch
      %92 = sbr.rel (0) target = $region25
    $region24: #{tpu_custom_call.1} parent=1 // pred_region
      %s93 = sld [smem:[#allocation3]]
      %s95 = ssub.s32 2048, 2048
      %96 = vsyncadd [#allocation14], %s95
      %s97 = smul.addr %s93, 32
      %s98 = smul.addr %s97, 64
      %s99 = scalar_lea.hbm %s6, %s98
      %s100 = sshll.u32 [#allocation13], 4
      %s101 = int_to_ptr.vmem [resolvable:$true] %s100
      %106 = dma.hbm_to_vmem [thread:$0]  %s99, 2048, %s101, [#allocation14], 64, 64, 4
    $region25: #{tpu_custom_call.1} parent=1 // pred_fallthru
      _
    // Predicated region
    $region26: #{tpu_custom_call.1} parent=1 // pred_check
      _
    $region27: #{tpu_custom_call.1} parent=1 // pred_check_branch
      %108 = sbr.rel (0) target = $region29
    $region28: #{tpu_custom_call.1} parent=1 // pred_region
      %s109 = sld [smem:[#allocation3]]
      %s111 = ssub.s32 16, 16
      %112 = vsyncadd [#allocation14], %s111
      %s113 = smul.addr %s109, 16
      %s114 = scalar_lea.hbm %s7, %s113
      %s116 = sshll.u32 [#allocation15], 4
      %s117 = int_to_ptr.vmem [resolvable:$true] %s116
      %119 = dma.hbm_to_vmem [thread:$0]  %s114, 16, %s117, [#allocation14]
    $region29: #{tpu_custom_call.1} parent=1 // pred_fallthru
      _
    // Predicated region
    $region30: #{tpu_custom_call.1} parent=1 // pred_check
      _
    $region31: #{tpu_custom_call.1} parent=1 // pred_check_branch
      %121 = sbr.rel (0) target = $region33
    $region32: #{tpu_custom_call.1} parent=1 // pred_region
      %122 = dma.done [#allocation5], 2048
    $region33: #{tpu_custom_call.1} parent=1 // pred_fallthru
      _
    // Predicated region
    $region34: #{tpu_custom_call.1} parent=1 // pred_check
      _
    $region35: #{tpu_custom_call.1} parent=1 // pred_check_branch
      %124 = sbr.rel (0) target = $region37
    $region36: #{tpu_custom_call.1} parent=1 // pred_region
      %125 = dma.done [#allocation8], 32768
    $region37: #{tpu_custom_call.1} parent=1 // pred_fallthru
      _
    // Predicated region
    $region38: #{tpu_custom_call.1} parent=1 // pred_check
      _
    $region39: #{tpu_custom_call.1} parent=1 // pred_check_branch
      %127 = sbr.rel (0) target = $region41
    $region40: #{tpu_custom_call.1} parent=1 // pred_region
      %128 = dma.done [#allocation8], 64
    $region41: #{tpu_custom_call.1} parent=1 // pred_fallthru
      _
    // Predicated region
    $region42: #{tpu_custom_call.1} parent=1 // pred_check
      _
    $region43: #{tpu_custom_call.1} parent=1 // pred_check_branch
      %130 = sbr.rel (0) target = $region45
    $region44: #{tpu_custom_call.1} parent=1 // pred_region
      %131 = dma.done [#allocation11], 8192
    $region45: #{tpu_custom_call.1} parent=1 // pred_fallthru
      _
    // Predicated region
    $region46: #{tpu_custom_call.1} parent=1 // pred_check
      _
    $region47: #{tpu_custom_call.1} parent=1 // pred_check_branch
      %133 = sbr.rel (0) target = $region49
    $region48: #{tpu_custom_call.1} parent=1 // pred_region
      %134 = dma.done [#allocation11], 32
    $region49: #{tpu_custom_call.1} parent=1 // pred_fallthru
      _
    // Predicated region
    $region50: #{tpu_custom_call.1} parent=1 // pred_check
      _
    $region51: #{tpu_custom_call.1} parent=1 // pred_check_branch
      %136 = sbr.rel (0) target = $region53
    $region52: #{tpu_custom_call.1} parent=1 // pred_region
      %137 = dma.done [#allocation14], 2048
    $region53: #{tpu_custom_call.1} parent=1 // pred_fallthru
      _
    // Predicated region
    $region54: #{tpu_custom_call.1} parent=1 // pred_check
      _
    $region55: #{tpu_custom_call.1} parent=1 // pred_check_branch
      %139 = sbr.rel (0) target = $region57
    $region56: #{tpu_custom_call.1} parent=1 // pred_region
      %140 = dma.done [#allocation14], 16
    $region57: #{tpu_custom_call.1} parent=1 // pred_fallthru
      _
    %s141 = sld [smem:[#allocation3]]
    %s142 = sld [smem:[#allocation3]]
    %s143 = sld [smem:[#allocation3]]
    %s144 = sld [smem:[#allocation3]]
    %s145 = sld [smem:[#allocation3]]
    %s146 = sld [smem:[#allocation3]]
    %v147 = vld [vmem:[#allocation4] sm:$0xff]
    %v148 = vld [vmem:[#allocation4 + $0x8] sm:$0xff]
    %v149 = vld [vmem:[#allocation4 + $0x10] sm:$0xff]
    %v150 = vld [vmem:[#allocation4 + $0x18] sm:$0xff]
    %v151 = vld [vmem:[#allocation4 + $0x20] sm:$0xff]
    %v152 = vld [vmem:[#allocation4 + $0x28] sm:$0xff]
    %v153 = vld [vmem:[#allocation4 + $0x30] sm:$0xff]
    %v154 = vld [vmem:[#allocation4 + $0x38] sm:$0xff]
    %v155 = vld [vmem:[#allocation4 + $0x40] sm:$0xff]
    %v156 = vld [vmem:[#allocation4 + $0x48] sm:$0xff]
    %v157 = vld [vmem:[#allocation4 + $0x50] sm:$0xff]
    %v158 = vld [vmem:[#allocation4 + $0x58] sm:$0xff]
    %v159 = vld [vmem:[#allocation4 + $0x60] sm:$0xff]
    %v160 = vld [vmem:[#allocation4 + $0x68] sm:$0xff]
    %v161 = vld [vmem:[#allocation4 + $0x70] sm:$0xff]
    %v162 = vld [vmem:[#allocation4 + $0x78] sm:$0xff]
    %v163 = vld [vmem:[#allocation7] sm:$0xff]
    %v164 = vld [vmem:[#allocation7 + $0x8] sm:$0xff]
    %v165 = vld [vmem:[#allocation7 + $0x10] sm:$0xff]
    %v166 = vld [vmem:[#allocation7 + $0x18] sm:$0xff]
    %v167 = vld [vmem:[#allocation7 + $0x20] sm:$0xff]
    %v168 = vld [vmem:[#allocation7 + $0x28] sm:$0xff]
    %v169 = vld [vmem:[#allocation7 + $0x30] sm:$0xff]
    %v170 = vld [vmem:[#allocation7 + $0x38] sm:$0xff]
    %v171 = vld [vmem:[#allocation7 + $0x40] sm:$0xff]
    %v172 = vld [vmem:[#allocation7 + $0x48] sm:$0xff]
    %v173 = vld [vmem:[#allocation7 + $0x50] sm:$0xff]
    %v174 = vld [vmem:[#allocation7 + $0x58] sm:$0xff]
    %v175 = vld [vmem:[#allocation7 + $0x60] sm:$0xff]
    %v176 = vld [vmem:[#allocation7 + $0x68] sm:$0xff]
    %v177 = vld [vmem:[#allocation7 + $0x70] sm:$0xff]
    %v178 = vld [vmem:[#allocation7 + $0x78] sm:$0xff]
    %v179 = vld [vmem:[#allocation7 + $0x80] sm:$0xff]
    %v180 = vld [vmem:[#allocation7 + $0x88] sm:$0xff]
    %v181 = vld [vmem:[#allocation7 + $0x90] sm:$0xff]
    %v182 = vld [vmem:[#allocation7 + $0x98] sm:$0xff]
    %v183 = vld [vmem:[#allocation7 + $0xa0] sm:$0xff]
    %v184 = vld [vmem:[#allocation7 + $0xa8] sm:$0xff]
    %v185 = vld [vmem:[#allocation7 + $0xb0] sm:$0xff]
    %v186 = vld [vmem:[#allocation7 + $0xb8] sm:$0xff]
    %v187 = vld [vmem:[#allocation7 + $0xc0] sm:$0xff]
    %v188 = vld [vmem:[#allocation7 + $0xc8] sm:$0xff]
    %v189 = vld [vmem:[#allocation7 + $0xd0] sm:$0xff]
    %v190 = vld [vmem:[#allocation7 + $0xd8] sm:$0xff]
    %v191 = vld [vmem:[#allocation7 + $0xe0] sm:$0xff]
    %v192 = vld [vmem:[#allocation7 + $0xe8] sm:$0xff]
    %v193 = vld [vmem:[#allocation7 + $0xf0] sm:$0xff]
    %v194 = vld [vmem:[#allocation7 + $0xf8] sm:$0xff]
    %v195 = vld [vmem:[#allocation7 + $0x100] sm:$0xff]
    %v196 = vld [vmem:[#allocation7 + $0x108] sm:$0xff]
    %v197 = vld [vmem:[#allocation7 + $0x110] sm:$0xff]
    %v198 = vld [vmem:[#allocation7 + $0x118] sm:$0xff]
    %v199 = vld [vmem:[#allocation7 + $0x120] sm:$0xff]
    %v200 = vld [vmem:[#allocation7 + $0x128] sm:$0xff]
    %v201 = vld [vmem:[#allocation7 + $0x130] sm:$0xff]
    %v202 = vld [vmem:[#allocation7 + $0x138] sm:$0xff]
    %v203 = vld [vmem:[#allocation7 + $0x140] sm:$0xff]
    %v204 = vld [vmem:[#allocation7 + $0x148] sm:$0xff]
    %v205 = vld [vmem:[#allocation7 + $0x150] sm:$0xff]
    %v206 = vld [vmem:[#allocation7 + $0x158] sm:$0xff]
    %v207 = vld [vmem:[#allocation7 + $0x160] sm:$0xff]
    %v208 = vld [vmem:[#allocation7 + $0x168] sm:$0xff]
    %v209 = vld [vmem:[#allocation7 + $0x170] sm:$0xff]
    %v210 = vld [vmem:[#allocation7 + $0x178] sm:$0xff]
    %v211 = vld [vmem:[#allocation7 + $0x180] sm:$0xff]
    %v212 = vld [vmem:[#allocation7 + $0x188] sm:$0xff]
    %v213 = vld [vmem:[#allocation7 + $0x190] sm:$0xff]
    %v214 = vld [vmem:[#allocation7 + $0x198] sm:$0xff]
    %v215 = vld [vmem:[#allocation7 + $0x1a0] sm:$0xff]
    %v216 = vld [vmem:[#allocation7 + $0x1a8] sm:$0xff]
    %v217 = vld [vmem:[#allocation7 + $0x1b0] sm:$0xff]
    %v218 = vld [vmem:[#allocation7 + $0x1b8] sm:$0xff]
    %v219 = vld [vmem:[#allocation7 + $0x1c0] sm:$0xff]
    %v220 = vld [vmem:[#allocation7 + $0x1c8] sm:$0xff]
    %v221 = vld [vmem:[#allocation7 + $0x1d0] sm:$0xff]
    %v222 = vld [vmem:[#allocation7 + $0x1d8] sm:$0xff]
    %v223 = vld [vmem:[#allocation7 + $0x1e0] sm:$0xff]
    %v224 = vld [vmem:[#allocation7 + $0x1e8] sm:$0xff]
    %v225 = vld [vmem:[#allocation7 + $0x1f0] sm:$0xff]
    %v226 = vld [vmem:[#allocation7 + $0x1f8] sm:$0xff]
    %v227 = vld [vmem:[#allocation7 + $0x200] sm:$0xff]
    %v228 = vld [vmem:[#allocation7 + $0x208] sm:$0xff]
    %v229 = vld [vmem:[#allocation7 + $0x210] sm:$0xff]
    %v230 = vld [vmem:[#allocation7 + $0x218] sm:$0xff]
    %v231 = vld [vmem:[#allocation7 + $0x220] sm:$0xff]
    %v232 = vld [vmem:[#allocation7 + $0x228] sm:$0xff]
    %v233 = vld [vmem:[#allocation7 + $0x230] sm:$0xff]
    %v234 = vld [vmem:[#allocation7 + $0x238] sm:$0xff]
    %v235 = vld [vmem:[#allocation7 + $0x240] sm:$0xff]
    %v236 = vld [vmem:[#allocation7 + $0x248] sm:$0xff]
    %v237 = vld [vmem:[#allocation7 + $0x250] sm:$0xff]
    %v238 = vld [vmem:[#allocation7 + $0x258] sm:$0xff]
    %v239 = vld [vmem:[#allocation7 + $0x260] sm:$0xff]
    %v240 = vld [vmem:[#allocation7 + $0x268] sm:$0xff]
    %v241 = vld [vmem:[#allocation7 + $0x270] sm:$0xff]
    %v242 = vld [vmem:[#allocation7 + $0x278] sm:$0xff]
    %v243 = vld [vmem:[#allocation7 + $0x280] sm:$0xff]
    %v244 = vld [vmem:[#allocation7 + $0x288] sm:$0xff]
    %v245 = vld [vmem:[#allocation7 + $0x290] sm:$0xff]
    %v246 = vld [vmem:[#allocation7 + $0x298] sm:$0xff]
    %v247 = vld [vmem:[#allocation7 + $0x2a0] sm:$0xff]
    %v248 = vld [vmem:[#allocation7 + $0x2a8] sm:$0xff]
    %v249 = vld [vmem:[#allocation7 + $0x2b0] sm:$0xff]
    %v250 = vld [vmem:[#allocation7 + $0x2b8] sm:$0xff]
    %v251 = vld [vmem:[#allocation7 + $0x2c0] sm:$0xff]
    %v252 = vld [vmem:[#allocation7 + $0x2c8] sm:$0xff]
    %v253 = vld [vmem:[#allocation7 + $0x2d0] sm:$0xff]
    %v254 = vld [vmem:[#allocation7 + $0x2d8] sm:$0xff]
    %v255 = vld [vmem:[#allocation7 + $0x2e0] sm:$0xff]
    %v256 = vld [vmem:[#allocation7 + $0x2e8] sm:$0xff]
    %v257 = vld [vmem:[#allocation7 + $0x2f0] sm:$0xff]
    %v258 = vld [vmem:[#allocation7 + $0x2f8] sm:$0xff]
    %v259 = vld [vmem:[#allocation7 + $0x300] sm:$0xff]
    %v260 = vld [vmem:[#allocation7 + $0x308] sm:$0xff]
    %v261 = vld [vmem:[#allocation7 + $0x310] sm:$0xff]
    %v262 = vld [vmem:[#allocation7 + $0x318] sm:$0xff]
    %v263 = vld [vmem:[#allocation7 + $0x320] sm:$0xff]
    %v264 = vld [vmem:[#allocation7 + $0x328] sm:$0xff]
    %v265 = vld [vmem:[#allocation7 + $0x330] sm:$0xff]
    %v266 = vld [vmem:[#allocation7 + $0x338] sm:$0xff]
    %v267 = vld [vmem:[#allocation7 + $0x340] sm:$0xff]
    %v268 = vld [vmem:[#allocation7 + $0x348] sm:$0xff]
    %v269 = vld [vmem:[#allocation7 + $0x350] sm:$0xff]
    %v270 = vld [vmem:[#allocation7 + $0x358] sm:$0xff]
    %v271 = vld [vmem:[#allocation7 + $0x360] sm:$0xff]
    %v272 = vld [vmem:[#allocation7 + $0x368] sm:$0xff]
    %v273 = vld [vmem:[#allocation7 + $0x370] sm:$0xff]
    %v274 = vld [vmem:[#allocation7 + $0x378] sm:$0xff]
    %v275 = vld [vmem:[#allocation7 + $0x380] sm:$0xff]
    %v276 = vld [vmem:[#allocation7 + $0x388] sm:$0xff]
    %v277 = vld [vmem:[#allocation7 + $0x390] sm:$0xff]
    %v278 = vld [vmem:[#allocation7 + $0x398] sm:$0xff]
    %v279 = vld [vmem:[#allocation7 + $0x3a0] sm:$0xff]
    %v280 = vld [vmem:[#allocation7 + $0x3a8] sm:$0xff]
    %v281 = vld [vmem:[#allocation7 + $0x3b0] sm:$0xff]
    %v282 = vld [vmem:[#allocation7 + $0x3b8] sm:$0xff]
    %v283 = vld [vmem:[#allocation7 + $0x3c0] sm:$0xff]
    %v284 = vld [vmem:[#allocation7 + $0x3c8] sm:$0xff]
    %v285 = vld [vmem:[#allocation7 + $0x3d0] sm:$0xff]
    %v286 = vld [vmem:[#allocation7 + $0x3d8] sm:$0xff]
    %v287 = vld [vmem:[#allocation7 + $0x3e0] sm:$0xff]
    %v288 = vld [vmem:[#allocation7 + $0x3e8] sm:$0xff]
    %v289 = vld [vmem:[#allocation7 + $0x3f0] sm:$0xff]
    %v290 = vld [vmem:[#allocation7 + $0x3f8] sm:$0xff]
    %v291 = vld [vmem:[#allocation7 + $0x400] sm:$0xff]
    %v292 = vld [vmem:[#allocation7 + $0x408] sm:$0xff]
    %v293 = vld [vmem:[#allocation7 + $0x410] sm:$0xff]
    %v294 = vld [vmem:[#allocation7 + $0x418] sm:$0xff]
    %v295 = vld [vmem:[#allocation7 + $0x420] sm:$0xff]
    %v296 = vld [vmem:[#allocation7 + $0x428] sm:$0xff]
    %v297 = vld [vmem:[#allocation7 + $0x430] sm:$0xff]
    %v298 = vld [vmem:[#allocation7 + $0x438] sm:$0xff]
    %v299 = vld [vmem:[#allocation7 + $0x440] sm:$0xff]
    %v300 = vld [vmem:[#allocation7 + $0x448] sm:$0xff]
    %v301 = vld [vmem:[#allocation7 + $0x450] sm:$0xff]
    %v302 = vld [vmem:[#allocation7 + $0x458] sm:$0xff]
    %v303 = vld [vmem:[#allocation7 + $0x460] sm:$0xff]
    %v304 = vld [vmem:[#allocation7 + $0x468] sm:$0xff]
    %v305 = vld [vmem:[#allocation7 + $0x470] sm:$0xff]
    %v306 = vld [vmem:[#allocation7 + $0x478] sm:$0xff]
    %v307 = vld [vmem:[#allocation7 + $0x480] sm:$0xff]
    %v308 = vld [vmem:[#allocation7 + $0x488] sm:$0xff]
    %v309 = vld [vmem:[#allocation7 + $0x490] sm:$0xff]
    %v310 = vld [vmem:[#allocation7 + $0x498] sm:$0xff]
    %v311 = vld [vmem:[#allocation7 + $0x4a0] sm:$0xff]
    %v312 = vld [vmem:[#allocation7 + $0x4a8] sm:$0xff]
    %v313 = vld [vmem:[#allocation7 + $0x4b0] sm:$0xff]
    %v314 = vld [vmem:[#allocation7 + $0x4b8] sm:$0xff]
    %v315 = vld [vmem:[#allocation7 + $0x4c0] sm:$0xff]
    %v316 = vld [vmem:[#allocation7 + $0x4c8] sm:$0xff]
    %v317 = vld [vmem:[#allocation7 + $0x4d0] sm:$0xff]
    %v318 = vld [vmem:[#allocation7 + $0x4d8] sm:$0xff]
    %v319 = vld [vmem:[#allocation7 + $0x4e0] sm:$0xff]
    %v320 = vld [vmem:[#allocation7 + $0x4e8] sm:$0xff]
    %v321 = vld [vmem:[#allocation7 + $0x4f0] sm:$0xff]
    %v322 = vld [vmem:[#allocation7 + $0x4f8] sm:$0xff]
    %v323 = vld [vmem:[#allocation7 + $0x500] sm:$0xff]
    %v324 = vld [vmem:[#allocation7 + $0x508] sm:$0xff]
    %v325 = vld [vmem:[#allocation7 + $0x510] sm:$0xff]
    %v326 = vld [vmem:[#allocation7 + $0x518] sm:$0xff]
    %v327 = vld [vmem:[#allocation7 + $0x520] sm:$0xff]
    %v328 = vld [vmem:[#allocation7 + $0x528] sm:$0xff]
    %v329 = vld [vmem:[#allocation7 + $0x530] sm:$0xff]
    %v330 = vld [vmem:[#allocation7 + $0x538] sm:$0xff]
    %v331 = vld [vmem:[#allocation7 + $0x540] sm:$0xff]
    %v332 = vld [vmem:[#allocation7 + $0x548] sm:$0xff]
    %v333 = vld [vmem:[#allocation7 + $0x550] sm:$0xff]
    %v334 = vld [vmem:[#allocation7 + $0x558] sm:$0xff]
    %v335 = vld [vmem:[#allocation7 + $0x560] sm:$0xff]
    %v336 = vld [vmem:[#allocation7 + $0x568] sm:$0xff]
    %v337 = vld [vmem:[#allocation7 + $0x570] sm:$0xff]
    %v338 = vld [vmem:[#allocation7 + $0x578] sm:$0xff]
    %v339 = vld [vmem:[#allocation7 + $0x580] sm:$0xff]
    %v340 = vld [vmem:[#allocation7 + $0x588] sm:$0xff]
    %v341 = vld [vmem:[#allocation7 + $0x590] sm:$0xff]
    %v342 = vld [vmem:[#allocation7 + $0x598] sm:$0xff]
    %v343 = vld [vmem:[#allocation7 + $0x5a0] sm:$0xff]
    %v344 = vld [vmem:[#allocation7 + $0x5a8] sm:$0xff]
    %v345 = vld [vmem:[#allocation7 + $0x5b0] sm:$0xff]
    %v346 = vld [vmem:[#allocation7 + $0x5b8] sm:$0xff]
    %v347 = vld [vmem:[#allocation7 + $0x5c0] sm:$0xff]
    %v348 = vld [vmem:[#allocation7 + $0x5c8] sm:$0xff]
    %v349 = vld [vmem:[#allocation7 + $0x5d0] sm:$0xff]
    %v350 = vld [vmem:[#allocation7 + $0x5d8] sm:$0xff]
    %v351 = vld [vmem:[#allocation7 + $0x5e0] sm:$0xff]
    %v352 = vld [vmem:[#allocation7 + $0x5e8] sm:$0xff]
    %v353 = vld [vmem:[#allocation7 + $0x5f0] sm:$0xff]
    %v354 = vld [vmem:[#allocation7 + $0x5f8] sm:$0xff]
    %v355 = vld [vmem:[#allocation7 + $0x600] sm:$0xff]
    %v356 = vld [vmem:[#allocation7 + $0x608] sm:$0xff]
    %v357 = vld [vmem:[#allocation7 + $0x610] sm:$0xff]
    %v358 = vld [vmem:[#allocation7 + $0x618] sm:$0xff]
    %v359 = vld [vmem:[#allocation7 + $0x620] sm:$0xff]
    %v360 = vld [vmem:[#allocation7 + $0x628] sm:$0xff]
    %v361 = vld [vmem:[#allocation7 + $0x630] sm:$0xff]
    %v362 = vld [vmem:[#allocation7 + $0x638] sm:$0xff]
    %v363 = vld [vmem:[#allocation7 + $0x640] sm:$0xff]
    %v364 = vld [vmem:[#allocation7 + $0x648] sm:$0xff]
    %v365 = vld [vmem:[#allocation7 + $0x650] sm:$0xff]
    %v366 = vld [vmem:[#allocation7 + $0x658] sm:$0xff]
    %v367 = vld [vmem:[#allocation7 + $0x660] sm:$0xff]
    %v368 = vld [vmem:[#allocation7 + $0x668] sm:$0xff]
    %v369 = vld [vmem:[#allocation7 + $0x670] sm:$0xff]
    %v370 = vld [vmem:[#allocation7 + $0x678] sm:$0xff]
    %v371 = vld [vmem:[#allocation7 + $0x680] sm:$0xff]
    %v372 = vld [vmem:[#allocation7 + $0x688] sm:$0xff]
    %v373 = vld [vmem:[#allocation7 + $0x690] sm:$0xff]
    %v374 = vld [vmem:[#allocation7 + $0x698] sm:$0xff]
    %v375 = vld [vmem:[#allocation7 + $0x6a0] sm:$0xff]
    %v376 = vld [vmem:[#allocation7 + $0x6a8] sm:$0xff]
    %v377 = vld [vmem:[#allocation7 + $0x6b0] sm:$0xff]
    %v378 = vld [vmem:[#allocation7 + $0x6b8] sm:$0xff]
    %v379 = vld [vmem:[#allocation7 + $0x6c0] sm:$0xff]
    %v380 = vld [vmem:[#allocation7 + $0x6c8] sm:$0xff]
    %v381 = vld [vmem:[#allocation7 + $0x6d0] sm:$0xff]
    %v382 = vld [vmem:[#allocation7 + $0x6d8] sm:$0xff]
    %v383 = vld [vmem:[#allocation7 + $0x6e0] sm:$0xff]
    %v384 = vld [vmem:[#allocation7 + $0x6e8] sm:$0xff]
    %v385 = vld [vmem:[#allocation7 + $0x6f0] sm:$0xff]
    %v386 = vld [vmem:[#allocation7 + $0x6f8] sm:$0xff]
    %v387 = vld [vmem:[#allocation7 + $0x700] sm:$0xff]
    %v388 = vld [vmem:[#allocation7 + $0x708] sm:$0xff]
    %v389 = vld [vmem:[#allocation7 + $0x710] sm:$0xff]
    %v390 = vld [vmem:[#allocation7 + $0x718] sm:$0xff]
    %v391 = vld [vmem:[#allocation7 + $0x720] sm:$0xff]
    %v392 = vld [vmem:[#allocation7 + $0x728] sm:$0xff]
    %v393 = vld [vmem:[#allocation7 + $0x730] sm:$0xff]
    %v394 = vld [vmem:[#allocation7 + $0x738] sm:$0xff]
    %v395 = vld [vmem:[#allocation7 + $0x740] sm:$0xff]
    %v396 = vld [vmem:[#allocation7 + $0x748] sm:$0xff]
    %v397 = vld [vmem:[#allocation7 + $0x750] sm:$0xff]
    %v398 = vld [vmem:[#allocation7 + $0x758] sm:$0xff]
    %v399 = vld [vmem:[#allocation7 + $0x760] sm:$0xff]
    %v400 = vld [vmem:[#allocation7 + $0x768] sm:$0xff]
    %v401 = vld [vmem:[#allocation7 + $0x770] sm:$0xff]
    %v402 = vld [vmem:[#allocation7 + $0x778] sm:$0xff]
    %v403 = vld [vmem:[#allocation7 + $0x780] sm:$0xff]
    %v404 = vld [vmem:[#allocation7 + $0x788] sm:$0xff]
    %v405 = vld [vmem:[#allocation7 + $0x790] sm:$0xff]
    %v406 = vld [vmem:[#allocation7 + $0x798] sm:$0xff]
    %v407 = vld [vmem:[#allocation7 + $0x7a0] sm:$0xff]
    %v408 = vld [vmem:[#allocation7 + $0x7a8] sm:$0xff]
    %v409 = vld [vmem:[#allocation7 + $0x7b0] sm:$0xff]
    %v410 = vld [vmem:[#allocation7 + $0x7b8] sm:$0xff]
    %v411 = vld [vmem:[#allocation7 + $0x7c0] sm:$0xff]
    %v412 = vld [vmem:[#allocation7 + $0x7c8] sm:$0xff]
    %v413 = vld [vmem:[#allocation7 + $0x7d0] sm:$0xff]
    %v414 = vld [vmem:[#allocation7 + $0x7d8] sm:$0xff]
    %v415 = vld [vmem:[#allocation7 + $0x7e0] sm:$0xff]
    %v416 = vld [vmem:[#allocation7 + $0x7e8] sm:$0xff]
    %v417 = vld [vmem:[#allocation7 + $0x7f0] sm:$0xff]
    %v418 = vld [vmem:[#allocation7 + $0x7f8] sm:$0xff]
    %v419 = vunpack.c.l.bf16 %v163
    %v420 = vunpack.c.h.bf16 %v163
    %v421 = vunpack.c.l.bf16 %v164
    %v422 = vunpack.c.h.bf16 %v164
    %v423 = vunpack.c.l.bf16 %v165
    %v424 = vunpack.c.h.bf16 %v165
    %v425 = vunpack.c.l.bf16 %v166
    %v426 = vunpack.c.h.bf16 %v166
    %v427 = vunpack.c.l.bf16 %v167
    %v428 = vunpack.c.h.bf16 %v167
    %v429 = vunpack.c.l.bf16 %v168
    %v430 = vunpack.c.h.bf16 %v168
    %v431 = vunpack.c.l.bf16 %v169
    %v432 = vunpack.c.h.bf16 %v169
    %v433 = vunpack.c.l.bf16 %v170
    %v434 = vunpack.c.h.bf16 %v170
    %v435 = vunpack.c.l.bf16 %v171
    %v436 = vunpack.c.h.bf16 %v171
    %v437 = vunpack.c.l.bf16 %v172
    %v438 = vunpack.c.h.bf16 %v172
    %v439 = vunpack.c.l.bf16 %v173
    %v440 = vunpack.c.h.bf16 %v173
    %v441 = vunpack.c.l.bf16 %v174
    %v442 = vunpack.c.h.bf16 %v174
    %v443 = vunpack.c.l.bf16 %v175
    %v444 = vunpack.c.h.bf16 %v175
    %v445 = vunpack.c.l.bf16 %v176
    %v446 = vunpack.c.h.bf16 %v176
    %v447 = vunpack.c.l.bf16 %v177
    %v448 = vunpack.c.h.bf16 %v177
    %v449 = vunpack.c.l.bf16 %v178
    %v450 = vunpack.c.h.bf16 %v178
    %v451 = vunpack.c.l.bf16 %v179
    %v452 = vunpack.c.h.bf16 %v179
    %v453 = vunpack.c.l.bf16 %v180
    %v454 = vunpack.c.h.bf16 %v180
    %v455 = vunpack.c.l.bf16 %v181
    %v456 = vunpack.c.h.bf16 %v181
    %v457 = vunpack.c.l.bf16 %v182
    %v458 = vunpack.c.h.bf16 %v182
    %v459 = vunpack.c.l.bf16 %v183
    %v460 = vunpack.c.h.bf16 %v183
    %v461 = vunpack.c.l.bf16 %v184
    %v462 = vunpack.c.h.bf16 %v184
    %v463 = vunpack.c.l.bf16 %v185
    %v464 = vunpack.c.h.bf16 %v185
    %v465 = vunpack.c.l.bf16 %v186
    %v466 = vunpack.c.h.bf16 %v186
    %v467 = vunpack.c.l.bf16 %v187
    %v468 = vunpack.c.h.bf16 %v187
    %v469 = vunpack.c.l.bf16 %v188
    %v470 = vunpack.c.h.bf16 %v188
    %v471 = vunpack.c.l.bf16 %v189
    %v472 = vunpack.c.h.bf16 %v189
    %v473 = vunpack.c.l.bf16 %v190
    %v474 = vunpack.c.h.bf16 %v190
    %v475 = vunpack.c.l.bf16 %v191
    %v476 = vunpack.c.h.bf16 %v191
    %v477 = vunpack.c.l.bf16 %v192
    %v478 = vunpack.c.h.bf16 %v192
    %v479 = vunpack.c.l.bf16 %v193
    %v480 = vunpack.c.h.bf16 %v193
    %v481 = vunpack.c.l.bf16 %v194
    %v482 = vunpack.c.h.bf16 %v194
    %v483 = vunpack.c.l.bf16 %v195
    %v484 = vunpack.c.h.bf16 %v195
    %v485 = vunpack.c.l.bf16 %v196
    %v486 = vunpack.c.h.bf16 %v196
    %v487 = vunpack.c.l.bf16 %v197
    %v488 = vunpack.c.h.bf16 %v197
    %v489 = vunpack.c.l.bf16 %v198
    %v490 = vunpack.c.h.bf16 %v198
    %v491 = vunpack.c.l.bf16 %v199
    %v492 = vunpack.c.h.bf16 %v199
    %v493 = vunpack.c.l.bf16 %v200
    %v494 = vunpack.c.h.bf16 %v200
    %v495 = vunpack.c.l.bf16 %v201
    %v496 = vunpack.c.h.bf16 %v201
    %v497 = vunpack.c.l.bf16 %v202
    %v498 = vunpack.c.h.bf16 %v202
    %v499 = vunpack.c.l.bf16 %v203
    %v500 = vunpack.c.h.bf16 %v203
    %v501 = vunpack.c.l.bf16 %v204
    %v502 = vunpack.c.h.bf16 %v204
    %v503 = vunpack.c.l.bf16 %v205
    %v504 = vunpack.c.h.bf16 %v205
    %v505 = vunpack.c.l.bf16 %v206
    %v506 = vunpack.c.h.bf16 %v206
    %v507 = vunpack.c.l.bf16 %v207
    %v508 = vunpack.c.h.bf16 %v207
    %v509 = vunpack.c.l.bf16 %v208
    %v510 = vunpack.c.h.bf16 %v208
    %v511 = vunpack.c.l.bf16 %v209
    %v512 = vunpack.c.h.bf16 %v209
    %v513 = vunpack.c.l.bf16 %v210
    %v514 = vunpack.c.h.bf16 %v210
    %v515 = vunpack.c.l.bf16 %v211
    %v516 = vunpack.c.h.bf16 %v211
    %v517 = vunpack.c.l.bf16 %v212
    %v518 = vunpack.c.h.bf16 %v212
    %v519 = vunpack.c.l.bf16 %v213
    %v520 = vunpack.c.h.bf16 %v213
    %v521 = vunpack.c.l.bf16 %v214
    %v522 = vunpack.c.h.bf16 %v214
    %v523 = vunpack.c.l.bf16 %v215
    %v524 = vunpack.c.h.bf16 %v215
    %v525 = vunpack.c.l.bf16 %v216
    %v526 = vunpack.c.h.bf16 %v216
    %v527 = vunpack.c.l.bf16 %v217
    %v528 = vunpack.c.h.bf16 %v217
    %v529 = vunpack.c.l.bf16 %v218
    %v530 = vunpack.c.h.bf16 %v218
    %v531 = vunpack.c.l.bf16 %v219
    %v532 = vunpack.c.h.bf16 %v219
    %v533 = vunpack.c.l.bf16 %v220
    %v534 = vunpack.c.h.bf16 %v220
    %v535 = vunpack.c.l.bf16 %v221
    %v536 = vunpack.c.h.bf16 %v221
    %v537 = vunpack.c.l.bf16 %v222
    %v538 = vunpack.c.h.bf16 %v222
    %v539 = vunpack.c.l.bf16 %v223
    %v540 = vunpack.c.h.bf16 %v223
    %v541 = vunpack.c.l.bf16 %v224
    %v542 = vunpack.c.h.bf16 %v224
    %v543 = vunpack.c.l.bf16 %v225
    %v544 = vunpack.c.h.bf16 %v225
    %v545 = vunpack.c.l.bf16 %v226
    %v546 = vunpack.c.h.bf16 %v226
    %v547 = vunpack.c.l.bf16 %v227
    %v548 = vunpack.c.h.bf16 %v227
    %v549 = vunpack.c.l.bf16 %v228
    %v550 = vunpack.c.h.bf16 %v228
    %v551 = vunpack.c.l.bf16 %v229
    %v552 = vunpack.c.h.bf16 %v229
    %v553 = vunpack.c.l.bf16 %v230
    %v554 = vunpack.c.h.bf16 %v230
    %v555 = vunpack.c.l.bf16 %v231
    %v556 = vunpack.c.h.bf16 %v231
    %v557 = vunpack.c.l.bf16 %v232
    %v558 = vunpack.c.h.bf16 %v232
    %v559 = vunpack.c.l.bf16 %v233
    %v560 = vunpack.c.h.bf16 %v233
    %v561 = vunpack.c.l.bf16 %v234
    %v562 = vunpack.c.h.bf16 %v234
    %v563 = vunpack.c.l.bf16 %v235
    %v564 = vunpack.c.h.bf16 %v235
    %v565 = vunpack.c.l.bf16 %v236
    %v566 = vunpack.c.h.bf16 %v236
    %v567 = vunpack.c.l.bf16 %v237
    %v568 = vunpack.c.h.bf16 %v237
    %v569 = vunpack.c.l.bf16 %v238
    %v570 = vunpack.c.h.bf16 %v238
    %v571 = vunpack.c.l.bf16 %v239
    %v572 = vunpack.c.h.bf16 %v239
    %v573 = vunpack.c.l.bf16 %v240
    %v574 = vunpack.c.h.bf16 %v240
    %v575 = vunpack.c.l.bf16 %v241
    %v576 = vunpack.c.h.bf16 %v241
    %v577 = vunpack.c.l.bf16 %v242
    %v578 = vunpack.c.h.bf16 %v242
    %v579 = vunpack.c.l.bf16 %v243
    %v580 = vunpack.c.h.bf16 %v243
    %v581 = vunpack.c.l.bf16 %v244
    %v582 = vunpack.c.h.bf16 %v244
    %v583 = vunpack.c.l.bf16 %v245
    %v584 = vunpack.c.h.bf16 %v245
    %v585 = vunpack.c.l.bf16 %v246
    %v586 = vunpack.c.h.bf16 %v246
    %v587 = vunpack.c.l.bf16 %v247
    %v588 = vunpack.c.h.bf16 %v247
    %v589 = vunpack.c.l.bf16 %v248
    %v590 = vunpack.c.h.bf16 %v248
    %v591 = vunpack.c.l.bf16 %v249
    %v592 = vunpack.c.h.bf16 %v249
    %v593 = vunpack.c.l.bf16 %v250
    %v594 = vunpack.c.h.bf16 %v250
    %v595 = vunpack.c.l.bf16 %v251
    %v596 = vunpack.c.h.bf16 %v251
    %v597 = vunpack.c.l.bf16 %v252
    %v598 = vunpack.c.h.bf16 %v252
    %v599 = vunpack.c.l.bf16 %v253
    %v600 = vunpack.c.h.bf16 %v253
    %v601 = vunpack.c.l.bf16 %v254
    %v602 = vunpack.c.h.bf16 %v254
    %v603 = vunpack.c.l.bf16 %v255
    %v604 = vunpack.c.h.bf16 %v255
    %v605 = vunpack.c.l.bf16 %v256
    %v606 = vunpack.c.h.bf16 %v256
    %v607 = vunpack.c.l.bf16 %v257
    %v608 = vunpack.c.h.bf16 %v257
    %v609 = vunpack.c.l.bf16 %v258
    %v610 = vunpack.c.h.bf16 %v258
    %v611 = vunpack.c.l.bf16 %v259
    %v612 = vunpack.c.h.bf16 %v259
    %v613 = vunpack.c.l.bf16 %v260
    %v614 = vunpack.c.h.bf16 %v260
    %v615 = vunpack.c.l.bf16 %v261
    %v616 = vunpack.c.h.bf16 %v261
    %v617 = vunpack.c.l.bf16 %v262
    %v618 = vunpack.c.h.bf16 %v262
    %v619 = vunpack.c.l.bf16 %v263
    %v620 = vunpack.c.h.bf16 %v263
    %v621 = vunpack.c.l.bf16 %v264
    %v622 = vunpack.c.h.bf16 %v264
    %v623 = vunpack.c.l.bf16 %v265
    %v624 = vunpack.c.h.bf16 %v265
    %v625 = vunpack.c.l.bf16 %v266
    %v626 = vunpack.c.h.bf16 %v266
    %v627 = vunpack.c.l.bf16 %v267
    %v628 = vunpack.c.h.bf16 %v267
    %v629 = vunpack.c.l.bf16 %v268
    %v630 = vunpack.c.h.bf16 %v268
    %v631 = vunpack.c.l.bf16 %v269
    %v632 = vunpack.c.h.bf16 %v269
    %v633 = vunpack.c.l.bf16 %v270
    %v634 = vunpack.c.h.bf16 %v270
    %v635 = vunpack.c.l.bf16 %v271
    %v636 = vunpack.c.h.bf16 %v271
    %v637 = vunpack.c.l.bf16 %v272
    %v638 = vunpack.c.h.bf16 %v272
    %v639 = vunpack.c.l.bf16 %v273
    %v640 = vunpack.c.h.bf16 %v273
    %v641 = vunpack.c.l.bf16 %v274
    %v642 = vunpack.c.h.bf16 %v274
    %v643 = vunpack.c.l.bf16 %v275
    %v644 = vunpack.c.h.bf16 %v275
    %v645 = vunpack.c.l.bf16 %v276
    %v646 = vunpack.c.h.bf16 %v276
    %v647 = vunpack.c.l.bf16 %v277
    %v648 = vunpack.c.h.bf16 %v277
    %v649 = vunpack.c.l.bf16 %v278
    %v650 = vunpack.c.h.bf16 %v278
    %v651 = vunpack.c.l.bf16 %v279
    %v652 = vunpack.c.h.bf16 %v279
    %v653 = vunpack.c.l.bf16 %v280
    %v654 = vunpack.c.h.bf16 %v280
    %v655 = vunpack.c.l.bf16 %v281
    %v656 = vunpack.c.h.bf16 %v281
    %v657 = vunpack.c.l.bf16 %v282
    %v658 = vunpack.c.h.bf16 %v282
    %v659 = vunpack.c.l.bf16 %v283
    %v660 = vunpack.c.h.bf16 %v283
    %v661 = vunpack.c.l.bf16 %v284
    %v662 = vunpack.c.h.bf16 %v284
    %v663 = vunpack.c.l.bf16 %v285
    %v664 = vunpack.c.h.bf16 %v285
    %v665 = vunpack.c.l.bf16 %v286
    %v666 = vunpack.c.h.bf16 %v286
    %v667 = vunpack.c.l.bf16 %v287
    %v668 = vunpack.c.h.bf16 %v287
    %v669 = vunpack.c.l.bf16 %v288
    %v670 = vunpack.c.h.bf16 %v288
    %v671 = vunpack.c.l.bf16 %v289
    %v672 = vunpack.c.h.bf16 %v289
    %v673 = vunpack.c.l.bf16 %v290
    %v674 = vunpack.c.h.bf16 %v290
    %v675 = vunpack.c.l.bf16 %v291
    %v676 = vunpack.c.h.bf16 %v291
    %v677 = vunpack.c.l.bf16 %v292
    %v678 = vunpack.c.h.bf16 %v292
    %v679 = vunpack.c.l.bf16 %v293
    %v680 = vunpack.c.h.bf16 %v293
    %v681 = vunpack.c.l.bf16 %v294
    %v682 = vunpack.c.h.bf16 %v294
    %v683 = vunpack.c.l.bf16 %v295
    %v684 = vunpack.c.h.bf16 %v295
    %v685 = vunpack.c.l.bf16 %v296
    %v686 = vunpack.c.h.bf16 %v296
    %v687 = vunpack.c.l.bf16 %v297
    %v688 = vunpack.c.h.bf16 %v297
    %v689 = vunpack.c.l.bf16 %v298
    %v690 = vunpack.c.h.bf16 %v298
    %v691 = vunpack.c.l.bf16 %v299
    %v692 = vunpack.c.h.bf16 %v299
    %v693 = vunpack.c.l.bf16 %v300
    %v694 = vunpack.c.h.bf16 %v300
    %v695 = vunpack.c.l.bf16 %v301
    %v696 = vunpack.c.h.bf16 %v301
    %v697 = vunpack.c.l.bf16 %v302
    %v698 = vunpack.c.h.bf16 %v302
    %v699 = vunpack.c.l.bf16 %v303
    %v700 = vunpack.c.h.bf16 %v303
    %v701 = vunpack.c.l.bf16 %v304
    %v702 = vunpack.c.h.bf16 %v304
    %v703 = vunpack.c.l.bf16 %v305
    %v704 = vunpack.c.h.bf16 %v305
    %v705 = vunpack.c.l.bf16 %v306
    %v706 = vunpack.c.h.bf16 %v306
    %v707 = vunpack.c.l.bf16 %v307
    %v708 = vunpack.c.h.bf16 %v307
    %v709 = vunpack.c.l.bf16 %v308
    %v710 = vunpack.c.h.bf16 %v308
    %v711 = vunpack.c.l.bf16 %v309
    %v712 = vunpack.c.h.bf16 %v309
    %v713 = vunpack.c.l.bf16 %v310
    %v714 = vunpack.c.h.bf16 %v310
    %v715 = vunpack.c.l.bf16 %v311
    %v716 = vunpack.c.h.bf16 %v311
    %v717 = vunpack.c.l.bf16 %v312
    %v718 = vunpack.c.h.bf16 %v312
    %v719 = vunpack.c.l.bf16 %v313
    %v720 = vunpack.c.h.bf16 %v313
    %v721 = vunpack.c.l.bf16 %v314
    %v722 = vunpack.c.h.bf16 %v314
    %v723 = vunpack.c.l.bf16 %v315
    %v724 = vunpack.c.h.bf16 %v315
    %v725 = vunpack.c.l.bf16 %v316
    %v726 = vunpack.c.h.bf16 %v316
    %v727 = vunpack.c.l.bf16 %v317
    %v728 = vunpack.c.h.bf16 %v317
    %v729 = vunpack.c.l.bf16 %v318
    %v730 = vunpack.c.h.bf16 %v318
    %v731 = vunpack.c.l.bf16 %v319
    %v732 = vunpack.c.h.bf16 %v319
    %v733 = vunpack.c.l.bf16 %v320
    %v734 = vunpack.c.h.bf16 %v320
    %v735 = vunpack.c.l.bf16 %v321
    %v736 = vunpack.c.h.bf16 %v321
    %v737 = vunpack.c.l.bf16 %v322
    %v738 = vunpack.c.h.bf16 %v322
    %v739 = vunpack.c.l.bf16 %v323
    %v740 = vunpack.c.h.bf16 %v323
    %v741 = vunpack.c.l.bf16 %v324
    %v742 = vunpack.c.h.bf16 %v324
    %v743 = vunpack.c.l.bf16 %v325
    %v744 = vunpack.c.h.bf16 %v325
    %v745 = vunpack.c.l.bf16 %v326
    %v746 = vunpack.c.h.bf16 %v326
    %v747 = vunpack.c.l.bf16 %v327
    %v748 = vunpack.c.h.bf16 %v327
    %v749 = vunpack.c.l.bf16 %v328
    %v750 = vunpack.c.h.bf16 %v328
    %v751 = vunpack.c.l.bf16 %v329
    %v752 = vunpack.c.h.bf16 %v329
    %v753 = vunpack.c.l.bf16 %v330
    %v754 = vunpack.c.h.bf16 %v330
    %v755 = vunpack.c.l.bf16 %v331
    %v756 = vunpack.c.h.bf16 %v331
    %v757 = vunpack.c.l.bf16 %v332
    %v758 = vunpack.c.h.bf16 %v332
    %v759 = vunpack.c.l.bf16 %v333
    %v760 = vunpack.c.h.bf16 %v333
    %v761 = vunpack.c.l.bf16 %v334
    %v762 = vunpack.c.h.bf16 %v334
    %v763 = vunpack.c.l.bf16 %v335
    %v764 = vunpack.c.h.bf16 %v335
    %v765 = vunpack.c.l.bf16 %v336
    %v766 = vunpack.c.h.bf16 %v336
    %v767 = vunpack.c.l.bf16 %v337
    %v768 = vunpack.c.h.bf16 %v337
    %v769 = vunpack.c.l.bf16 %v338
    %v770 = vunpack.c.h.bf16 %v338
    %v771 = vunpack.c.l.bf16 %v339
    %v772 = vunpack.c.h.bf16 %v339
    %v773 = vunpack.c.l.bf16 %v340
    %v774 = vunpack.c.h.bf16 %v340
    %v775 = vunpack.c.l.bf16 %v341
    %v776 = vunpack.c.h.bf16 %v341
    %v777 = vunpack.c.l.bf16 %v342
    %v778 = vunpack.c.h.bf16 %v342
    %v779 = vunpack.c.l.bf16 %v343
    %v780 = vunpack.c.h.bf16 %v343
    %v781 = vunpack.c.l.bf16 %v344
    %v782 = vunpack.c.h.bf16 %v344
    %v783 = vunpack.c.l.bf16 %v345
    %v784 = vunpack.c.h.bf16 %v345
    %v785 = vunpack.c.l.bf16 %v346
    %v786 = vunpack.c.h.bf16 %v346
    %v787 = vunpack.c.l.bf16 %v347
    %v788 = vunpack.c.h.bf16 %v347
    %v789 = vunpack.c.l.bf16 %v348
    %v790 = vunpack.c.h.bf16 %v348
    %v791 = vunpack.c.l.bf16 %v349
    %v792 = vunpack.c.h.bf16 %v349
    %v793 = vunpack.c.l.bf16 %v350
    %v794 = vunpack.c.h.bf16 %v350
    %v795 = vunpack.c.l.bf16 %v351
    %v796 = vunpack.c.h.bf16 %v351
    %v797 = vunpack.c.l.bf16 %v352
    %v798 = vunpack.c.h.bf16 %v352
    %v799 = vunpack.c.l.bf16 %v353
    %v800 = vunpack.c.h.bf16 %v353
    %v801 = vunpack.c.l.bf16 %v354
    %v802 = vunpack.c.h.bf16 %v354
    %v803 = vunpack.c.l.bf16 %v355
    %v804 = vunpack.c.h.bf16 %v355
    %v805 = vunpack.c.l.bf16 %v356
    %v806 = vunpack.c.h.bf16 %v356
    %v807 = vunpack.c.l.bf16 %v357
    %v808 = vunpack.c.h.bf16 %v357
    %v809 = vunpack.c.l.bf16 %v358
    %v810 = vunpack.c.h.bf16 %v358
    %v811 = vunpack.c.l.bf16 %v359
    %v812 = vunpack.c.h.bf16 %v359
    %v813 = vunpack.c.l.bf16 %v360
    %v814 = vunpack.c.h.bf16 %v360
    %v815 = vunpack.c.l.bf16 %v361
    %v816 = vunpack.c.h.bf16 %v361
    %v817 = vunpack.c.l.bf16 %v362
    %v818 = vunpack.c.h.bf16 %v362
    %v819 = vunpack.c.l.bf16 %v363
    %v820 = vunpack.c.h.bf16 %v363
    %v821 = vunpack.c.l.bf16 %v364
    %v822 = vunpack.c.h.bf16 %v364
    %v823 = vunpack.c.l.bf16 %v365
    %v824 = vunpack.c.h.bf16 %v365
    %v825 = vunpack.c.l.bf16 %v366
    %v826 = vunpack.c.h.bf16 %v366
    %v827 = vunpack.c.l.bf16 %v367
    %v828 = vunpack.c.h.bf16 %v367
    %v829 = vunpack.c.l.bf16 %v368
    %v830 = vunpack.c.h.bf16 %v368
    %v831 = vunpack.c.l.bf16 %v369
    %v832 = vunpack.c.h.bf16 %v369
    %v833 = vunpack.c.l.bf16 %v370
    %v834 = vunpack.c.h.bf16 %v370
    %v835 = vunpack.c.l.bf16 %v371
    %v836 = vunpack.c.h.bf16 %v371
    %v837 = vunpack.c.l.bf16 %v372
    %v838 = vunpack.c.h.bf16 %v372
    %v839 = vunpack.c.l.bf16 %v373
    %v840 = vunpack.c.h.bf16 %v373
    %v841 = vunpack.c.l.bf16 %v374
    %v842 = vunpack.c.h.bf16 %v374
    %v843 = vunpack.c.l.bf16 %v375
    %v844 = vunpack.c.h.bf16 %v375
    %v845 = vunpack.c.l.bf16 %v376
    %v846 = vunpack.c.h.bf16 %v376
    %v847 = vunpack.c.l.bf16 %v377
    %v848 = vunpack.c.h.bf16 %v377
    %v849 = vunpack.c.l.bf16 %v378
    %v850 = vunpack.c.h.bf16 %v378
    %v851 = vunpack.c.l.bf16 %v379
    %v852 = vunpack.c.h.bf16 %v379
    %v853 = vunpack.c.l.bf16 %v380
    %v854 = vunpack.c.h.bf16 %v380
    %v855 = vunpack.c.l.bf16 %v381
    %v856 = vunpack.c.h.bf16 %v381
    %v857 = vunpack.c.l.bf16 %v382
    %v858 = vunpack.c.h.bf16 %v382
    %v859 = vunpack.c.l.bf16 %v383
    %v860 = vunpack.c.h.bf16 %v383
    %v861 = vunpack.c.l.bf16 %v384
    %v862 = vunpack.c.h.bf16 %v384
    %v863 = vunpack.c.l.bf16 %v385
    %v864 = vunpack.c.h.bf16 %v385
    %v865 = vunpack.c.l.bf16 %v386
    %v866 = vunpack.c.h.bf16 %v386
    %v867 = vunpack.c.l.bf16 %v387
    %v868 = vunpack.c.h.bf16 %v387
    %v869 = vunpack.c.l.bf16 %v388
    %v870 = vunpack.c.h.bf16 %v388
    %v871 = vunpack.c.l.bf16 %v389
    %v872 = vunpack.c.h.bf16 %v389
    %v873 = vunpack.c.l.bf16 %v390
    %v874 = vunpack.c.h.bf16 %v390
    %v875 = vunpack.c.l.bf16 %v391
    %v876 = vunpack.c.h.bf16 %v391
    %v877 = vunpack.c.l.bf16 %v392
    %v878 = vunpack.c.h.bf16 %v392
    %v879 = vunpack.c.l.bf16 %v393
    %v880 = vunpack.c.h.bf16 %v393
    %v881 = vunpack.c.l.bf16 %v394
    %v882 = vunpack.c.h.bf16 %v394
    %v883 = vunpack.c.l.bf16 %v395
    %v884 = vunpack.c.h.bf16 %v395
    %v885 = vunpack.c.l.bf16 %v396
    %v886 = vunpack.c.h.bf16 %v396
    %v887 = vunpack.c.l.bf16 %v397
    %v888 = vunpack.c.h.bf16 %v397
    %v889 = vunpack.c.l.bf16 %v398
    %v890 = vunpack.c.h.bf16 %v398
    %v891 = vunpack.c.l.bf16 %v399
    %v892 = vunpack.c.h.bf16 %v399
    %v893 = vunpack.c.l.bf16 %v400
    %v894 = vunpack.c.h.bf16 %v400
    %v895 = vunpack.c.l.bf16 %v401
    %v896 = vunpack.c.h.bf16 %v401
    %v897 = vunpack.c.l.bf16 %v402
    %v898 = vunpack.c.h.bf16 %v402
    %v899 = vunpack.c.l.bf16 %v403
    %v900 = vunpack.c.h.bf16 %v403
    %v901 = vunpack.c.l.bf16 %v404
    %v902 = vunpack.c.h.bf16 %v404
    %v903 = vunpack.c.l.bf16 %v405
    %v904 = vunpack.c.h.bf16 %v405
    %v905 = vunpack.c.l.bf16 %v406
    %v906 = vunpack.c.h.bf16 %v406
    %v907 = vunpack.c.l.bf16 %v407
    %v908 = vunpack.c.h.bf16 %v407
    %v909 = vunpack.c.l.bf16 %v408
    %v910 = vunpack.c.h.bf16 %v408
    %v911 = vunpack.c.l.bf16 %v409
    %v912 = vunpack.c.h.bf16 %v409
    %v913 = vunpack.c.l.bf16 %v410
    %v914 = vunpack.c.h.bf16 %v410
    %v915 = vunpack.c.l.bf16 %v411
    %v916 = vunpack.c.h.bf16 %v411
    %v917 = vunpack.c.l.bf16 %v412
    %v918 = vunpack.c.h.bf16 %v412
    %v919 = vunpack.c.l.bf16 %v413
    %v920 = vunpack.c.h.bf16 %v413
    %v921 = vunpack.c.l.bf16 %v414
    %v922 = vunpack.c.h.bf16 %v414
    %v923 = vunpack.c.l.bf16 %v415
    %v924 = vunpack.c.h.bf16 %v415
    %v925 = vunpack.c.l.bf16 %v416
    %v926 = vunpack.c.h.bf16 %v416
    %v927 = vunpack.c.l.bf16 %v417
    %v928 = vunpack.c.h.bf16 %v417
    %v929 = vunpack.c.l.bf16 %v418
    %v930 = vunpack.c.h.bf16 %v418
    %v931 = vld [vmem:[#allocation9] sm:$0xf]
    %v933 = vlaneseq
    %v934 = vshrl.u32 %v933, 7
    %v935 = vsub.s32 0, %v934
    %v936 = vrot.slane %v931, %v935
    %v937 = vlaneseq
    %v938 = vshrl.u32 %v937, 7
    %v939 = vsub.s32 1, %v938
    %v940 = vrot.slane %v931, %v939
    %v941 = vlaneseq
    %v942 = vshrl.u32 %v941, 7
    %v943 = vsub.s32 2, %v942
    %v944 = vrot.slane %v931, %v943
    %v945 = vlaneseq
    %v946 = vshrl.u32 %v945, 7
    %v947 = vsub.s32 3, %v946
    %v948 = vrot.slane %v931, %v947
    %953 = vmatprep.subr.mxu0 %v480
    %954 = vmatpush1.msra.mxu0 %v479
    %955 = vmatprep.subr.mxu0 %v476
    %956 = vmatpush1.msra.mxu0 %v475
    %957 = vmatprep.subr.mxu0 %v472
    %958 = vmatpush1.msra.mxu0 %v471
    %959 = vmatprep.subr.mxu0 %v468
    %960 = vmatpush1.msra.mxu0 %v467
    %961 = vmatprep.subr.mxu0 %v464
    %962 = vmatpush1.msra.mxu0 %v463
    %963 = vmatprep.subr.mxu0 %v460
    %964 = vmatpush1.msra.mxu0 %v459
    %965 = vmatprep.subr.mxu0 %v456
    %966 = vmatpush1.msra.mxu0 %v455
    %967 = vmatprep.subr.mxu0 %v452
    %968 = vmatpush1.msra.mxu0 %v451
    %969 = vmatprep.subr.mxu0 %v448
    %970 = vmatpush1.msra.mxu0 %v447
    %971 = vmatprep.subr.mxu0 %v444
    %972 = vmatpush1.msra.mxu0 %v443
    %973 = vmatprep.subr.mxu0 %v440
    %974 = vmatpush1.msra.mxu0 %v439
    %975 = vmatprep.subr.mxu0 %v436
    %976 = vmatpush1.msra.mxu0 %v435
    %977 = vmatprep.subr.mxu0 %v432
    %978 = vmatpush1.msra.mxu0 %v431
    %979 = vmatprep.subr.mxu0 %v428
    %980 = vmatpush1.msra.mxu0 %v427
    %981 = vmatprep.subr.mxu0 %v424
    %982 = vmatpush1.msra.mxu0 %v423
    %983 = vmatprep.subr.mxu0 %v420
    %984 = vmatpush1.msra.mxu0 %v419
    %985 = vmatprep.subr.mxu0 %v544
    %986 = vmatpush2.msra.mxu0 %v543
    %987 = vmatprep.subr.mxu0 %v540
    %988 = vmatpush2.msra.mxu0 %v539
    %989 = vmatprep.subr.mxu0 %v536
    %990 = vmatpush2.msra.mxu0 %v535
    %991 = vmatprep.subr.mxu0 %v532
    %992 = vmatpush2.msra.mxu0 %v531
    %993 = vmatprep.subr.mxu0 %v528
    %994 = vmatpush2.msra.mxu0 %v527
    %995 = vmatprep.subr.mxu0 %v524
    %996 = vmatpush2.msra.mxu0 %v523
    %997 = vmatprep.subr.mxu0 %v520
    %998 = vmatpush2.msra.mxu0 %v519
    %999 = vmatprep.subr.mxu0 %v516
    %1000 = vmatpush2.msra.mxu0 %v515
    %1001 = vmatprep.subr.mxu0 %v512
    %1002 = vmatpush2.msra.mxu0 %v511
    %1003 = vmatprep.subr.mxu0 %v508
    %1004 = vmatpush2.msra.mxu0 %v507
    %1005 = vmatprep.subr.mxu0 %v504
    %1006 = vmatpush2.msra.mxu0 %v503
    %1007 = vmatprep.subr.mxu0 %v500
    %1008 = vmatpush2.msra.mxu0 %v499
    %1009 = vmatprep.subr.mxu0 %v496
    %1010 = vmatpush2.msra.mxu0 %v495
    %1011 = vmatprep.subr.mxu0 %v492
    %1012 = vmatpush2.msra.mxu0 %v491
    %1013 = vmatprep.subr.mxu0 %v488
    %1014 = vmatpush2.msra.mxu0 %v487
    %1015 = vmatprep.subr.mxu0 %v484
    %1016 = vmatpush2.msra.mxu0 %v483
    %1017 = vmatprep.mubr.f32.mxu0 %v148
    %1018 = vmatmul.mubr.f32.gmra.mxu0 %v147
    %v1019 = vpop.f32.mrf.mxu0
    %v1020 = vadd.f32 %v936, %v1019
    %v1021 = vpop.f32.mrf.mxu0
    %v1022 = vadd.f32 %v940, %v1021
    %1023 = vmatprep.mubr.f32.mxu0 %v156
    %1024 = vmatmul.mubr.f32.gmra.mxu0 %v155
    %v1025 = vpop.f32.mrf.mxu0
    %v1026 = vadd.f32 %v936, %v1025
    %v1027 = vpop.f32.mrf.mxu0
    %v1028 = vadd.f32 %v940, %v1027
    %1029 = vdwg.mxu0
    %1030 = vmatprep.subr.mxu0 %v608
    %1031 = vmatpush1.msra.mxu0 %v607
    %1032 = vmatprep.subr.mxu0 %v604
    %1033 = vmatpush1.msra.mxu0 %v603
    %1034 = vmatprep.subr.mxu0 %v600
    %1035 = vmatpush1.msra.mxu0 %v599
    %1036 = vmatprep.subr.mxu0 %v596
    %1037 = vmatpush1.msra.mxu0 %v595
    %1038 = vmatprep.subr.mxu0 %v592
    %1039 = vmatpush1.msra.mxu0 %v591
    %1040 = vmatprep.subr.mxu0 %v588
    %1041 = vmatpush1.msra.mxu0 %v587
    %1042 = vmatprep.subr.mxu0 %v584
    %1043 = vmatpush1.msra.mxu0 %v583
    %1044 = vmatprep.subr.mxu0 %v580
    %1045 = vmatpush1.msra.mxu0 %v579
    %1046 = vmatprep.subr.mxu0 %v576
    %1047 = vmatpush1.msra.mxu0 %v575
    %1048 = vmatprep.subr.mxu0 %v572
    %1049 = vmatpush1.msra.mxu0 %v571
    %1050 = vmatprep.subr.mxu0 %v568
    %1051 = vmatpush1.msra.mxu0 %v567
    %1052 = vmatprep.subr.mxu0 %v564
    %1053 = vmatpush1.msra.mxu0 %v563
    %1054 = vmatprep.subr.mxu0 %v560
    %1055 = vmatpush1.msra.mxu0 %v559
    %1056 = vmatprep.subr.mxu0 %v556
    %1057 = vmatpush1.msra.mxu0 %v555
    %1058 = vmatprep.subr.mxu0 %v552
    %1059 = vmatpush1.msra.mxu0 %v551
    %1060 = vmatprep.subr.mxu0 %v548
    %1061 = vmatpush1.msra.mxu0 %v547
    %1062 = vmatprep.subr.mxu0 %v672
    %1063 = vmatpush2.msra.mxu0 %v671
    %1064 = vmatprep.subr.mxu0 %v668
    %1065 = vmatpush2.msra.mxu0 %v667
    %1066 = vmatprep.subr.mxu0 %v664
    %1067 = vmatpush2.msra.mxu0 %v663
    %1068 = vmatprep.subr.mxu0 %v660
    %1069 = vmatpush2.msra.mxu0 %v659
    %1070 = vmatprep.subr.mxu0 %v656
    %1071 = vmatpush2.msra.mxu0 %v655
    %1072 = vmatprep.subr.mxu0 %v652
    %1073 = vmatpush2.msra.mxu0 %v651
    %1074 = vmatprep.subr.mxu0 %v648
    %1075 = vmatpush2.msra.mxu0 %v647
    %1076 = vmatprep.subr.mxu0 %v644
    %1077 = vmatpush2.msra.mxu0 %v643
    %1078 = vmatprep.subr.mxu0 %v640
    %1079 = vmatpush2.msra.mxu0 %v639
    %1080 = vmatprep.subr.mxu0 %v636
    %1081 = vmatpush2.msra.mxu0 %v635
    %1082 = vmatprep.subr.mxu0 %v632
    %1083 = vmatpush2.msra.mxu0 %v631
    %1084 = vmatprep.subr.mxu0 %v628
    %1085 = vmatpush2.msra.mxu0 %v627
    %1086 = vmatprep.subr.mxu0 %v624
    %1087 = vmatpush2.msra.mxu0 %v623
    %1088 = vmatprep.subr.mxu0 %v620
    %1089 = vmatpush2.msra.mxu0 %v619
    %1090 = vmatprep.subr.mxu0 %v616
    %1091 = vmatpush2.msra.mxu0 %v615
    %1092 = vmatprep.subr.mxu0 %v612
    %1093 = vmatpush2.msra.mxu0 %v611
    %1094 = vmatprep.mubr.f32.mxu0 %v150
    %1095 = vmatmul.mubr.f32.gmra.mxu0 %v149
    %v1096 = vpop.f32.mrf.mxu0
    %v1097 = vadd.f32 %v1020, %v1096
    %v1098 = vpop.f32.mrf.mxu0
    %v1099 = vadd.f32 %v1022, %v1098
    %1100 = vmatprep.mubr.f32.mxu0 %v158
    %1101 = vmatmul.mubr.f32.gmra.mxu0 %v157
    %v1102 = vpop.f32.mrf.mxu0
    %v1103 = vadd.f32 %v1026, %v1102
    %v1104 = vpop.f32.mrf.mxu0
    %v1105 = vadd.f32 %v1028, %v1104
    %1106 = vdwg.mxu0
    %1107 = vmatprep.subr.mxu0 %v736
    %1108 = vmatpush1.msra.mxu0 %v735
    %1109 = vmatprep.subr.mxu0 %v732
    %1110 = vmatpush1.msra.mxu0 %v731
    %1111 = vmatprep.subr.mxu0 %v728
    %1112 = vmatpush1.msra.mxu0 %v727
    %1113 = vmatprep.subr.mxu0 %v724
    %1114 = vmatpush1.msra.mxu0 %v723
    %1115 = vmatprep.subr.mxu0 %v720
    %1116 = vmatpush1.msra.mxu0 %v719
    %1117 = vmatprep.subr.mxu0 %v716
    %1118 = vmatpush1.msra.mxu0 %v715
    %1119 = vmatprep.subr.mxu0 %v712
    %1120 = vmatpush1.msra.mxu0 %v711
    %1121 = vmatprep.subr.mxu0 %v708
    %1122 = vmatpush1.msra.mxu0 %v707
    %1123 = vmatprep.subr.mxu0 %v704
    %1124 = vmatpush1.msra.mxu0 %v703
    %1125 = vmatprep.subr.mxu0 %v700
    %1126 = vmatpush1.msra.mxu0 %v699
    %1127 = vmatprep.subr.mxu0 %v696
    %1128 = vmatpush1.msra.mxu0 %v695
    %1129 = vmatprep.subr.mxu0 %v692
    %1130 = vmatpush1.msra.mxu0 %v691
    %1131 = vmatprep.subr.mxu0 %v688
    %1132 = vmatpush1.msra.mxu0 %v687
    %1133 = vmatprep.subr.mxu0 %v684
    %1134 = vmatpush1.msra.mxu0 %v683
    %1135 = vmatprep.subr.mxu0 %v680
    %1136 = vmatpush1.msra.mxu0 %v679
    %1137 = vmatprep.subr.mxu0 %v676
    %1138 = vmatpush1.msra.mxu0 %v675
    %1139 = vmatprep.subr.mxu0 %v800
    %1140 = vmatpush2.msra.mxu0 %v799
    %1141 = vmatprep.subr.mxu0 %v796
    %1142 = vmatpush2.msra.mxu0 %v795
    %1143 = vmatprep.subr.mxu0 %v792
    %1144 = vmatpush2.msra.mxu0 %v791
    %1145 = vmatprep.subr.mxu0 %v788
    %1146 = vmatpush2.msra.mxu0 %v787
    %1147 = vmatprep.subr.mxu0 %v784
    %1148 = vmatpush2.msra.mxu0 %v783
    %1149 = vmatprep.subr.mxu0 %v780
    %1150 = vmatpush2.msra.mxu0 %v779
    %1151 = vmatprep.subr.mxu0 %v776
    %1152 = vmatpush2.msra.mxu0 %v775
    %1153 = vmatprep.subr.mxu0 %v772
    %1154 = vmatpush2.msra.mxu0 %v771
    %1155 = vmatprep.subr.mxu0 %v768
    %1156 = vmatpush2.msra.mxu0 %v767
    %1157 = vmatprep.subr.mxu0 %v764
    %1158 = vmatpush2.msra.mxu0 %v763
    %1159 = vmatprep.subr.mxu0 %v760
    %1160 = vmatpush2.msra.mxu0 %v759
    %1161 = vmatprep.subr.mxu0 %v756
    %1162 = vmatpush2.msra.mxu0 %v755
    %1163 = vmatprep.subr.mxu0 %v752
    %1164 = vmatpush2.msra.mxu0 %v751
    %1165 = vmatprep.subr.mxu0 %v748
    %1166 = vmatpush2.msra.mxu0 %v747
    %1167 = vmatprep.subr.mxu0 %v744
    %1168 = vmatpush2.msra.mxu0 %v743
    %1169 = vmatprep.subr.mxu0 %v740
    %1170 = vmatpush2.msra.mxu0 %v739
    %1171 = vmatprep.mubr.f32.mxu0 %v152
    %1172 = vmatmul.mubr.f32.gmra.mxu0 %v151
    %v1173 = vpop.f32.mrf.mxu0
    %v1174 = vadd.f32 %v1097, %v1173
    %v1175 = vpop.f32.mrf.mxu0
    %v1176 = vadd.f32 %v1099, %v1175
    %1177 = vmatprep.mubr.f32.mxu0 %v160
    %1178 = vmatmul.mubr.f32.gmra.mxu0 %v159
    %v1179 = vpop.f32.mrf.mxu0
    %v1180 = vadd.f32 %v1103, %v1179
    %v1181 = vpop.f32.mrf.mxu0
    %v1182 = vadd.f32 %v1105, %v1181
    %1183 = vdwg.mxu0
    %1184 = vmatprep.subr.mxu0 %v864
    %1185 = vmatpush1.msra.mxu0 %v863
    %1186 = vmatprep.subr.mxu0 %v860
    %1187 = vmatpush1.msra.mxu0 %v859
    %1188 = vmatprep.subr.mxu0 %v856
    %1189 = vmatpush1.msra.mxu0 %v855
    %1190 = vmatprep.subr.mxu0 %v852
    %1191 = vmatpush1.msra.mxu0 %v851
    %1192 = vmatprep.subr.mxu0 %v848
    %1193 = vmatpush1.msra.mxu0 %v847
    %1194 = vmatprep.subr.mxu0 %v844
    %1195 = vmatpush1.msra.mxu0 %v843
    %1196 = vmatprep.subr.mxu0 %v840
    %1197 = vmatpush1.msra.mxu0 %v839
    %1198 = vmatprep.subr.mxu0 %v836
    %1199 = vmatpush1.msra.mxu0 %v835
    %1200 = vmatprep.subr.mxu0 %v832
    %1201 = vmatpush1.msra.mxu0 %v831
    %1202 = vmatprep.subr.mxu0 %v828
    %1203 = vmatpush1.msra.mxu0 %v827
    %1204 = vmatprep.subr.mxu0 %v824
    %1205 = vmatpush1.msra.mxu0 %v823
    %1206 = vmatprep.subr.mxu0 %v820
    %1207 = vmatpush1.msra.mxu0 %v819
    %1208 = vmatprep.subr.mxu0 %v816
    %1209 = vmatpush1.msra.mxu0 %v815
    %1210 = vmatprep.subr.mxu0 %v812
    %1211 = vmatpush1.msra.mxu0 %v811
    %1212 = vmatprep.subr.mxu0 %v808
    %1213 = vmatpush1.msra.mxu0 %v807
    %1214 = vmatprep.subr.mxu0 %v804
    %1215 = vmatpush1.msra.mxu0 %v803
    %1216 = vmatprep.subr.mxu0 %v928
    %1217 = vmatpush2.msra.mxu0 %v927
    %1218 = vmatprep.subr.mxu0 %v924
    %1219 = vmatpush2.msra.mxu0 %v923
    %1220 = vmatprep.subr.mxu0 %v920
    %1221 = vmatpush2.msra.mxu0 %v919
    %1222 = vmatprep.subr.mxu0 %v916
    %1223 = vmatpush2.msra.mxu0 %v915
    %1224 = vmatprep.subr.mxu0 %v912
    %1225 = vmatpush2.msra.mxu0 %v911
    %1226 = vmatprep.subr.mxu0 %v908
    %1227 = vmatpush2.msra.mxu0 %v907
    %1228 = vmatprep.subr.mxu0 %v904
    %1229 = vmatpush2.msra.mxu0 %v903
    %1230 = vmatprep.subr.mxu0 %v900
    %1231 = vmatpush2.msra.mxu0 %v899
    %1232 = vmatprep.subr.mxu0 %v896
    %1233 = vmatpush2.msra.mxu0 %v895
    %1234 = vmatprep.subr.mxu0 %v892
    %1235 = vmatpush2.msra.mxu0 %v891
    %1236 = vmatprep.subr.mxu0 %v888
    %1237 = vmatpush2.msra.mxu0 %v887
    %1238 = vmatprep.subr.mxu0 %v884
    %1239 = vmatpush2.msra.mxu0 %v883
    %1240 = vmatprep.subr.mxu0 %v880
    %1241 = vmatpush2.msra.mxu0 %v879
    %1242 = vmatprep.subr.mxu0 %v876
    %1243 = vmatpush2.msra.mxu0 %v875
    %1244 = vmatprep.subr.mxu0 %v872
    %1245 = vmatpush2.msra.mxu0 %v871
    %1246 = vmatprep.subr.mxu0 %v868
    %1247 = vmatpush2.msra.mxu0 %v867
    %1248 = vmatprep.mubr.f32.mxu0 %v154
    %1249 = vmatmul.mubr.f32.gmra.mxu0 %v153
    %v1250 = vpop.f32.mrf.mxu0
    %v1251 = vadd.f32 %v1174, %v1250
    %v1252 = vpop.f32.mrf.mxu0
    %v1253 = vadd.f32 %v1176, %v1252
    %1254 = vmatprep.mubr.f32.mxu0 %v162
    %1255 = vmatmul.mubr.f32.gmra.mxu0 %v161
    %v1256 = vpop.f32.mrf.mxu0
    %v1257 = vadd.f32 %v1180, %v1256
    %v1258 = vpop.f32.mrf.mxu0
    %v1259 = vadd.f32 %v1182, %v1258
    %1260 = vdwg.mxu0
    %1261 = vmatprep.subr.mxu0 %v482
    %1262 = vmatpush1.msra.mxu0 %v481
    %1263 = vmatprep.subr.mxu0 %v478
    %1264 = vmatpush1.msra.mxu0 %v477
    %1265 = vmatprep.subr.mxu0 %v474
    %1266 = vmatpush1.msra.mxu0 %v473
    %1267 = vmatprep.subr.mxu0 %v470
    %1268 = vmatpush1.msra.mxu0 %v469
    %1269 = vmatprep.subr.mxu0 %v466
    %1270 = vmatpush1.msra.mxu0 %v465
    %1271 = vmatprep.subr.mxu0 %v462
    %1272 = vmatpush1.msra.mxu0 %v461
    %1273 = vmatprep.subr.mxu0 %v458
    %1274 = vmatpush1.msra.mxu0 %v457
    %1275 = vmatprep.subr.mxu0 %v454
    %1276 = vmatpush1.msra.mxu0 %v453
    %1277 = vmatprep.subr.mxu0 %v450
    %1278 = vmatpush1.msra.mxu0 %v449
    %1279 = vmatprep.subr.mxu0 %v446
    %1280 = vmatpush1.msra.mxu0 %v445
    %1281 = vmatprep.subr.mxu0 %v442
    %1282 = vmatpush1.msra.mxu0 %v441
    %1283 = vmatprep.subr.mxu0 %v438
    %1284 = vmatpush1.msra.mxu0 %v437
    %1285 = vmatprep.subr.mxu0 %v434
    %1286 = vmatpush1.msra.mxu0 %v433
    %1287 = vmatprep.subr.mxu0 %v430
    %1288 = vmatpush1.msra.mxu0 %v429
    %1289 = vmatprep.subr.mxu0 %v426
    %1290 = vmatpush1.msra.mxu0 %v425
    %1291 = vmatprep.subr.mxu0 %v422
    %1292 = vmatpush1.msra.mxu0 %v421
    %1293 = vmatprep.subr.mxu0 %v546
    %1294 = vmatpush2.msra.mxu0 %v545
    %1295 = vmatprep.subr.mxu0 %v542
    %1296 = vmatpush2.msra.mxu0 %v541
    %1297 = vmatprep.subr.mxu0 %v538
    %1298 = vmatpush2.msra.mxu0 %v537
    %1299 = vmatprep.subr.mxu0 %v534
    %1300 = vmatpush2.msra.mxu0 %v533
    %1301 = vmatprep.subr.mxu0 %v530
    %1302 = vmatpush2.msra.mxu0 %v529
    %1303 = vmatprep.subr.mxu0 %v526
    %1304 = vmatpush2.msra.mxu0 %v525
    %1305 = vmatprep.subr.mxu0 %v522
    %1306 = vmatpush2.msra.mxu0 %v521
    %1307 = vmatprep.subr.mxu0 %v518
    %1308 = vmatpush2.msra.mxu0 %v517
    %1309 = vmatprep.subr.mxu0 %v514
    %1310 = vmatpush2.msra.mxu0 %v513
    %1311 = vmatprep.subr.mxu0 %v510
    %1312 = vmatpush2.msra.mxu0 %v509
    %1313 = vmatprep.subr.mxu0 %v506
    %1314 = vmatpush2.msra.mxu0 %v505
    %1315 = vmatprep.subr.mxu0 %v502
    %1316 = vmatpush2.msra.mxu0 %v501
    %1317 = vmatprep.subr.mxu0 %v498
    %1318 = vmatpush2.msra.mxu0 %v497
    %1319 = vmatprep.subr.mxu0 %v494
    %1320 = vmatpush2.msra.mxu0 %v493
    %1321 = vmatprep.subr.mxu0 %v490
    %1322 = vmatpush2.msra.mxu0 %v489
    %1323 = vmatprep.subr.mxu0 %v486
    %1324 = vmatpush2.msra.mxu0 %v485
    %1325 = vmatprep.mubr.f32.mxu0 %v148
    %1326 = vmatmul.mubr.f32.gmra.mxu0 %v147
    %v1327 = vpop.f32.mrf.mxu0
    %v1328 = vadd.f32 %v944, %v1327
    %v1329 = vpop.f32.mrf.mxu0
    %v1330 = vadd.f32 %v948, %v1329
    %1331 = vmatprep.mubr.f32.mxu0 %v156
    %1332 = vmatmul.mubr.f32.gmra.mxu0 %v155
    %v1333 = vpop.f32.mrf.mxu0
    %v1334 = vadd.f32 %v944, %v1333
    %v1335 = vpop.f32.mrf.mxu0
    %v1336 = vadd.f32 %v948, %v1335
    %1337 = vdwg.mxu0
    %1338 = vmatprep.subr.mxu0 %v610
    %1339 = vmatpush1.msra.mxu0 %v609
    %1340 = vmatprep.subr.mxu0 %v606
    %1341 = vmatpush1.msra.mxu0 %v605
    %1342 = vmatprep.subr.mxu0 %v602
    %1343 = vmatpush1.msra.mxu0 %v601
    %1344 = vmatprep.subr.mxu0 %v598
    %1345 = vmatpush1.msra.mxu0 %v597
    %1346 = vmatprep.subr.mxu0 %v594
    %1347 = vmatpush1.msra.mxu0 %v593
    %1348 = vmatprep.subr.mxu0 %v590
    %1349 = vmatpush1.msra.mxu0 %v589
    %1350 = vmatprep.subr.mxu0 %v586
    %1351 = vmatpush1.msra.mxu0 %v585
    %1352 = vmatprep.subr.mxu0 %v582
    %1353 = vmatpush1.msra.mxu0 %v581
    %1354 = vmatprep.subr.mxu0 %v578
    %1355 = vmatpush1.msra.mxu0 %v577
    %1356 = vmatprep.subr.mxu0 %v574
    %1357 = vmatpush1.msra.mxu0 %v573
    %1358 = vmatprep.subr.mxu0 %v570
    %1359 = vmatpush1.msra.mxu0 %v569
    %1360 = vmatprep.subr.mxu0 %v566
    %1361 = vmatpush1.msra.mxu0 %v565
    %1362 = vmatprep.subr.mxu0 %v562
    %1363 = vmatpush1.msra.mxu0 %v561
    %1364 = vmatprep.subr.mxu0 %v558
    %1365 = vmatpush1.msra.mxu0 %v557
    %1366 = vmatprep.subr.mxu0 %v554
    %1367 = vmatpush1.msra.mxu0 %v553
    %1368 = vmatprep.subr.mxu0 %v550
    %1369 = vmatpush1.msra.mxu0 %v549
    %1370 = vmatprep.subr.mxu0 %v674
    %1371 = vmatpush2.msra.mxu0 %v673
    %1372 = vmatprep.subr.mxu0 %v670
    %1373 = vmatpush2.msra.mxu0 %v669
    %1374 = vmatprep.subr.mxu0 %v666
    %1375 = vmatpush2.msra.mxu0 %v665
    %1376 = vmatprep.subr.mxu0 %v662
    %1377 = vmatpush2.msra.mxu0 %v661
    %1378 = vmatprep.subr.mxu0 %v658
    %1379 = vmatpush2.msra.mxu0 %v657
    %1380 = vmatprep.subr.mxu0 %v654
    %1381 = vmatpush2.msra.mxu0 %v653
    %1382 = vmatprep.subr.mxu0 %v650
    %1383 = vmatpush2.msra.mxu0 %v649
    %1384 = vmatprep.subr.mxu0 %v646
    %1385 = vmatpush2.msra.mxu0 %v645
    %1386 = vmatprep.subr.mxu0 %v642
    %1387 = vmatpush2.msra.mxu0 %v641
    %1388 = vmatprep.subr.mxu0 %v638
    %1389 = vmatpush2.msra.mxu0 %v637
    %1390 = vmatprep.subr.mxu0 %v634
    %1391 = vmatpush2.msra.mxu0 %v633
    %1392 = vmatprep.subr.mxu0 %v630
    %1393 = vmatpush2.msra.mxu0 %v629
    %1394 = vmatprep.subr.mxu0 %v626
    %1395 = vmatpush2.msra.mxu0 %v625
    %1396 = vmatprep.subr.mxu0 %v622
    %1397 = vmatpush2.msra.mxu0 %v621
    %1398 = vmatprep.subr.mxu0 %v618
    %1399 = vmatpush2.msra.mxu0 %v617
    %1400 = vmatprep.subr.mxu0 %v614
    %1401 = vmatpush2.msra.mxu0 %v613
    %1402 = vmatprep.mubr.f32.mxu0 %v150
    %1403 = vmatmul.mubr.f32.gmra.mxu0 %v149
    %v1404 = vpop.f32.mrf.mxu0
    %v1405 = vadd.f32 %v1328, %v1404
    %v1406 = vpop.f32.mrf.mxu0
    %v1407 = vadd.f32 %v1330, %v1406
    %1408 = vmatprep.mubr.f32.mxu0 %v158
    %1409 = vmatmul.mubr.f32.gmra.mxu0 %v157
    %v1410 = vpop.f32.mrf.mxu0
    %v1411 = vadd.f32 %v1334, %v1410
    %v1412 = vpop.f32.mrf.mxu0
    %v1413 = vadd.f32 %v1336, %v1412
    %1414 = vdwg.mxu0
    %1415 = vmatprep.subr.mxu0 %v738
    %1416 = vmatpush1.msra.mxu0 %v737
    %1417 = vmatprep.subr.mxu0 %v734
    %1418 = vmatpush1.msra.mxu0 %v733
    %1419 = vmatprep.subr.mxu0 %v730
    %1420 = vmatpush1.msra.mxu0 %v729
    %1421 = vmatprep.subr.mxu0 %v726
    %1422 = vmatpush1.msra.mxu0 %v725
    %1423 = vmatprep.subr.mxu0 %v722
    %1424 = vmatpush1.msra.mxu0 %v721
    %1425 = vmatprep.subr.mxu0 %v718
    %1426 = vmatpush1.msra.mxu0 %v717
    %1427 = vmatprep.subr.mxu0 %v714
    %1428 = vmatpush1.msra.mxu0 %v713
    %1429 = vmatprep.subr.mxu0 %v710
    %1430 = vmatpush1.msra.mxu0 %v709
    %1431 = vmatprep.subr.mxu0 %v706
    %1432 = vmatpush1.msra.mxu0 %v705
    %1433 = vmatprep.subr.mxu0 %v702
    %1434 = vmatpush1.msra.mxu0 %v701
    %1435 = vmatprep.subr.mxu0 %v698
    %1436 = vmatpush1.msra.mxu0 %v697
    %1437 = vmatprep.subr.mxu0 %v694
    %1438 = vmatpush1.msra.mxu0 %v693
    %1439 = vmatprep.subr.mxu0 %v690
    %1440 = vmatpush1.msra.mxu0 %v689
    %1441 = vmatprep.subr.mxu0 %v686
    %1442 = vmatpush1.msra.mxu0 %v685
    %1443 = vmatprep.subr.mxu0 %v682
    %1444 = vmatpush1.msra.mxu0 %v681
    %1445 = vmatprep.subr.mxu0 %v678
    %1446 = vmatpush1.msra.mxu0 %v677
    %1447 = vmatprep.subr.mxu0 %v802
    %1448 = vmatpush2.msra.mxu0 %v801
    %1449 = vmatprep.subr.mxu0 %v798
    %1450 = vmatpush2.msra.mxu0 %v797
    %1451 = vmatprep.subr.mxu0 %v794
    %1452 = vmatpush2.msra.mxu0 %v793
    %1453 = vmatprep.subr.mxu0 %v790
    %1454 = vmatpush2.msra.mxu0 %v789
    %1455 = vmatprep.subr.mxu0 %v786
    %1456 = vmatpush2.msra.mxu0 %v785
    %1457 = vmatprep.subr.mxu0 %v782
    %1458 = vmatpush2.msra.mxu0 %v781
    %1459 = vmatprep.subr.mxu0 %v778
    %1460 = vmatpush2.msra.mxu0 %v777
    %1461 = vmatprep.subr.mxu0 %v774
    %1462 = vmatpush2.msra.mxu0 %v773
    %1463 = vmatprep.subr.mxu0 %v770
    %1464 = vmatpush2.msra.mxu0 %v769
    %1465 = vmatprep.subr.mxu0 %v766
    %1466 = vmatpush2.msra.mxu0 %v765
    %1467 = vmatprep.subr.mxu0 %v762
    %1468 = vmatpush2.msra.mxu0 %v761
    %1469 = vmatprep.subr.mxu0 %v758
    %1470 = vmatpush2.msra.mxu0 %v757
    %1471 = vmatprep.subr.mxu0 %v754
    %1472 = vmatpush2.msra.mxu0 %v753
    %1473 = vmatprep.subr.mxu0 %v750
    %1474 = vmatpush2.msra.mxu0 %v749
    %1475 = vmatprep.subr.mxu0 %v746
    %1476 = vmatpush2.msra.mxu0 %v745
    %1477 = vmatprep.subr.mxu0 %v742
    %1478 = vmatpush2.msra.mxu0 %v741
    %1479 = vmatprep.mubr.f32.mxu0 %v152
    %1480 = vmatmul.mubr.f32.gmra.mxu0 %v151
    %v1481 = vpop.f32.mrf.mxu0
    %v1482 = vadd.f32 %v1405, %v1481
    %v1483 = vpop.f32.mrf.mxu0
    %v1484 = vadd.f32 %v1407, %v1483
    %1485 = vmatprep.mubr.f32.mxu0 %v160
    %1486 = vmatmul.mubr.f32.gmra.mxu0 %v159
    %v1487 = vpop.f32.mrf.mxu0
    %v1488 = vadd.f32 %v1411, %v1487
    %v1489 = vpop.f32.mrf.mxu0
    %v1490 = vadd.f32 %v1413, %v1489
    %1491 = vdwg.mxu0
    %1492 = vmatprep.subr.mxu0 %v866
    %1493 = vmatpush1.msra.mxu0 %v865
    %1494 = vmatprep.subr.mxu0 %v862
    %1495 = vmatpush1.msra.mxu0 %v861
    %1496 = vmatprep.subr.mxu0 %v858
    %1497 = vmatpush1.msra.mxu0 %v857
    %1498 = vmatprep.subr.mxu0 %v854
    %1499 = vmatpush1.msra.mxu0 %v853
    %1500 = vmatprep.subr.mxu0 %v850
    %1501 = vmatpush1.msra.mxu0 %v849
    %1502 = vmatprep.subr.mxu0 %v846
    %1503 = vmatpush1.msra.mxu0 %v845
    %1504 = vmatprep.subr.mxu0 %v842
    %1505 = vmatpush1.msra.mxu0 %v841
    %1506 = vmatprep.subr.mxu0 %v838
    %1507 = vmatpush1.msra.mxu0 %v837
    %1508 = vmatprep.subr.mxu0 %v834
    %1509 = vmatpush1.msra.mxu0 %v833
    %1510 = vmatprep.subr.mxu0 %v830
    %1511 = vmatpush1.msra.mxu0 %v829
    %1512 = vmatprep.subr.mxu0 %v826
    %1513 = vmatpush1.msra.mxu0 %v825
    %1514 = vmatprep.subr.mxu0 %v822
    %1515 = vmatpush1.msra.mxu0 %v821
    %1516 = vmatprep.subr.mxu0 %v818
    %1517 = vmatpush1.msra.mxu0 %v817
    %1518 = vmatprep.subr.mxu0 %v814
    %1519 = vmatpush1.msra.mxu0 %v813
    %1520 = vmatprep.subr.mxu0 %v810
    %1521 = vmatpush1.msra.mxu0 %v809
    %1522 = vmatprep.subr.mxu0 %v806
    %1523 = vmatpush1.msra.mxu0 %v805
    %1524 = vmatprep.subr.mxu0 %v930
    %1525 = vmatpush2.msra.mxu0 %v929
    %1526 = vmatprep.subr.mxu0 %v926
    %1527 = vmatpush2.msra.mxu0 %v925
    %1528 = vmatprep.subr.mxu0 %v922
    %1529 = vmatpush2.msra.mxu0 %v921
    %1530 = vmatprep.subr.mxu0 %v918
    %1531 = vmatpush2.msra.mxu0 %v917
    %1532 = vmatprep.subr.mxu0 %v914
    %1533 = vmatpush2.msra.mxu0 %v913
    %1534 = vmatprep.subr.mxu0 %v910
    %1535 = vmatpush2.msra.mxu0 %v909
    %1536 = vmatprep.subr.mxu0 %v906
    %1537 = vmatpush2.msra.mxu0 %v905
    %1538 = vmatprep.subr.mxu0 %v902
    %1539 = vmatpush2.msra.mxu0 %v901
    %1540 = vmatprep.subr.mxu0 %v898
    %1541 = vmatpush2.msra.mxu0 %v897
    %1542 = vmatprep.subr.mxu0 %v894
    %1543 = vmatpush2.msra.mxu0 %v893
    %1544 = vmatprep.subr.mxu0 %v890
    %1545 = vmatpush2.msra.mxu0 %v889
    %1546 = vmatprep.subr.mxu0 %v886
    %1547 = vmatpush2.msra.mxu0 %v885
    %1548 = vmatprep.subr.mxu0 %v882
    %1549 = vmatpush2.msra.mxu0 %v881
    %1550 = vmatprep.subr.mxu0 %v878
    %1551 = vmatpush2.msra.mxu0 %v877
    %1552 = vmatprep.subr.mxu0 %v874
    %1553 = vmatpush2.msra.mxu0 %v873
    %1554 = vmatprep.subr.mxu0 %v870
    %1555 = vmatpush2.msra.mxu0 %v869
    %1556 = vmatprep.mubr.f32.mxu0 %v154
    %1557 = vmatmul.mubr.f32.gmra.mxu0 %v153
    %v1558 = vpop.f32.mrf.mxu0
    %v1559 = vadd.f32 %v1482, %v1558
    %v1560 = vpop.f32.mrf.mxu0
    %v1561 = vadd.f32 %v1484, %v1560
    %1562 = vmatprep.mubr.f32.mxu0 %v162
    %1563 = vmatmul.mubr.f32.gmra.mxu0 %v161
    %v1564 = vpop.f32.mrf.mxu0
    %v1565 = vadd.f32 %v1488, %v1564
    %v1566 = vpop.f32.mrf.mxu0
    %v1567 = vadd.f32 %v1490, %v1566
    %1568 = vdwg.mxu0
    %v1569 = vmax.f32 %v1251, 0.0
    %v1570 = vmax.f32 %v1253, 0.0
    %v1571 = vmax.f32 %v1559, 0.0
    %v1572 = vmax.f32 %v1561, 0.0
    %v1573 = vmax.f32 %v1257, 0.0
    %v1574 = vmax.f32 %v1259, 0.0
    %v1575 = vmax.f32 %v1565, 0.0
    %v1576 = vmax.f32 %v1567, 0.0
    %v1577 = vld [vmem:[#allocation10] sm:$0xff]
    %v1578 = vld [vmem:[#allocation10 + $0x8] sm:$0xff]
    %v1579 = vld [vmem:[#allocation10 + $0x10] sm:$0xff]
    %v1580 = vld [vmem:[#allocation10 + $0x18] sm:$0xff]
    %v1581 = vld [vmem:[#allocation10 + $0x20] sm:$0xff]
    %v1582 = vld [vmem:[#allocation10 + $0x28] sm:$0xff]
    %v1583 = vld [vmem:[#allocation10 + $0x30] sm:$0xff]
    %v1584 = vld [vmem:[#allocation10 + $0x38] sm:$0xff]
    %v1585 = vld [vmem:[#allocation10 + $0x40] sm:$0xff]
    %v1586 = vld [vmem:[#allocation10 + $0x48] sm:$0xff]
    %v1587 = vld [vmem:[#allocation10 + $0x50] sm:$0xff]
    %v1588 = vld [vmem:[#allocation10 + $0x58] sm:$0xff]
    %v1589 = vld [vmem:[#allocation10 + $0x60] sm:$0xff]
    %v1590 = vld [vmem:[#allocation10 + $0x68] sm:$0xff]
    %v1591 = vld [vmem:[#allocation10 + $0x70] sm:$0xff]
    %v1592 = vld [vmem:[#allocation10 + $0x78] sm:$0xff]
    %v1593 = vld [vmem:[#allocation10 + $0x80] sm:$0xff]
    %v1594 = vld [vmem:[#allocation10 + $0x88] sm:$0xff]
    %v1595 = vld [vmem:[#allocation10 + $0x90] sm:$0xff]
    %v1596 = vld [vmem:[#allocation10 + $0x98] sm:$0xff]
    %v1597 = vld [vmem:[#allocation10 + $0xa0] sm:$0xff]
    %v1598 = vld [vmem:[#allocation10 + $0xa8] sm:$0xff]
    %v1599 = vld [vmem:[#allocation10 + $0xb0] sm:$0xff]
    %v1600 = vld [vmem:[#allocation10 + $0xb8] sm:$0xff]
    %v1601 = vld [vmem:[#allocation10 + $0xc0] sm:$0xff]
    %v1602 = vld [vmem:[#allocation10 + $0xc8] sm:$0xff]
    %v1603 = vld [vmem:[#allocation10 + $0xd0] sm:$0xff]
    %v1604 = vld [vmem:[#allocation10 + $0xd8] sm:$0xff]
    %v1605 = vld [vmem:[#allocation10 + $0xe0] sm:$0xff]
    %v1606 = vld [vmem:[#allocation10 + $0xe8] sm:$0xff]
    %v1607 = vld [vmem:[#allocation10 + $0xf0] sm:$0xff]
    %v1608 = vld [vmem:[#allocation10 + $0xf8] sm:$0xff]
    %v1609 = vld [vmem:[#allocation10 + $0x100] sm:$0xff]
    %v1610 = vld [vmem:[#allocation10 + $0x108] sm:$0xff]
    %v1611 = vld [vmem:[#allocation10 + $0x110] sm:$0xff]
    %v1612 = vld [vmem:[#allocation10 + $0x118] sm:$0xff]
    %v1613 = vld [vmem:[#allocation10 + $0x120] sm:$0xff]
    %v1614 = vld [vmem:[#allocation10 + $0x128] sm:$0xff]
    %v1615 = vld [vmem:[#allocation10 + $0x130] sm:$0xff]
    %v1616 = vld [vmem:[#allocation10 + $0x138] sm:$0xff]
    %v1617 = vld [vmem:[#allocation10 + $0x140] sm:$0xff]
    %v1618 = vld [vmem:[#allocation10 + $0x148] sm:$0xff]
    %v1619 = vld [vmem:[#allocation10 + $0x150] sm:$0xff]
    %v1620 = vld [vmem:[#allocation10 + $0x158] sm:$0xff]
    %v1621 = vld [vmem:[#allocation10 + $0x160] sm:$0xff]
    %v1622 = vld [vmem:[#allocation10 + $0x168] sm:$0xff]
    %v1623 = vld [vmem:[#allocation10 + $0x170] sm:$0xff]
    %v1624 = vld [vmem:[#allocation10 + $0x178] sm:$0xff]
    %v1625 = vld [vmem:[#allocation10 + $0x180] sm:$0xff]
    %v1626 = vld [vmem:[#allocation10 + $0x188] sm:$0xff]
    %v1627 = vld [vmem:[#allocation10 + $0x190] sm:$0xff]
    %v1628 = vld [vmem:[#allocation10 + $0x198] sm:$0xff]
    %v1629 = vld [vmem:[#allocation10 + $0x1a0] sm:$0xff]
    %v1630 = vld [vmem:[#allocation10 + $0x1a8] sm:$0xff]
    %v1631 = vld [vmem:[#allocation10 + $0x1b0] sm:$0xff]
    %v1632 = vld [vmem:[#allocation10 + $0x1b8] sm:$0xff]
    %v1633 = vld [vmem:[#allocation10 + $0x1c0] sm:$0xff]
    %v1634 = vld [vmem:[#allocation10 + $0x1c8] sm:$0xff]
    %v1635 = vld [vmem:[#allocation10 + $0x1d0] sm:$0xff]
    %v1636 = vld [vmem:[#allocation10 + $0x1d8] sm:$0xff]
    %v1637 = vld [vmem:[#allocation10 + $0x1e0] sm:$0xff]
    %v1638 = vld [vmem:[#allocation10 + $0x1e8] sm:$0xff]
    %v1639 = vld [vmem:[#allocation10 + $0x1f0] sm:$0xff]
    %v1640 = vld [vmem:[#allocation10 + $0x1f8] sm:$0xff]
    %v1641 = vunpack.c.l.bf16 %v1577
    %v1642 = vunpack.c.h.bf16 %v1577
    %v1643 = vunpack.c.l.bf16 %v1578
    %v1644 = vunpack.c.h.bf16 %v1578
    %v1645 = vunpack.c.l.bf16 %v1579
    %v1646 = vunpack.c.h.bf16 %v1579
    %v1647 = vunpack.c.l.bf16 %v1580
    %v1648 = vunpack.c.h.bf16 %v1580
    %v1649 = vunpack.c.l.bf16 %v1581
    %v1650 = vunpack.c.h.bf16 %v1581
    %v1651 = vunpack.c.l.bf16 %v1582
    %v1652 = vunpack.c.h.bf16 %v1582
    %v1653 = vunpack.c.l.bf16 %v1583
    %v1654 = vunpack.c.h.bf16 %v1583
    %v1655 = vunpack.c.l.bf16 %v1584
    %v1656 = vunpack.c.h.bf16 %v1584
    %v1657 = vunpack.c.l.bf16 %v1585
    %v1658 = vunpack.c.h.bf16 %v1585
    %v1659 = vunpack.c.l.bf16 %v1586
    %v1660 = vunpack.c.h.bf16 %v1586
    %v1661 = vunpack.c.l.bf16 %v1587
    %v1662 = vunpack.c.h.bf16 %v1587
    %v1663 = vunpack.c.l.bf16 %v1588
    %v1664 = vunpack.c.h.bf16 %v1588
    %v1665 = vunpack.c.l.bf16 %v1589
    %v1666 = vunpack.c.h.bf16 %v1589
    %v1667 = vunpack.c.l.bf16 %v1590
    %v1668 = vunpack.c.h.bf16 %v1590
    %v1669 = vunpack.c.l.bf16 %v1591
    %v1670 = vunpack.c.h.bf16 %v1591
    %v1671 = vunpack.c.l.bf16 %v1592
    %v1672 = vunpack.c.h.bf16 %v1592
    %v1673 = vunpack.c.l.bf16 %v1593
    %v1674 = vunpack.c.h.bf16 %v1593
    %v1675 = vunpack.c.l.bf16 %v1594
    %v1676 = vunpack.c.h.bf16 %v1594
    %v1677 = vunpack.c.l.bf16 %v1595
    %v1678 = vunpack.c.h.bf16 %v1595
    %v1679 = vunpack.c.l.bf16 %v1596
    %v1680 = vunpack.c.h.bf16 %v1596
    %v1681 = vunpack.c.l.bf16 %v1597
    %v1682 = vunpack.c.h.bf16 %v1597
    %v1683 = vunpack.c.l.bf16 %v1598
    %v1684 = vunpack.c.h.bf16 %v1598
    %v1685 = vunpack.c.l.bf16 %v1599
    %v1686 = vunpack.c.h.bf16 %v1599
    %v1687 = vunpack.c.l.bf16 %v1600
    %v1688 = vunpack.c.h.bf16 %v1600
    %v1689 = vunpack.c.l.bf16 %v1601
    %v1690 = vunpack.c.h.bf16 %v1601
    %v1691 = vunpack.c.l.bf16 %v1602
    %v1692 = vunpack.c.h.bf16 %v1602
    %v1693 = vunpack.c.l.bf16 %v1603
    %v1694 = vunpack.c.h.bf16 %v1603
    %v1695 = vunpack.c.l.bf16 %v1604
    %v1696 = vunpack.c.h.bf16 %v1604
    %v1697 = vunpack.c.l.bf16 %v1605
    %v1698 = vunpack.c.h.bf16 %v1605
    %v1699 = vunpack.c.l.bf16 %v1606
    %v1700 = vunpack.c.h.bf16 %v1606
    %v1701 = vunpack.c.l.bf16 %v1607
    %v1702 = vunpack.c.h.bf16 %v1607
    %v1703 = vunpack.c.l.bf16 %v1608
    %v1704 = vunpack.c.h.bf16 %v1608
    %v1705 = vunpack.c.l.bf16 %v1609
    %v1706 = vunpack.c.h.bf16 %v1609
    %v1707 = vunpack.c.l.bf16 %v1610
    %v1708 = vunpack.c.h.bf16 %v1610
    %v1709 = vunpack.c.l.bf16 %v1611
    %v1710 = vunpack.c.h.bf16 %v1611
    %v1711 = vunpack.c.l.bf16 %v1612
    %v1712 = vunpack.c.h.bf16 %v1612
    %v1713 = vunpack.c.l.bf16 %v1613
    %v1714 = vunpack.c.h.bf16 %v1613
    %v1715 = vunpack.c.l.bf16 %v1614
    %v1716 = vunpack.c.h.bf16 %v1614
    %v1717 = vunpack.c.l.bf16 %v1615
    %v1718 = vunpack.c.h.bf16 %v1615
    %v1719 = vunpack.c.l.bf16 %v1616
    %v1720 = vunpack.c.h.bf16 %v1616
    %v1721 = vunpack.c.l.bf16 %v1617
    %v1722 = vunpack.c.h.bf16 %v1617
    %v1723 = vunpack.c.l.bf16 %v1618
    %v1724 = vunpack.c.h.bf16 %v1618
    %v1725 = vunpack.c.l.bf16 %v1619
    %v1726 = vunpack.c.h.bf16 %v1619
    %v1727 = vunpack.c.l.bf16 %v1620
    %v1728 = vunpack.c.h.bf16 %v1620
    %v1729 = vunpack.c.l.bf16 %v1621
    %v1730 = vunpack.c.h.bf16 %v1621
    %v1731 = vunpack.c.l.bf16 %v1622
    %v1732 = vunpack.c.h.bf16 %v1622
    %v1733 = vunpack.c.l.bf16 %v1623
    %v1734 = vunpack.c.h.bf16 %v1623
    %v1735 = vunpack.c.l.bf16 %v1624
    %v1736 = vunpack.c.h.bf16 %v1624
    %v1737 = vunpack.c.l.bf16 %v1625
    %v1738 = vunpack.c.h.bf16 %v1625
    %v1739 = vunpack.c.l.bf16 %v1626
    %v1740 = vunpack.c.h.bf16 %v1626
    %v1741 = vunpack.c.l.bf16 %v1627
    %v1742 = vunpack.c.h.bf16 %v1627
    %v1743 = vunpack.c.l.bf16 %v1628
    %v1744 = vunpack.c.h.bf16 %v1628
    %v1745 = vunpack.c.l.bf16 %v1629
    %v1746 = vunpack.c.h.bf16 %v1629
    %v1747 = vunpack.c.l.bf16 %v1630
    %v1748 = vunpack.c.h.bf16 %v1630
    %v1749 = vunpack.c.l.bf16 %v1631
    %v1750 = vunpack.c.h.bf16 %v1631
    %v1751 = vunpack.c.l.bf16 %v1632
    %v1752 = vunpack.c.h.bf16 %v1632
    %v1753 = vunpack.c.l.bf16 %v1633
    %v1754 = vunpack.c.h.bf16 %v1633
    %v1755 = vunpack.c.l.bf16 %v1634
    %v1756 = vunpack.c.h.bf16 %v1634
    %v1757 = vunpack.c.l.bf16 %v1635
    %v1758 = vunpack.c.h.bf16 %v1635
    %v1759 = vunpack.c.l.bf16 %v1636
    %v1760 = vunpack.c.h.bf16 %v1636
    %v1761 = vunpack.c.l.bf16 %v1637
    %v1762 = vunpack.c.h.bf16 %v1637
    %v1763 = vunpack.c.l.bf16 %v1638
    %v1764 = vunpack.c.h.bf16 %v1638
    %v1765 = vunpack.c.l.bf16 %v1639
    %v1766 = vunpack.c.h.bf16 %v1639
    %v1767 = vunpack.c.l.bf16 %v1640
    %v1768 = vunpack.c.h.bf16 %v1640
    %v1769 = vld [vmem:[#allocation12] sm:$0x3]
    %v1771 = vlaneseq
    %v1772 = vshrl.u32 %v1771, 7
    %v1773 = vsub.s32 0, %v1772
    %v1774 = vrot.slane %v1769, %v1773
    %v1775 = vlaneseq
    %v1776 = vshrl.u32 %v1775, 7
    %v1777 = vsub.s32 1, %v1776
    %v1778 = vrot.slane %v1769, %v1777
    %1781 = vmatprep.subr.mxu0 %v1672
    %1782 = vmatpush1.msra.mxu0 %v1671
    %1783 = vmatprep.subr.mxu0 %v1670
    %1784 = vmatpush1.msra.mxu0 %v1669
    %1785 = vmatprep.subr.mxu0 %v1668
    %1786 = vmatpush1.msra.mxu0 %v1667
    %1787 = vmatprep.subr.mxu0 %v1666
    %1788 = vmatpush1.msra.mxu0 %v1665
    %1789 = vmatprep.subr.mxu0 %v1664
    %1790 = vmatpush1.msra.mxu0 %v1663
    %1791 = vmatprep.subr.mxu0 %v1662
    %1792 = vmatpush1.msra.mxu0 %v1661
    %1793 = vmatprep.subr.mxu0 %v1660
    %1794 = vmatpush1.msra.mxu0 %v1659
    %1795 = vmatprep.subr.mxu0 %v1658
    %1796 = vmatpush1.msra.mxu0 %v1657
    %1797 = vmatprep.subr.mxu0 %v1656
    %1798 = vmatpush1.msra.mxu0 %v1655
    %1799 = vmatprep.subr.mxu0 %v1654
    %1800 = vmatpush1.msra.mxu0 %v1653
    %1801 = vmatprep.subr.mxu0 %v1652
    %1802 = vmatpush1.msra.mxu0 %v1651
    %1803 = vmatprep.subr.mxu0 %v1650
    %1804 = vmatpush1.msra.mxu0 %v1649
    %1805 = vmatprep.subr.mxu0 %v1648
    %1806 = vmatpush1.msra.mxu0 %v1647
    %1807 = vmatprep.subr.mxu0 %v1646
    %1808 = vmatpush1.msra.mxu0 %v1645
    %1809 = vmatprep.subr.mxu0 %v1644
    %1810 = vmatpush1.msra.mxu0 %v1643
    %1811 = vmatprep.subr.mxu0 %v1642
    %1812 = vmatpush1.msra.mxu0 %v1641
    %1813 = vmatprep.subr.mxu0 %v1704
    %1814 = vmatpush2.msra.mxu0 %v1703
    %1815 = vmatprep.subr.mxu0 %v1702
    %1816 = vmatpush2.msra.mxu0 %v1701
    %1817 = vmatprep.subr.mxu0 %v1700
    %1818 = vmatpush2.msra.mxu0 %v1699
    %1819 = vmatprep.subr.mxu0 %v1698
    %1820 = vmatpush2.msra.mxu0 %v1697
    %1821 = vmatprep.subr.mxu0 %v1696
    %1822 = vmatpush2.msra.mxu0 %v1695
    %1823 = vmatprep.subr.mxu0 %v1694
    %1824 = vmatpush2.msra.mxu0 %v1693
    %1825 = vmatprep.subr.mxu0 %v1692
    %1826 = vmatpush2.msra.mxu0 %v1691
    %1827 = vmatprep.subr.mxu0 %v1690
    %1828 = vmatpush2.msra.mxu0 %v1689
    %1829 = vmatprep.subr.mxu0 %v1688
    %1830 = vmatpush2.msra.mxu0 %v1687
    %1831 = vmatprep.subr.mxu0 %v1686
    %1832 = vmatpush2.msra.mxu0 %v1685
    %1833 = vmatprep.subr.mxu0 %v1684
    %1834 = vmatpush2.msra.mxu0 %v1683
    %1835 = vmatprep.subr.mxu0 %v1682
    %1836 = vmatpush2.msra.mxu0 %v1681
    %1837 = vmatprep.subr.mxu0 %v1680
    %1838 = vmatpush2.msra.mxu0 %v1679
    %1839 = vmatprep.subr.mxu0 %v1678
    %1840 = vmatpush2.msra.mxu0 %v1677
    %1841 = vmatprep.subr.mxu0 %v1676
    %1842 = vmatpush2.msra.mxu0 %v1675
    %1843 = vmatprep.subr.mxu0 %v1674
    %1844 = vmatpush2.msra.mxu0 %v1673
    %1845 = vmatprep.mubr.f32.mxu0 %v1570
    %1846 = vmatmul.mubr.f32.gmra.mxu0 %v1569
    %v1847 = vpop.f32.mrf.mxu0
    %v1848 = vadd.f32 %v1774, %v1847
    %v1849 = vpop.f32.mrf.mxu0
    %v1850 = vadd.f32 %v1778, %v1849
    %1851 = vmatprep.mubr.f32.mxu0 %v1574
    %1852 = vmatmul.mubr.f32.gmra.mxu0 %v1573
    %v1853 = vpop.f32.mrf.mxu0
    %v1854 = vadd.f32 %v1774, %v1853
    %v1855 = vpop.f32.mrf.mxu0
    %v1856 = vadd.f32 %v1778, %v1855
    %1857 = vdwg.mxu0
    %1858 = vmatprep.subr.mxu0 %v1736
    %1859 = vmatpush1.msra.mxu0 %v1735
    %1860 = vmatprep.subr.mxu0 %v1734
    %1861 = vmatpush1.msra.mxu0 %v1733
    %1862 = vmatprep.subr.mxu0 %v1732
    %1863 = vmatpush1.msra.mxu0 %v1731
    %1864 = vmatprep.subr.mxu0 %v1730
    %1865 = vmatpush1.msra.mxu0 %v1729
    %1866 = vmatprep.subr.mxu0 %v1728
    %1867 = vmatpush1.msra.mxu0 %v1727
    %1868 = vmatprep.subr.mxu0 %v1726
    %1869 = vmatpush1.msra.mxu0 %v1725
    %1870 = vmatprep.subr.mxu0 %v1724
    %1871 = vmatpush1.msra.mxu0 %v1723
    %1872 = vmatprep.subr.mxu0 %v1722
    %1873 = vmatpush1.msra.mxu0 %v1721
    %1874 = vmatprep.subr.mxu0 %v1720
    %1875 = vmatpush1.msra.mxu0 %v1719
    %1876 = vmatprep.subr.mxu0 %v1718
    %1877 = vmatpush1.msra.mxu0 %v1717
    %1878 = vmatprep.subr.mxu0 %v1716
    %1879 = vmatpush1.msra.mxu0 %v1715
    %1880 = vmatprep.subr.mxu0 %v1714
    %1881 = vmatpush1.msra.mxu0 %v1713
    %1882 = vmatprep.subr.mxu0 %v1712
    %1883 = vmatpush1.msra.mxu0 %v1711
    %1884 = vmatprep.subr.mxu0 %v1710
    %1885 = vmatpush1.msra.mxu0 %v1709
    %1886 = vmatprep.subr.mxu0 %v1708
    %1887 = vmatpush1.msra.mxu0 %v1707
    %1888 = vmatprep.subr.mxu0 %v1706
    %1889 = vmatpush1.msra.mxu0 %v1705
    %1890 = vmatprep.subr.mxu0 %v1768
    %1891 = vmatpush2.msra.mxu0 %v1767
    %1892 = vmatprep.subr.mxu0 %v1766
    %1893 = vmatpush2.msra.mxu0 %v1765
    %1894 = vmatprep.subr.mxu0 %v1764
    %1895 = vmatpush2.msra.mxu0 %v1763
    %1896 = vmatprep.subr.mxu0 %v1762
    %1897 = vmatpush2.msra.mxu0 %v1761
    %1898 = vmatprep.subr.mxu0 %v1760
    %1899 = vmatpush2.msra.mxu0 %v1759
    %1900 = vmatprep.subr.mxu0 %v1758
    %1901 = vmatpush2.msra.mxu0 %v1757
    %1902 = vmatprep.subr.mxu0 %v1756
    %1903 = vmatpush2.msra.mxu0 %v1755
    %1904 = vmatprep.subr.mxu0 %v1754
    %1905 = vmatpush2.msra.mxu0 %v1753
    %1906 = vmatprep.subr.mxu0 %v1752
    %1907 = vmatpush2.msra.mxu0 %v1751
    %1908 = vmatprep.subr.mxu0 %v1750
    %1909 = vmatpush2.msra.mxu0 %v1749
    %1910 = vmatprep.subr.mxu0 %v1748
    %1911 = vmatpush2.msra.mxu0 %v1747
    %1912 = vmatprep.subr.mxu0 %v1746
    %1913 = vmatpush2.msra.mxu0 %v1745
    %1914 = vmatprep.subr.mxu0 %v1744
    %1915 = vmatpush2.msra.mxu0 %v1743
    %1916 = vmatprep.subr.mxu0 %v1742
    %1917 = vmatpush2.msra.mxu0 %v1741
    %1918 = vmatprep.subr.mxu0 %v1740
    %1919 = vmatpush2.msra.mxu0 %v1739
    %1920 = vmatprep.subr.mxu0 %v1738
    %1921 = vmatpush2.msra.mxu0 %v1737
    %1922 = vmatprep.mubr.f32.mxu0 %v1572
    %1923 = vmatmul.mubr.f32.gmra.mxu0 %v1571
    %v1924 = vpop.f32.mrf.mxu0
    %v1925 = vadd.f32 %v1848, %v1924
    %v1926 = vpop.f32.mrf.mxu0
    %v1927 = vadd.f32 %v1850, %v1926
    %1928 = vmatprep.mubr.f32.mxu0 %v1576
    %1929 = vmatmul.mubr.f32.gmra.mxu0 %v1575
    %v1930 = vpop.f32.mrf.mxu0
    %v1931 = vadd.f32 %v1854, %v1930
    %v1932 = vpop.f32.mrf.mxu0
    %v1933 = vadd.f32 %v1856, %v1932
    %1934 = vdwg.mxu0
    %v1935 = vmax.f32 %v1925, 0.0
    %v1936 = vmax.f32 %v1927, 0.0
    %v1937 = vmax.f32 %v1931, 0.0
    %v1938 = vmax.f32 %v1933, 0.0
    %v1939 = vld [vmem:[#allocation13] sm:$0xf]
    %v1940 = vld [vmem:[#allocation13 + $0x4] sm:$0xf]
    %v1941 = vld [vmem:[#allocation13 + $0x8] sm:$0xf]
    %v1942 = vld [vmem:[#allocation13 + $0xc] sm:$0xf]
    %v1943 = vld [vmem:[#allocation13 + $0x10] sm:$0xf]
    %v1944 = vld [vmem:[#allocation13 + $0x14] sm:$0xf]
    %v1945 = vld [vmem:[#allocation13 + $0x18] sm:$0xf]
    %v1946 = vld [vmem:[#allocation13 + $0x1c] sm:$0xf]
    %v1947 = vld [vmem:[#allocation13 + $0x20] sm:$0xf]
    %v1948 = vld [vmem:[#allocation13 + $0x24] sm:$0xf]
    %v1949 = vld [vmem:[#allocation13 + $0x28] sm:$0xf]
    %v1950 = vld [vmem:[#allocation13 + $0x2c] sm:$0xf]
    %v1951 = vld [vmem:[#allocation13 + $0x30] sm:$0xf]
    %v1952 = vld [vmem:[#allocation13 + $0x34] sm:$0xf]
    %v1953 = vld [vmem:[#allocation13 + $0x38] sm:$0xf]
    %v1954 = vld [vmem:[#allocation13 + $0x3c] sm:$0xf]
    %v1955 = vld [vmem:[#allocation13 + $0x40] sm:$0xf]
    %v1956 = vld [vmem:[#allocation13 + $0x44] sm:$0xf]
    %v1957 = vld [vmem:[#allocation13 + $0x48] sm:$0xf]
    %v1958 = vld [vmem:[#allocation13 + $0x4c] sm:$0xf]
    %v1959 = vld [vmem:[#allocation13 + $0x50] sm:$0xf]
    %v1960 = vld [vmem:[#allocation13 + $0x54] sm:$0xf]
    %v1961 = vld [vmem:[#allocation13 + $0x58] sm:$0xf]
    %v1962 = vld [vmem:[#allocation13 + $0x5c] sm:$0xf]
    %v1963 = vld [vmem:[#allocation13 + $0x60] sm:$0xf]
    %v1964 = vld [vmem:[#allocation13 + $0x64] sm:$0xf]
    %v1965 = vld [vmem:[#allocation13 + $0x68] sm:$0xf]
    %v1966 = vld [vmem:[#allocation13 + $0x6c] sm:$0xf]
    %v1967 = vld [vmem:[#allocation13 + $0x70] sm:$0xf]
    %v1968 = vld [vmem:[#allocation13 + $0x74] sm:$0xf]
    %v1969 = vld [vmem:[#allocation13 + $0x78] sm:$0xf]
    %v1970 = vld [vmem:[#allocation13 + $0x7c] sm:$0xf]
    %v1971 = vunpack.c.l.bf16 %v1939
    %v1972 = vunpack.c.l.bf16 %v1940
    %v1973 = vunpack.c.l.bf16 %v1941
    %v1974 = vunpack.c.l.bf16 %v1942
    %v1975 = vunpack.c.l.bf16 %v1943
    %v1976 = vunpack.c.l.bf16 %v1944
    %v1977 = vunpack.c.l.bf16 %v1945
    %v1978 = vunpack.c.l.bf16 %v1946
    %v1979 = vunpack.c.l.bf16 %v1947
    %v1980 = vunpack.c.l.bf16 %v1948
    %v1981 = vunpack.c.l.bf16 %v1949
    %v1982 = vunpack.c.l.bf16 %v1950
    %v1983 = vunpack.c.l.bf16 %v1951
    %v1984 = vunpack.c.l.bf16 %v1952
    %v1985 = vunpack.c.l.bf16 %v1953
    %v1986 = vunpack.c.l.bf16 %v1954
    %v1987 = vunpack.c.l.bf16 %v1955
    %v1988 = vunpack.c.l.bf16 %v1956
    %v1989 = vunpack.c.l.bf16 %v1957
    %v1990 = vunpack.c.l.bf16 %v1958
    %v1991 = vunpack.c.l.bf16 %v1959
    %v1992 = vunpack.c.l.bf16 %v1960
    %v1993 = vunpack.c.l.bf16 %v1961
    %v1994 = vunpack.c.l.bf16 %v1962
    %v1995 = vunpack.c.l.bf16 %v1963
    %v1996 = vunpack.c.l.bf16 %v1964
    %v1997 = vunpack.c.l.bf16 %v1965
    %v1998 = vunpack.c.l.bf16 %v1966
    %v1999 = vunpack.c.l.bf16 %v1967
    %v2000 = vunpack.c.l.bf16 %v1968
    %v2001 = vunpack.c.l.bf16 %v1969
    %v2002 = vunpack.c.l.bf16 %v1970
    %v2003 = vld [vmem:[#allocation15] sm:$0x1]
    %v2005 = vlaneseq
    %v2006 = vshrl.u32 %v2005, 7
    %v2007 = vsub.s32 0, %v2006
    %v2008 = vrot.slane %v2003, %v2007
    %2010 = vmatprep.subr.mxu0 0.0
    %2011 = vmatpush1.msra.mxu0 %v1986
    %2012 = vmatprep.subr.mxu0 0.0
    %2013 = vmatpush1.msra.mxu0 %v1985
    %2014 = vmatprep.subr.mxu0 0.0
    %2015 = vmatpush1.msra.mxu0 %v1984
    %2016 = vmatprep.subr.mxu0 0.0
    %2017 = vmatpush1.msra.mxu0 %v1983
    %2018 = vmatprep.subr.mxu0 0.0
    %2019 = vmatpush1.msra.mxu0 %v1982
    %2020 = vmatprep.subr.mxu0 0.0
    %2021 = vmatpush1.msra.mxu0 %v1981
    %2022 = vmatprep.subr.mxu0 0.0
    %2023 = vmatpush1.msra.mxu0 %v1980
    %2024 = vmatprep.subr.mxu0 0.0
    %2025 = vmatpush1.msra.mxu0 %v1979
    %2026 = vmatprep.subr.mxu0 0.0
    %2027 = vmatpush1.msra.mxu0 %v1978
    %2028 = vmatprep.subr.mxu0 0.0
    %2029 = vmatpush1.msra.mxu0 %v1977
    %2030 = vmatprep.subr.mxu0 0.0
    %2031 = vmatpush1.msra.mxu0 %v1976
    %2032 = vmatprep.subr.mxu0 0.0
    %2033 = vmatpush1.msra.mxu0 %v1975
    %2034 = vmatprep.subr.mxu0 0.0
    %2035 = vmatpush1.msra.mxu0 %v1974
    %2036 = vmatprep.subr.mxu0 0.0
    %2037 = vmatpush1.msra.mxu0 %v1973
    %2038 = vmatprep.subr.mxu0 0.0
    %2039 = vmatpush1.msra.mxu0 %v1972
    %2040 = vmatprep.subr.mxu0 0.0
    %2041 = vmatpush1.msra.mxu0 %v1971
    %2042 = vmatprep.subr.mxu0 0.0
    %2043 = vmatpush2.msra.mxu0 %v2002
    %2044 = vmatprep.subr.mxu0 0.0
    %2045 = vmatpush2.msra.mxu0 %v2001
    %2046 = vmatprep.subr.mxu0 0.0
    %2047 = vmatpush2.msra.mxu0 %v2000
    %2048 = vmatprep.subr.mxu0 0.0
    %2049 = vmatpush2.msra.mxu0 %v1999
    %2050 = vmatprep.subr.mxu0 0.0
    %2051 = vmatpush2.msra.mxu0 %v1998
    %2052 = vmatprep.subr.mxu0 0.0
    %2053 = vmatpush2.msra.mxu0 %v1997
    %2054 = vmatprep.subr.mxu0 0.0
    %2055 = vmatpush2.msra.mxu0 %v1996
    %2056 = vmatprep.subr.mxu0 0.0
    %2057 = vmatpush2.msra.mxu0 %v1995
    %2058 = vmatprep.subr.mxu0 0.0
    %2059 = vmatpush2.msra.mxu0 %v1994
    %2060 = vmatprep.subr.mxu0 0.0
    %2061 = vmatpush2.msra.mxu0 %v1993
    %2062 = vmatprep.subr.mxu0 0.0
    %2063 = vmatpush2.msra.mxu0 %v1992
    %2064 = vmatprep.subr.mxu0 0.0
    %2065 = vmatpush2.msra.mxu0 %v1991
    %2066 = vmatprep.subr.mxu0 0.0
    %2067 = vmatpush2.msra.mxu0 %v1990
    %2068 = vmatprep.subr.mxu0 0.0
    %2069 = vmatpush2.msra.mxu0 %v1989
    %2070 = vmatprep.subr.mxu0 0.0
    %2071 = vmatpush2.msra.mxu0 %v1988
    %2072 = vmatprep.subr.mxu0 0.0
    %2073 = vmatpush2.msra.mxu0 %v1987
    %2074 = vmatprep.mubr.f32.mxu0 %v1936
    %2075 = vmatmul.mubr.f32.gmra.mxu0 %v1935
    %v2076 = vpop.f32.mrf.mxu0
    %v2077 = vadd.f32 %v2008, %v2076
    %v2078 = vpop.f32.mrf.mxu0
    %2079 = vmatprep.mubr.f32.mxu0 %v1938
    %2080 = vmatmul.mubr.f32.gmra.mxu0 %v1937
    %v2081 = vpop.f32.mrf.mxu0
    %v2082 = vadd.f32 %v2008, %v2081
    %v2083 = vpop.f32.mrf.mxu0
    %2084 = vdwg.mxu0
    %2085 = vst [vmem:[#allocation16] sm:$0xff] %v2077
    %2086 = vst [vmem:[#allocation16 + $0x8] sm:$0xff] %v2082
    // Predicated region
    $region58: #{tpu_custom_call.1} parent=1 // pred_check
      _
    $region59: #{tpu_custom_call.1} parent=1 // pred_check_branch
      %2088 = sbr.rel (0) target = $region61
    $region60: #{tpu_custom_call.1} parent=1 // pred_region
      %s2090 = ssub.s32 256, 256
      %2091 = vsyncadd [#allocation6], %s2090
      %s2092 = sshll.u32 [#allocation16], 4
      %s2093 = int_to_ptr.vmem [resolvable:$true] %s2092
      %2098 = dma.vmem_to_hbm [thread:$0]  %s2093, 256, %s8, [#allocation6], 128, 128, 8
    $region61: #{tpu_custom_call.1} parent=1 // pred_fallthru
      _
    // Predicated region
    $region62: #{tpu_custom_call.1} parent=1 // pred_check
      _
    $region63: #{tpu_custom_call.1} parent=1 // pred_check_branch
      %2100 = sbr.rel (0) target = $region65
    $region64: #{tpu_custom_call.1} parent=1 // pred_region
      %2101 = dma.done [#allocation6], 256
    $region65: #{tpu_custom_call.1} parent=1 // pred_fallthru
      _
    %2102 = vsyncpa [#allocation5], 1
    %2103 = vsyncpa [#allocation8], 1
    %2104 = vsyncpa [#allocation11], 1
    %2105 = vsyncpa [#allocation14], 1
    %2106 = vsyncpa [#allocation6], 1

</llo_original>
